<compile_context>
chip_gen: v7x
topology: tpu7x:2x2x1
jax: 0.10.0
libtpu: 0.0.40
codegen_flags: <defaults>
</compile_context>

<pallas_src>
import jax
import jax.numpy as jnp
from jax.experimental import pallas as pl
from jax.experimental.pallas import tpu as pltpu

KSIZE = 3  # conv1 kernel size (stride 1, padding 1)


def _make_resconv_kernel(offsets, pad_flat, m, cout, eps, use_res_conv):
    """Builds the fused ResConv3d kernel for one sample (one grid step)."""
    inv_m = 1.0 / float(m)

    def instance_norm_relu(z, gamma, beta):
        # z: (Cout, M) f32; gamma/beta: (Cout, 1) f32.  Per-channel instance stats.
        mean = jnp.sum(z, axis=-1, keepdims=True) * inv_m
        zc = z - mean
        var = jnp.sum(zc * zc, axis=-1, keepdims=True) * inv_m   # biased, centered
        y = zc * (gamma * jax.lax.rsqrt(var + eps)) + beta
        return jnp.maximum(y, 0.0)

    def kernel(*refs):
        if use_res_conv:
            (x_ref, w1_ref, mk_ref, g1_ref, b1_ref,
             wr_ref, gr_ref, br_ref, o_ref) = refs
        else:
            x_ref, w1_ref, mk_ref, g1_ref, b1_ref, o_ref = refs

        xp = x_ref[...]      # (Cin, M + 2*pad_flat) f32, flat-padded sample
        mk = mk_ref[...]     # (27, M) f32 tap-validity masks (== zero padding)
        w1 = w1_ref[...]     # (27, Cout, Cin) bf16

        # 3x3x3 "same" conv: 27 statically shifted + masked taps, bf16 MXU
        # matmuls with f32 accumulation.  No patch tensor ever leaves VMEM.
        acc = jnp.zeros((cout, m), dtype=jnp.float32)
        for t, off in enumerate(offsets):
            s = pad_flat + off                                    # static offset
            tap = xp[:, s:s + m] * mk[t:t + 1, :]                 # (Cin, M) f32
            acc = acc + jnp.dot(w1[t], tap.astype(jnp.bfloat16),
                                preferred_element_type=jnp.float32)

        a1 = instance_norm_relu(acc, g1_ref[...], b1_ref[...])

        x_center = xp[:, pad_flat:pad_flat + m]                   # (Cin, M) f32
        if use_res_conv:
            r = jnp.dot(wr_ref[...], x_center.astype(jnp.bfloat16),
                        preferred_element_type=jnp.float32)
            r = instance_norm_relu(r, gr_ref[...], br_ref[...])
        else:
            r = x_center                                          # identity residual

        o_ref[...] = a1 + r

    return kernel


def res_conv3d_forward(x, w1, g1, b1, wr=None, gr=None, br=None, eps=1e-5):
    """ResConv3d forward.

    x:  (N, Cin, D, H, W) f32
    w1: (Cout, Cin, 3, 3, 3) conv1 weight (bias=False); g1/b1: (Cout,) affine IN params
    wr: (Cout, Cin, 1, 1, 1) res_conv weight or None (identity residual); gr/br: (Cout,)
    """
    N, cin, D, H, W = x.shape
    cout = w1.shape[0]
    M = D * H * W
    use_res = wr is not None
    if not use_res:
        assert cin == cout, "identity residual requires in_channels == out_channels"

    # TODO(synk): for volumes where one (C, D*H*W) slab exceeds VMEM, tile the
    # flattened spatial axis (with tap-sized halos) instead of one sample/step.

    # Flatten spatial dims onto the lane axis; pad the flat axis by the largest
    # tap offset so every tap is a static, in-bounds lane slice in the kernel.
    pad_flat = H * W + W + 1
    xf = jnp.pad(x.reshape(N, cin, M).astype(jnp.float32),
                 ((0, 0), (0, 0), (pad_flat, pad_flat)))
    Mp = M + 2 * pad_flat

    # Weights in tap-major (27, Cout, Cin) layout, bf16 for the MXU.
    w1m = jnp.transpose(w1, (2, 3, 4, 0, 1)).reshape(KSIZE ** 3, cout, cin)
    w1m = w1m.astype(jnp.bfloat16)

    # Flat-index offset and validity mask of every tap (implements padding=1).
    lin = jnp.arange(M, dtype=jnp.int32)
    d_i, h_i, w_i = lin // (H * W), (lin // W) % H, lin % W
    offsets, mask_rows = [], []
    for kd in range(KSIZE):
        for kh in range(KSIZE):
            for kw in range(KSIZE):
                dz, dy, dx = kd - 1, kh - 1, kw - 1
                offsets.append(dz * H * W + dy * W + dx)
                mask_rows.append((d_i + dz >= 0) & (d_i + dz < D) &
                                 (h_i + dy >= 0) & (h_i + dy < H) &
                                 (w_i + dx >= 0) & (w_i + dx < W))
    masks = jnp.stack(mask_rows, axis=0).astype(jnp.float32)        # (27, M)

    def bcast_spec(*shape):
        return pl.BlockSpec(shape, lambda n: (0,) * len(shape))

    in_specs = [pl.BlockSpec((None, cin, Mp), lambda n: (n, 0, 0)),
                bcast_spec(KSIZE ** 3, cout, cin),
                bcast_spec(KSIZE ** 3, M),
                bcast_spec(cout, 1),
                bcast_spec(cout, 1)]
    args = [xf, w1m, masks,
            jnp.asarray(g1, jnp.float32).reshape(cout, 1),
            jnp.asarray(b1, jnp.float32).reshape(cout, 1)]

    if use_res:
        in_specs += [bcast_spec(cout, cin), bcast_spec(cout, 1), bcast_spec(cout, 1)]
        args += [wr.reshape(cout, cin).astype(jnp.bfloat16),
                 jnp.asarray(gr, jnp.float32).reshape(cout, 1),
                 jnp.asarray(br, jnp.float32).reshape(cout, 1)]

    kernel = _make_resconv_kernel(tuple(offsets), pad_flat, M, cout,
                                  float(eps), use_res)

    out_flat = pl.pallas_call(
        kernel,
        out_shape=jax.ShapeDtypeStruct((N, cout, M), jnp.float32),
        grid=(N,),
        in_specs=in_specs,
        out_specs=pl.BlockSpec((None, cout, M), lambda n: (n, 0, 0)),
        compiler_params=pltpu.CompilerParams(
            dimension_semantics=("parallel",)),
    )(*args)

    # (N, Cout, D*H*W) -> NCDHW is a pure reshape: no transpose pass in HBM.
    return out_flat.reshape(N, cout, D, H, W)


def reference_forward(x, w1, g1, b1, wr=None, gr=None, br=None, eps=1e-5):
    """Pure-JAX f32 reference of ResConv3d.forward (InstanceNorm: biased var)."""
    def basic(inp, w, g, b, pad):
        y = jax.lax.conv_general_dilated(
            inp, w, window_strides=(1, 1, 1), padding=[(pad, pad)] * 3,
            dimension_numbers=("NCDHW", "OIDHW", "NCDHW"),
            precision=jax.lax.Precision.HIGHEST)
        m = y.mean(axis=(2, 3, 4), keepdims=True)
        v = y.var(axis=(2, 3, 4), keepdims=True)
        z = (y - m) / jnp.sqrt(v + eps) * g.reshape(1, -1, 1, 1, 1) \
            + b.reshape(1, -1, 1, 1, 1)
        return jnp.maximum(z, 0.0)

    residual = basic(x, wr, gr, br, 0) if wr is not None else x
    return basic(x, w1, g1, b1, 1) + residual


if __name__ == "__main__":
    key = jax.random.PRNGKey(0)
    keys = jax.random.split(key, 8)

    # ResConv3d(in_channels=4, out_channels=8): conv1 branch + 1x1x1 res_conv branch.
    N, Cin, Cout, D, H, W = 2, 4, 8, 8, 8, 8
    x = jax.random.normal(keys[0], (N, Cin, D, H, W), dtype=jnp.float32)

    w1 = jax.random.normal(keys[1], (Cout, Cin, 3, 3, 3), jnp.float32) \
        * jnp.sqrt(2.0 / (Cin * 27))
    g1 = 1.0 + 0.1 * jax.random.normal(keys[2], (Cout,), jnp.float32)
    b1 = 0.1 * jax.random.normal(keys[3], (Cout,), jnp.float32)
    wr = jax.random.normal(keys[4], (Cout, Cin, 1, 1, 1), jnp.float32) \
        * jnp.sqrt(2.0 / Cin)
    gr = 1.0 + 0.1 * jax.random.normal(keys[5], (Cout,), jnp.float32)
    br = 0.1 * jax.random.normal(keys[6], (Cout,), jnp.float32)

    out = jax.block_until_ready(res_conv3d_forward(x, w1, g1, b1, wr, gr, br))
    ref = reference_forward(x, w1, g1, b1, wr, gr, br)
    assert out.shape == (N, Cout, D, H, W)
    assert jnp.max(jnp.abs(out - ref)) < 5e-2, "ResConv3d (res_conv branch) mismatch"

    # ResConv3d(in_channels=4, out_channels=4): identity-residual path.
    w1b = jax.random.normal(keys[7], (Cin, Cin, 3, 3, 3), jnp.float32) \
        * jnp.sqrt(2.0 / (Cin * 27))
    out2 = jax.block_until_ready(res_conv3d_forward(x, w1b, g1[:Cin], b1[:Cin]))
    ref2 = reference_forward(x, w1b, g1[:Cin], b1[:Cin])
    assert out2.shape == (N, Cin, D, H, W)
    assert jnp.max(jnp.abs(out2 - ref2)) < 5e-2, "ResConv3d (identity residual) mismatch"

    print("KERNEL_OK")
</pallas_src>

<mosaic_0001>
module attributes {stable_mosaic.version = 11 : i64} {
  func.func @kernel(%arg0: i32, %arg1: memref<1x4x658xf32, #tpu.memory_space<vmem>>, %arg2: memref<27x8x4xbf16, #tpu.memory_space<vmem>>, %arg3: memref<27x512xf32, #tpu.memory_space<vmem>>, %arg4: memref<8x1xf32, #tpu.memory_space<vmem>>, %arg5: memref<8x1xf32, #tpu.memory_space<vmem>>, %arg6: memref<8x4xbf16, #tpu.memory_space<vmem>>, %arg7: memref<8x1xf32, #tpu.memory_space<vmem>>, %arg8: memref<8x1xf32, #tpu.memory_space<vmem>>, %arg9: memref<1x8x512xf32, #tpu.memory_space<vmem>>) attributes {dimension_semantics = [#tpu.dimension_semantics<parallel>], iteration_bounds = array<i64: 2>, scalar_prefetch = 0 : i64, scratch_operands = 0 : i64, tpu.core_type = #tpu.core_type<tc>, window_params = [{transform_indices = @transform_0, window_bounds = array<i64: 1, 4, 658>}, {pipeline_mode = #tpu.pipeline_mode<synchronous>, transform_indices = @transform_1, window_bounds = array<i64: 27, 8, 4>}, {pipeline_mode = #tpu.pipeline_mode<synchronous>, transform_indices = @transform_2, window_bounds = array<i64: 27, 512>}, {pipeline_mode = #tpu.pipeline_mode<synchronous>, transform_indices = @transform_3, window_bounds = array<i64: 8, 1>}, {pipeline_mode = #tpu.pipeline_mode<synchronous>, transform_indices = @transform_4, window_bounds = array<i64: 8, 1>}, {pipeline_mode = #tpu.pipeline_mode<synchronous>, transform_indices = @transform_5, window_bounds = array<i64: 8, 4>}, {pipeline_mode = #tpu.pipeline_mode<synchronous>, transform_indices = @transform_6, window_bounds = array<i64: 8, 1>}, {pipeline_mode = #tpu.pipeline_mode<synchronous>, transform_indices = @transform_7, window_bounds = array<i64: 8, 1>}, {transform_indices = @transform_8, window_bounds = array<i64: 1, 8, 512>}]} {
    %c0 = arith.constant 0 : index
    %c0_0 = arith.constant 0 : index
    %c0_1 = arith.constant 0 : index
    %0 = vector.load %arg1[%c0, %c0_0, %c0_1] : memref<1x4x658xf32, #tpu.memory_space<vmem>>, vector<1x4x658xf32>
    %1 = vector.shape_cast %0 : vector<1x4x658xf32> to vector<4x658xf32>
    %c0_2 = arith.constant 0 : index
    %c0_3 = arith.constant 0 : index
    %2 = vector.load %arg3[%c0_2, %c0_3] : memref<27x512xf32, #tpu.memory_space<vmem>>, vector<27x512xf32>
    %c0_4 = arith.constant 0 : index
    %c0_5 = arith.constant 0 : index
    %c0_6 = arith.constant 0 : index
    %3 = vector.load %arg2[%c0_4, %c0_5, %c0_6] : memref<27x8x4xbf16, #tpu.memory_space<vmem>>, vector<27x8x4xbf16>
    %cst = arith.constant 0.000000e+00 : f32
    %4 = vector.broadcast %cst : f32 to vector<8x512xf32>
    %5 = vector.extract_strided_slice %1 {offsets = [0, 0], sizes = [4, 512], strides = [1, 1]} : vector<4x658xf32> to vector<4x512xf32>
    %6 = vector.extract_strided_slice %2 {offsets = [0, 0], sizes = [1, 512], strides = [1, 1]} : vector<27x512xf32> to vector<1x512xf32>
    %7 = vector.broadcast %6 : vector<1x512xf32> to vector<4x512xf32>
    %8 = arith.mulf %5, %7 : vector<4x512xf32>
    %9 = vector.extract_strided_slice %3 {offsets = [0, 0, 0], sizes = [1, 8, 4], strides = [1, 1, 1]} : vector<27x8x4xbf16> to vector<1x8x4xbf16>
    %10 = vector.shape_cast %9 : vector<1x8x4xbf16> to vector<8x4xbf16>
    %11 = arith.truncf %8 : vector<4x512xf32> to vector<4x512xbf16>
    %cst_7 = arith.constant dense<0.000000e+00> : vector<8x512xf32>
    %12 = tpu.matmul %10, %11, %cst_7 {dimension_numbers = #tpu.dot_dimension_numbers<[1], [0], [0], [1], [0, 0, 1, 1], [], []>} : vector<8x4xbf16>, vector<4x512xbf16>, vector<8x512xf32> -> vector<8x512xf32>
    %13 = arith.addf %4, %12 : vector<8x512xf32>
    %14 = vector.extract_strided_slice %1 {offsets = [0, 1], sizes = [4, 512], strides = [1, 1]} : vector<4x658xf32> to vector<4x512xf32>
    %15 = vector.extract_strided_slice %2 {offsets = [1, 0], sizes = [1, 512], strides = [1, 1]} : vector<27x512xf32> to vector<1x512xf32>
    %16 = vector.broadcast %15 : vector<1x512xf32> to vector<4x512xf32>
    %17 = arith.mulf %14, %16 : vector<4x512xf32>
    %18 = vector.extract_strided_slice %3 {offsets = [1, 0, 0], sizes = [1, 8, 4], strides = [1, 1, 1]} : vector<27x8x4xbf16> to vector<1x8x4xbf16>
    %19 = vector.shape_cast %18 : vector<1x8x4xbf16> to vector<8x4xbf16>
    %20 = arith.truncf %17 : vector<4x512xf32> to vector<4x512xbf16>
    %cst_8 = arith.constant dense<0.000000e+00> : vector<8x512xf32>
    %21 = tpu.matmul %19, %20, %cst_8 {dimension_numbers = #tpu.dot_dimension_numbers<[1], [0], [0], [1], [0, 0, 1, 1], [], []>} : vector<8x4xbf16>, vector<4x512xbf16>, vector<8x512xf32> -> vector<8x512xf32>
    %22 = arith.addf %13, %21 : vector<8x512xf32>
    %23 = vector.extract_strided_slice %1 {offsets = [0, 2], sizes = [4, 512], strides = [1, 1]} : vector<4x658xf32> to vector<4x512xf32>
    %24 = vector.extract_strided_slice %2 {offsets = [2, 0], sizes = [1, 512], strides = [1, 1]} : vector<27x512xf32> to vector<1x512xf32>
    %25 = vector.broadcast %24 : vector<1x512xf32> to vector<4x512xf32>
    %26 = arith.mulf %23, %25 : vector<4x512xf32>
    %27 = vector.extract_strided_slice %3 {offsets = [2, 0, 0], sizes = [1, 8, 4], strides = [1, 1, 1]} : vector<27x8x4xbf16> to vector<1x8x4xbf16>
    %28 = vector.shape_cast %27 : vector<1x8x4xbf16> to vector<8x4xbf16>
    %29 = arith.truncf %26 : vector<4x512xf32> to vector<4x512xbf16>
    %cst_9 = arith.constant dense<0.000000e+00> : vector<8x512xf32>
    %30 = tpu.matmul %28, %29, %cst_9 {dimension_numbers = #tpu.dot_dimension_numbers<[1], [0], [0], [1], [0, 0, 1, 1], [], []>} : vector<8x4xbf16>, vector<4x512xbf16>, vector<8x512xf32> -> vector<8x512xf32>
    %31 = arith.addf %22, %30 : vector<8x512xf32>
    %32 = vector.extract_strided_slice %1 {offsets = [0, 8], sizes = [4, 512], strides = [1, 1]} : vector<4x658xf32> to vector<4x512xf32>
    %33 = vector.extract_strided_slice %2 {offsets = [3, 0], sizes = [1, 512], strides = [1, 1]} : vector<27x512xf32> to vector<1x512xf32>
    %34 = vector.broadcast %33 : vector<1x512xf32> to vector<4x512xf32>
    %35 = arith.mulf %32, %34 : vector<4x512xf32>
    %36 = vector.extract_strided_slice %3 {offsets = [3, 0, 0], sizes = [1, 8, 4], strides = [1, 1, 1]} : vector<27x8x4xbf16> to vector<1x8x4xbf16>
    %37 = vector.shape_cast %36 : vector<1x8x4xbf16> to vector<8x4xbf16>
    %38 = arith.truncf %35 : vector<4x512xf32> to vector<4x512xbf16>
    %cst_10 = arith.constant dense<0.000000e+00> : vector<8x512xf32>
    %39 = tpu.matmul %37, %38, %cst_10 {dimension_numbers = #tpu.dot_dimension_numbers<[1], [0], [0], [1], [0, 0, 1, 1], [], []>} : vector<8x4xbf16>, vector<4x512xbf16>, vector<8x512xf32> -> vector<8x512xf32>
    %40 = arith.addf %31, %39 : vector<8x512xf32>
    %41 = vector.extract_strided_slice %1 {offsets = [0, 9], sizes = [4, 512], strides = [1, 1]} : vector<4x658xf32> to vector<4x512xf32>
    %42 = vector.extract_strided_slice %2 {offsets = [4, 0], sizes = [1, 512], strides = [1, 1]} : vector<27x512xf32> to vector<1x512xf32>
    %43 = vector.broadcast %42 : vector<1x512xf32> to vector<4x512xf32>
    %44 = arith.mulf %41, %43 : vector<4x512xf32>
    %45 = vector.extract_strided_slice %3 {offsets = [4, 0, 0], sizes = [1, 8, 4], strides = [1, 1, 1]} : vector<27x8x4xbf16> to vector<1x8x4xbf16>
    %46 = vector.shape_cast %45 : vector<1x8x4xbf16> to vector<8x4xbf16>
    %47 = arith.truncf %44 : vector<4x512xf32> to vector<4x512xbf16>
    %cst_11 = arith.constant dense<0.000000e+00> : vector<8x512xf32>
    %48 = tpu.matmul %46, %47, %cst_11 {dimension_numbers = #tpu.dot_dimension_numbers<[1], [0], [0], [1], [0, 0, 1, 1], [], []>} : vector<8x4xbf16>, vector<4x512xbf16>, vector<8x512xf32> -> vector<8x512xf32>
    %49 = arith.addf %40, %48 : vector<8x512xf32>
    %50 = vector.extract_strided_slice %1 {offsets = [0, 10], sizes = [4, 512], strides = [1, 1]} : vector<4x658xf32> to vector<4x512xf32>
    %51 = vector.extract_strided_slice %2 {offsets = [5, 0], sizes = [1, 512], strides = [1, 1]} : vector<27x512xf32> to vector<1x512xf32>
    %52 = vector.broadcast %51 : vector<1x512xf32> to vector<4x512xf32>
    %53 = arith.mulf %50, %52 : vector<4x512xf32>
    %54 = vector.extract_strided_slice %3 {offsets = [5, 0, 0], sizes = [1, 8, 4], strides = [1, 1, 1]} : vector<27x8x4xbf16> to vector<1x8x4xbf16>
    %55 = vector.shape_cast %54 : vector<1x8x4xbf16> to vector<8x4xbf16>
    %56 = arith.truncf %53 : vector<4x512xf32> to vector<4x512xbf16>
    %cst_12 = arith.constant dense<0.000000e+00> : vector<8x512xf32>
    %57 = tpu.matmul %55, %56, %cst_12 {dimension_numbers = #tpu.dot_dimension_numbers<[1], [0], [0], [1], [0, 0, 1, 1], [], []>} : vector<8x4xbf16>, vector<4x512xbf16>, vector<8x512xf32> -> vector<8x512xf32>
    %58 = arith.addf %49, %57 : vector<8x512xf32>
    %59 = vector.extract_strided_slice %1 {offsets = [0, 16], sizes = [4, 512], strides = [1, 1]} : vector<4x658xf32> to vector<4x512xf32>
    %60 = vector.extract_strided_slice %2 {offsets = [6, 0], sizes = [1, 512], strides = [1, 1]} : vector<27x512xf32> to vector<1x512xf32>
    %61 = vector.broadcast %60 : vector<1x512xf32> to vector<4x512xf32>
    %62 = arith.mulf %59, %61 : vector<4x512xf32>
    %63 = vector.extract_strided_slice %3 {offsets = [6, 0, 0], sizes = [1, 8, 4], strides = [1, 1, 1]} : vector<27x8x4xbf16> to vector<1x8x4xbf16>
    %64 = vector.shape_cast %63 : vector<1x8x4xbf16> to vector<8x4xbf16>
    %65 = arith.truncf %62 : vector<4x512xf32> to vector<4x512xbf16>
    %cst_13 = arith.constant dense<0.000000e+00> : vector<8x512xf32>
    %66 = tpu.matmul %64, %65, %cst_13 {dimension_numbers = #tpu.dot_dimension_numbers<[1], [0], [0], [1], [0, 0, 1, 1], [], []>} : vector<8x4xbf16>, vector<4x512xbf16>, vector<8x512xf32> -> vector<8x512xf32>
    %67 = arith.addf %58, %66 : vector<8x512xf32>
    %68 = vector.extract_strided_slice %1 {offsets = [0, 17], sizes = [4, 512], strides = [1, 1]} : vector<4x658xf32> to vector<4x512xf32>
    %69 = vector.extract_strided_slice %2 {offsets = [7, 0], sizes = [1, 512], strides = [1, 1]} : vector<27x512xf32> to vector<1x512xf32>
    %70 = vector.broadcast %69 : vector<1x512xf32> to vector<4x512xf32>
    %71 = arith.mulf %68, %70 : vector<4x512xf32>
    %72 = vector.extract_strided_slice %3 {offsets = [7, 0, 0], sizes = [1, 8, 4], strides = [1, 1, 1]} : vector<27x8x4xbf16> to vector<1x8x4xbf16>
    %73 = vector.shape_cast %72 : vector<1x8x4xbf16> to vector<8x4xbf16>
    %74 = arith.truncf %71 : vector<4x512xf32> to vector<4x512xbf16>
    %cst_14 = arith.constant dense<0.000000e+00> : vector<8x512xf32>
    %75 = tpu.matmul %73, %74, %cst_14 {dimension_numbers = #tpu.dot_dimension_numbers<[1], [0], [0], [1], [0, 0, 1, 1], [], []>} : vector<8x4xbf16>, vector<4x512xbf16>, vector<8x512xf32> -> vector<8x512xf32>
    %76 = arith.addf %67, %75 : vector<8x512xf32>
    %77 = vector.extract_strided_slice %1 {offsets = [0, 18], sizes = [4, 512], strides = [1, 1]} : vector<4x658xf32> to vector<4x512xf32>
    %78 = vector.extract_strided_slice %2 {offsets = [8, 0], sizes = [1, 512], strides = [1, 1]} : vector<27x512xf32> to vector<1x512xf32>
    %79 = vector.broadcast %78 : vector<1x512xf32> to vector<4x512xf32>
    %80 = arith.mulf %77, %79 : vector<4x512xf32>
    %81 = vector.extract_strided_slice %3 {offsets = [8, 0, 0], sizes = [1, 8, 4], strides = [1, 1, 1]} : vector<27x8x4xbf16> to vector<1x8x4xbf16>
    %82 = vector.shape_cast %81 : vector<1x8x4xbf16> to vector<8x4xbf16>
    %83 = arith.truncf %80 : vector<4x512xf32> to vector<4x512xbf16>
    %cst_15 = arith.constant dense<0.000000e+00> : vector<8x512xf32>
    %84 = tpu.matmul %82, %83, %cst_15 {dimension_numbers = #tpu.dot_dimension_numbers<[1], [0], [0], [1], [0, 0, 1, 1], [], []>} : vector<8x4xbf16>, vector<4x512xbf16>, vector<8x512xf32> -> vector<8x512xf32>
    %85 = arith.addf %76, %84 : vector<8x512xf32>
    %86 = vector.extract_strided_slice %1 {offsets = [0, 64], sizes = [4, 512], strides = [1, 1]} : vector<4x658xf32> to vector<4x512xf32>
    %87 = vector.extract_strided_slice %2 {offsets = [9, 0], sizes = [1, 512], strides = [1, 1]} : vector<27x512xf32> to vector<1x512xf32>
    %88 = vector.broadcast %87 : vector<1x512xf32> to vector<4x512xf32>
    %89 = arith.mulf %86, %88 : vector<4x512xf32>
    %90 = vector.extract_strided_slice %3 {offsets = [9, 0, 0], sizes = [1, 8, 4], strides = [1, 1, 1]} : vector<27x8x4xbf16> to vector<1x8x4xbf16>
    %91 = vector.shape_cast %90 : vector<1x8x4xbf16> to vector<8x4xbf16>
    %92 = arith.truncf %89 : vector<4x512xf32> to vector<4x512xbf16>
    %cst_16 = arith.constant dense<0.000000e+00> : vector<8x512xf32>
    %93 = tpu.matmul %91, %92, %cst_16 {dimension_numbers = #tpu.dot_dimension_numbers<[1], [0], [0], [1], [0, 0, 1, 1], [], []>} : vector<8x4xbf16>, vector<4x512xbf16>, vector<8x512xf32> -> vector<8x512xf32>
    %94 = arith.addf %85, %93 : vector<8x512xf32>
    %95 = vector.extract_strided_slice %1 {offsets = [0, 65], sizes = [4, 512], strides = [1, 1]} : vector<4x658xf32> to vector<4x512xf32>
    %96 = vector.extract_strided_slice %2 {offsets = [10, 0], sizes = [1, 512], strides = [1, 1]} : vector<27x512xf32> to vector<1x512xf32>
    %97 = vector.broadcast %96 : vector<1x512xf32> to vector<4x512xf32>
    %98 = arith.mulf %95, %97 : vector<4x512xf32>
    %99 = vector.extract_strided_slice %3 {offsets = [10, 0, 0], sizes = [1, 8, 4], strides = [1, 1, 1]} : vector<27x8x4xbf16> to vector<1x8x4xbf16>
    %100 = vector.shape_cast %99 : vector<1x8x4xbf16> to vector<8x4xbf16>
    %101 = arith.truncf %98 : vector<4x512xf32> to vector<4x512xbf16>
    %cst_17 = arith.constant dense<0.000000e+00> : vector<8x512xf32>
    %102 = tpu.matmul %100, %101, %cst_17 {dimension_numbers = #tpu.dot_dimension_numbers<[1], [0], [0], [1], [0, 0, 1, 1], [], []>} : vector<8x4xbf16>, vector<4x512xbf16>, vector<8x512xf32> -> vector<8x512xf32>
    %103 = arith.addf %94, %102 : vector<8x512xf32>
    %104 = vector.extract_strided_slice %1 {offsets = [0, 66], sizes = [4, 512], strides = [1, 1]} : vector<4x658xf32> to vector<4x512xf32>
    %105 = vector.extract_strided_slice %2 {offsets = [11, 0], sizes = [1, 512], strides = [1, 1]} : vector<27x512xf32> to vector<1x512xf32>
    %106 = vector.broadcast %105 : vector<1x512xf32> to vector<4x512xf32>
    %107 = arith.mulf %104, %106 : vector<4x512xf32>
    %108 = vector.extract_strided_slice %3 {offsets = [11, 0, 0], sizes = [1, 8, 4], strides = [1, 1, 1]} : vector<27x8x4xbf16> to vector<1x8x4xbf16>
    %109 = vector.shape_cast %108 : vector<1x8x4xbf16> to vector<8x4xbf16>
    %110 = arith.truncf %107 : vector<4x512xf32> to vector<4x512xbf16>
    %cst_18 = arith.constant dense<0.000000e+00> : vector<8x512xf32>
    %111 = tpu.matmul %109, %110, %cst_18 {dimension_numbers = #tpu.dot_dimension_numbers<[1], [0], [0], [1], [0, 0, 1, 1], [], []>} : vector<8x4xbf16>, vector<4x512xbf16>, vector<8x512xf32> -> vector<8x512xf32>
    %112 = arith.addf %103, %111 : vector<8x512xf32>
    %113 = vector.extract_strided_slice %1 {offsets = [0, 72], sizes = [4, 512], strides = [1, 1]} : vector<4x658xf32> to vector<4x512xf32>
    %114 = vector.extract_strided_slice %2 {offsets = [12, 0], sizes = [1, 512], strides = [1, 1]} : vector<27x512xf32> to vector<1x512xf32>
    %115 = vector.broadcast %114 : vector<1x512xf32> to vector<4x512xf32>
    %116 = arith.mulf %113, %115 : vector<4x512xf32>
    %117 = vector.extract_strided_slice %3 {offsets = [12, 0, 0], sizes = [1, 8, 4], strides = [1, 1, 1]} : vector<27x8x4xbf16> to vector<1x8x4xbf16>
    %118 = vector.shape_cast %117 : vector<1x8x4xbf16> to vector<8x4xbf16>
    %119 = arith.truncf %116 : vector<4x512xf32> to vector<4x512xbf16>
    %cst_19 = arith.constant dense<0.000000e+00> : vector<8x512xf32>
    %120 = tpu.matmul %118, %119, %cst_19 {dimension_numbers = #tpu.dot_dimension_numbers<[1], [0], [0], [1], [0, 0, 1, 1], [], []>} : vector<8x4xbf16>, vector<4x512xbf16>, vector<8x512xf32> -> vector<8x512xf32>
    %121 = arith.addf %112, %120 : vector<8x512xf32>
    %122 = vector.extract_strided_slice %1 {offsets = [0, 73], sizes = [4, 512], strides = [1, 1]} : vector<4x658xf32> to vector<4x512xf32>
    %123 = vector.extract_strided_slice %2 {offsets = [13, 0], sizes = [1, 512], strides = [1, 1]} : vector<27x512xf32> to vector<1x512xf32>
    %124 = vector.broadcast %123 : vector<1x512xf32> to vector<4x512xf32>
    %125 = arith.mulf %122, %124 : vector<4x512xf32>
    %126 = vector.extract_strided_slice %3 {offsets = [13, 0, 0], sizes = [1, 8, 4], strides = [1, 1, 1]} : vector<27x8x4xbf16> to vector<1x8x4xbf16>
    %127 = vector.shape_cast %126 : vector<1x8x4xbf16> to vector<8x4xbf16>
    %128 = arith.truncf %125 : vector<4x512xf32> to vector<4x512xbf16>
    %cst_20 = arith.constant dense<0.000000e+00> : vector<8x512xf32>
    %129 = tpu.matmul %127, %128, %cst_20 {dimension_numbers = #tpu.dot_dimension_numbers<[1], [0], [0], [1], [0, 0, 1, 1], [], []>} : vector<8x4xbf16>, vector<4x512xbf16>, vector<8x512xf32> -> vector<8x512xf32>
    %130 = arith.addf %121, %129 : vector<8x512xf32>
    %131 = vector.extract_strided_slice %1 {offsets = [0, 74], sizes = [4, 512], strides = [1, 1]} : vector<4x658xf32> to vector<4x512xf32>
    %132 = vector.extract_strided_slice %2 {offsets = [14, 0], sizes = [1, 512], strides = [1, 1]} : vector<27x512xf32> to vector<1x512xf32>
    %133 = vector.broadcast %132 : vector<1x512xf32> to vector<4x512xf32>
    %134 = arith.mulf %131, %133 : vector<4x512xf32>
    %135 = vector.extract_strided_slice %3 {offsets = [14, 0, 0], sizes = [1, 8, 4], strides = [1, 1, 1]} : vector<27x8x4xbf16> to vector<1x8x4xbf16>
    %136 = vector.shape_cast %135 : vector<1x8x4xbf16> to vector<8x4xbf16>
    %137 = arith.truncf %134 : vector<4x512xf32> to vector<4x512xbf16>
    %cst_21 = arith.constant dense<0.000000e+00> : vector<8x512xf32>
    %138 = tpu.matmul %136, %137, %cst_21 {dimension_numbers = #tpu.dot_dimension_numbers<[1], [0], [0], [1], [0, 0, 1, 1], [], []>} : vector<8x4xbf16>, vector<4x512xbf16>, vector<8x512xf32> -> vector<8x512xf32>
    %139 = arith.addf %130, %138 : vector<8x512xf32>
    %140 = vector.extract_strided_slice %1 {offsets = [0, 80], sizes = [4, 512], strides = [1, 1]} : vector<4x658xf32> to vector<4x512xf32>
    %141 = vector.extract_strided_slice %2 {offsets = [15, 0], sizes = [1, 512], strides = [1, 1]} : vector<27x512xf32> to vector<1x512xf32>
    %142 = vector.broadcast %141 : vector<1x512xf32> to vector<4x512xf32>
    %143 = arith.mulf %140, %142 : vector<4x512xf32>
    %144 = vector.extract_strided_slice %3 {offsets = [15, 0, 0], sizes = [1, 8, 4], strides = [1, 1, 1]} : vector<27x8x4xbf16> to vector<1x8x4xbf16>
    %145 = vector.shape_cast %144 : vector<1x8x4xbf16> to vector<8x4xbf16>
    %146 = arith.truncf %143 : vector<4x512xf32> to vector<4x512xbf16>
    %cst_22 = arith.constant dense<0.000000e+00> : vector<8x512xf32>
    %147 = tpu.matmul %145, %146, %cst_22 {dimension_numbers = #tpu.dot_dimension_numbers<[1], [0], [0], [1], [0, 0, 1, 1], [], []>} : vector<8x4xbf16>, vector<4x512xbf16>, vector<8x512xf32> -> vector<8x512xf32>
    %148 = arith.addf %139, %147 : vector<8x512xf32>
    %149 = vector.extract_strided_slice %1 {offsets = [0, 81], sizes = [4, 512], strides = [1, 1]} : vector<4x658xf32> to vector<4x512xf32>
    %150 = vector.extract_strided_slice %2 {offsets = [16, 0], sizes = [1, 512], strides = [1, 1]} : vector<27x512xf32> to vector<1x512xf32>
    %151 = vector.broadcast %150 : vector<1x512xf32> to vector<4x512xf32>
    %152 = arith.mulf %149, %151 : vector<4x512xf32>
    %153 = vector.extract_strided_slice %3 {offsets = [16, 0, 0], sizes = [1, 8, 4], strides = [1, 1, 1]} : vector<27x8x4xbf16> to vector<1x8x4xbf16>
    %154 = vector.shape_cast %153 : vector<1x8x4xbf16> to vector<8x4xbf16>
    %155 = arith.truncf %152 : vector<4x512xf32> to vector<4x512xbf16>
    %cst_23 = arith.constant dense<0.000000e+00> : vector<8x512xf32>
    %156 = tpu.matmul %154, %155, %cst_23 {dimension_numbers = #tpu.dot_dimension_numbers<[1], [0], [0], [1], [0, 0, 1, 1], [], []>} : vector<8x4xbf16>, vector<4x512xbf16>, vector<8x512xf32> -> vector<8x512xf32>
    %157 = arith.addf %148, %156 : vector<8x512xf32>
    %158 = vector.extract_strided_slice %1 {offsets = [0, 82], sizes = [4, 512], strides = [1, 1]} : vector<4x658xf32> to vector<4x512xf32>
    %159 = vector.extract_strided_slice %2 {offsets = [17, 0], sizes = [1, 512], strides = [1, 1]} : vector<27x512xf32> to vector<1x512xf32>
    %160 = vector.broadcast %159 : vector<1x512xf32> to vector<4x512xf32>
    %161 = arith.mulf %158, %160 : vector<4x512xf32>
    %162 = vector.extract_strided_slice %3 {offsets = [17, 0, 0], sizes = [1, 8, 4], strides = [1, 1, 1]} : vector<27x8x4xbf16> to vector<1x8x4xbf16>
    %163 = vector.shape_cast %162 : vector<1x8x4xbf16> to vector<8x4xbf16>
    %164 = arith.truncf %161 : vector<4x512xf32> to vector<4x512xbf16>
    %cst_24 = arith.constant dense<0.000000e+00> : vector<8x512xf32>
    %165 = tpu.matmul %163, %164, %cst_24 {dimension_numbers = #tpu.dot_dimension_numbers<[1], [0], [0], [1], [0, 0, 1, 1], [], []>} : vector<8x4xbf16>, vector<4x512xbf16>, vector<8x512xf32> -> vector<8x512xf32>
    %166 = arith.addf %157, %165 : vector<8x512xf32>
    %167 = vector.extract_strided_slice %1 {offsets = [0, 128], sizes = [4, 512], strides = [1, 1]} : vector<4x658xf32> to vector<4x512xf32>
    %168 = vector.extract_strided_slice %2 {offsets = [18, 0], sizes = [1, 512], strides = [1, 1]} : vector<27x512xf32> to vector<1x512xf32>
    %169 = vector.broadcast %168 : vector<1x512xf32> to vector<4x512xf32>
    %170 = arith.mulf %167, %169 : vector<4x512xf32>
    %171 = vector.extract_strided_slice %3 {offsets = [18, 0, 0], sizes = [1, 8, 4], strides = [1, 1, 1]} : vector<27x8x4xbf16> to vector<1x8x4xbf16>
    %172 = vector.shape_cast %171 : vector<1x8x4xbf16> to vector<8x4xbf16>
    %173 = arith.truncf %170 : vector<4x512xf32> to vector<4x512xbf16>
    %cst_25 = arith.constant dense<0.000000e+00> : vector<8x512xf32>
    %174 = tpu.matmul %172, %173, %cst_25 {dimension_numbers = #tpu.dot_dimension_numbers<[1], [0], [0], [1], [0, 0, 1, 1], [], []>} : vector<8x4xbf16>, vector<4x512xbf16>, vector<8x512xf32> -> vector<8x512xf32>
    %175 = arith.addf %166, %174 : vector<8x512xf32>
    %176 = vector.extract_strided_slice %1 {offsets = [0, 129], sizes = [4, 512], strides = [1, 1]} : vector<4x658xf32> to vector<4x512xf32>
    %177 = vector.extract_strided_slice %2 {offsets = [19, 0], sizes = [1, 512], strides = [1, 1]} : vector<27x512xf32> to vector<1x512xf32>
    %178 = vector.broadcast %177 : vector<1x512xf32> to vector<4x512xf32>
    %179 = arith.mulf %176, %178 : vector<4x512xf32>
    %180 = vector.extract_strided_slice %3 {offsets = [19, 0, 0], sizes = [1, 8, 4], strides = [1, 1, 1]} : vector<27x8x4xbf16> to vector<1x8x4xbf16>
    %181 = vector.shape_cast %180 : vector<1x8x4xbf16> to vector<8x4xbf16>
    %182 = arith.truncf %179 : vector<4x512xf32> to vector<4x512xbf16>
    %cst_26 = arith.constant dense<0.000000e+00> : vector<8x512xf32>
    %183 = tpu.matmul %181, %182, %cst_26 {dimension_numbers = #tpu.dot_dimension_numbers<[1], [0], [0], [1], [0, 0, 1, 1], [], []>} : vector<8x4xbf16>, vector<4x512xbf16>, vector<8x512xf32> -> vector<8x512xf32>
    %184 = arith.addf %175, %183 : vector<8x512xf32>
    %185 = vector.extract_strided_slice %1 {offsets = [0, 130], sizes = [4, 512], strides = [1, 1]} : vector<4x658xf32> to vector<4x512xf32>
    %186 = vector.extract_strided_slice %2 {offsets = [20, 0], sizes = [1, 512], strides = [1, 1]} : vector<27x512xf32> to vector<1x512xf32>
    %187 = vector.broadcast %186 : vector<1x512xf32> to vector<4x512xf32>
    %188 = arith.mulf %185, %187 : vector<4x512xf32>
    %189 = vector.extract_strided_slice %3 {offsets = [20, 0, 0], sizes = [1, 8, 4], strides = [1, 1, 1]} : vector<27x8x4xbf16> to vector<1x8x4xbf16>
    %190 = vector.shape_cast %189 : vector<1x8x4xbf16> to vector<8x4xbf16>
    %191 = arith.truncf %188 : vector<4x512xf32> to vector<4x512xbf16>
    %cst_27 = arith.constant dense<0.000000e+00> : vector<8x512xf32>
    %192 = tpu.matmul %190, %191, %cst_27 {dimension_numbers = #tpu.dot_dimension_numbers<[1], [0], [0], [1], [0, 0, 1, 1], [], []>} : vector<8x4xbf16>, vector<4x512xbf16>, vector<8x512xf32> -> vector<8x512xf32>
    %193 = arith.addf %184, %192 : vector<8x512xf32>
    %194 = vector.extract_strided_slice %1 {offsets = [0, 136], sizes = [4, 512], strides = [1, 1]} : vector<4x658xf32> to vector<4x512xf32>
    %195 = vector.extract_strided_slice %2 {offsets = [21, 0], sizes = [1, 512], strides = [1, 1]} : vector<27x512xf32> to vector<1x512xf32>
    %196 = vector.broadcast %195 : vector<1x512xf32> to vector<4x512xf32>
    %197 = arith.mulf %194, %196 : vector<4x512xf32>
    %198 = vector.extract_strided_slice %3 {offsets = [21, 0, 0], sizes = [1, 8, 4], strides = [1, 1, 1]} : vector<27x8x4xbf16> to vector<1x8x4xbf16>
    %199 = vector.shape_cast %198 : vector<1x8x4xbf16> to vector<8x4xbf16>
    %200 = arith.truncf %197 : vector<4x512xf32> to vector<4x512xbf16>
    %cst_28 = arith.constant dense<0.000000e+00> : vector<8x512xf32>
    %201 = tpu.matmul %199, %200, %cst_28 {dimension_numbers = #tpu.dot_dimension_numbers<[1], [0], [0], [1], [0, 0, 1, 1], [], []>} : vector<8x4xbf16>, vector<4x512xbf16>, vector<8x512xf32> -> vector<8x512xf32>
    %202 = arith.addf %193, %201 : vector<8x512xf32>
    %203 = vector.extract_strided_slice %1 {offsets = [0, 137], sizes = [4, 512], strides = [1, 1]} : vector<4x658xf32> to vector<4x512xf32>
    %204 = vector.extract_strided_slice %2 {offsets = [22, 0], sizes = [1, 512], strides = [1, 1]} : vector<27x512xf32> to vector<1x512xf32>
    %205 = vector.broadcast %204 : vector<1x512xf32> to vector<4x512xf32>
    %206 = arith.mulf %203, %205 : vector<4x512xf32>
    %207 = vector.extract_strided_slice %3 {offsets = [22, 0, 0], sizes = [1, 8, 4], strides = [1, 1, 1]} : vector<27x8x4xbf16> to vector<1x8x4xbf16>
    %208 = vector.shape_cast %207 : vector<1x8x4xbf16> to vector<8x4xbf16>
    %209 = arith.truncf %206 : vector<4x512xf32> to vector<4x512xbf16>
    %cst_29 = arith.constant dense<0.000000e+00> : vector<8x512xf32>
    %210 = tpu.matmul %208, %209, %cst_29 {dimension_numbers = #tpu.dot_dimension_numbers<[1], [0], [0], [1], [0, 0, 1, 1], [], []>} : vector<8x4xbf16>, vector<4x512xbf16>, vector<8x512xf32> -> vector<8x512xf32>
    %211 = arith.addf %202, %210 : vector<8x512xf32>
    %212 = vector.extract_strided_slice %1 {offsets = [0, 138], sizes = [4, 512], strides = [1, 1]} : vector<4x658xf32> to vector<4x512xf32>
    %213 = vector.extract_strided_slice %2 {offsets = [23, 0], sizes = [1, 512], strides = [1, 1]} : vector<27x512xf32> to vector<1x512xf32>
    %214 = vector.broadcast %213 : vector<1x512xf32> to vector<4x512xf32>
    %215 = arith.mulf %212, %214 : vector<4x512xf32>
    %216 = vector.extract_strided_slice %3 {offsets = [23, 0, 0], sizes = [1, 8, 4], strides = [1, 1, 1]} : vector<27x8x4xbf16> to vector<1x8x4xbf16>
    %217 = vector.shape_cast %216 : vector<1x8x4xbf16> to vector<8x4xbf16>
    %218 = arith.truncf %215 : vector<4x512xf32> to vector<4x512xbf16>
    %cst_30 = arith.constant dense<0.000000e+00> : vector<8x512xf32>
    %219 = tpu.matmul %217, %218, %cst_30 {dimension_numbers = #tpu.dot_dimension_numbers<[1], [0], [0], [1], [0, 0, 1, 1], [], []>} : vector<8x4xbf16>, vector<4x512xbf16>, vector<8x512xf32> -> vector<8x512xf32>
    %220 = arith.addf %211, %219 : vector<8x512xf32>
    %221 = vector.extract_strided_slice %1 {offsets = [0, 144], sizes = [4, 512], strides = [1, 1]} : vector<4x658xf32> to vector<4x512xf32>
    %222 = vector.extract_strided_slice %2 {offsets = [24, 0], sizes = [1, 512], strides = [1, 1]} : vector<27x512xf32> to vector<1x512xf32>
    %223 = vector.broadcast %222 : vector<1x512xf32> to vector<4x512xf32>
    %224 = arith.mulf %221, %223 : vector<4x512xf32>
    %225 = vector.extract_strided_slice %3 {offsets = [24, 0, 0], sizes = [1, 8, 4], strides = [1, 1, 1]} : vector<27x8x4xbf16> to vector<1x8x4xbf16>
    %226 = vector.shape_cast %225 : vector<1x8x4xbf16> to vector<8x4xbf16>
    %227 = arith.truncf %224 : vector<4x512xf32> to vector<4x512xbf16>
    %cst_31 = arith.constant dense<0.000000e+00> : vector<8x512xf32>
    %228 = tpu.matmul %226, %227, %cst_31 {dimension_numbers = #tpu.dot_dimension_numbers<[1], [0], [0], [1], [0, 0, 1, 1], [], []>} : vector<8x4xbf16>, vector<4x512xbf16>, vector<8x512xf32> -> vector<8x512xf32>
    %229 = arith.addf %220, %228 : vector<8x512xf32>
    %230 = vector.extract_strided_slice %1 {offsets = [0, 145], sizes = [4, 512], strides = [1, 1]} : vector<4x658xf32> to vector<4x512xf32>
    %231 = vector.extract_strided_slice %2 {offsets = [25, 0], sizes = [1, 512], strides = [1, 1]} : vector<27x512xf32> to vector<1x512xf32>
    %232 = vector.broadcast %231 : vector<1x512xf32> to vector<4x512xf32>
    %233 = arith.mulf %230, %232 : vector<4x512xf32>
    %234 = vector.extract_strided_slice %3 {offsets = [25, 0, 0], sizes = [1, 8, 4], strides = [1, 1, 1]} : vector<27x8x4xbf16> to vector<1x8x4xbf16>
    %235 = vector.shape_cast %234 : vector<1x8x4xbf16> to vector<8x4xbf16>
    %236 = arith.truncf %233 : vector<4x512xf32> to vector<4x512xbf16>
    %cst_32 = arith.constant dense<0.000000e+00> : vector<8x512xf32>
    %237 = tpu.matmul %235, %236, %cst_32 {dimension_numbers = #tpu.dot_dimension_numbers<[1], [0], [0], [1], [0, 0, 1, 1], [], []>} : vector<8x4xbf16>, vector<4x512xbf16>, vector<8x512xf32> -> vector<8x512xf32>
    %238 = arith.addf %229, %237 : vector<8x512xf32>
    %239 = vector.extract_strided_slice %1 {offsets = [0, 146], sizes = [4, 512], strides = [1, 1]} : vector<4x658xf32> to vector<4x512xf32>
    %240 = vector.extract_strided_slice %2 {offsets = [26, 0], sizes = [1, 512], strides = [1, 1]} : vector<27x512xf32> to vector<1x512xf32>
    %241 = vector.broadcast %240 : vector<1x512xf32> to vector<4x512xf32>
    %242 = arith.mulf %239, %241 : vector<4x512xf32>
    %243 = vector.extract_strided_slice %3 {offsets = [26, 0, 0], sizes = [1, 8, 4], strides = [1, 1, 1]} : vector<27x8x4xbf16> to vector<1x8x4xbf16>
    %244 = vector.shape_cast %243 : vector<1x8x4xbf16> to vector<8x4xbf16>
    %245 = arith.truncf %242 : vector<4x512xf32> to vector<4x512xbf16>
    %cst_33 = arith.constant dense<0.000000e+00> : vector<8x512xf32>
    %246 = tpu.matmul %244, %245, %cst_33 {dimension_numbers = #tpu.dot_dimension_numbers<[1], [0], [0], [1], [0, 0, 1, 1], [], []>} : vector<8x4xbf16>, vector<4x512xbf16>, vector<8x512xf32> -> vector<8x512xf32>
    %247 = arith.addf %238, %246 : vector<8x512xf32>
    %c0_34 = arith.constant 0 : index
    %c0_35 = arith.constant 0 : index
    %248 = vector.load %arg4[%c0_34, %c0_35] : memref<8x1xf32, #tpu.memory_space<vmem>>, vector<8x1xf32>
    %c0_36 = arith.constant 0 : index
    %c0_37 = arith.constant 0 : index
    %249 = vector.load %arg5[%c0_36, %c0_37] : memref<8x1xf32, #tpu.memory_space<vmem>>, vector<8x1xf32>
    %cst_38 = arith.constant dense<0.000000e+00> : vector<8xf32>
    %250 = vector.multi_reduction <add>, %247, %cst_38 [1] : vector<8x512xf32> to vector<8xf32>
    %251 = vector.shape_cast %250 : vector<8xf32> to vector<8x1xf32>
    %cst_39 = arith.constant 0.001953125 : f32
    %252 = vector.broadcast %cst_39 : f32 to vector<8x1xf32>
    %253 = arith.mulf %251, %252 : vector<8x1xf32>
    %254 = vector.broadcast %253 : vector<8x1xf32> to vector<8x512xf32>
    %255 = arith.subf %247, %254 : vector<8x512xf32>
    %256 = arith.mulf %255, %255 : vector<8x512xf32>
    %cst_40 = arith.constant dense<0.000000e+00> : vector<8xf32>
    %257 = vector.multi_reduction <add>, %256, %cst_40 [1] : vector<8x512xf32> to vector<8xf32>
    %258 = vector.shape_cast %257 : vector<8xf32> to vector<8x1xf32>
    %cst_41 = arith.constant 0.001953125 : f32
    %259 = vector.broadcast %cst_41 : f32 to vector<8x1xf32>
    %260 = arith.mulf %258, %259 : vector<8x1xf32>
    %cst_42 = arith.constant 9.99999974E-6 : f32
    %261 = vector.broadcast %cst_42 : f32 to vector<8x1xf32>
    %262 = arith.addf %260, %261 : vector<8x1xf32>
    %263 = math.rsqrt %262 : vector<8x1xf32>
    %264 = arith.mulf %248, %263 : vector<8x1xf32>
    %265 = vector.broadcast %264 : vector<8x1xf32> to vector<8x512xf32>
    %266 = arith.mulf %255, %265 : vector<8x512xf32>
    %267 = vector.broadcast %249 : vector<8x1xf32> to vector<8x512xf32>
    %268 = arith.addf %266, %267 : vector<8x512xf32>
    %cst_43 = arith.constant 0.000000e+00 : f32
    %269 = vector.broadcast %cst_43 : f32 to vector<8x512xf32>
    %270 = arith.maximumf %268, %269 : vector<8x512xf32>
    %271 = vector.extract_strided_slice %1 {offsets = [0, 73], sizes = [4, 512], strides = [1, 1]} : vector<4x658xf32> to vector<4x512xf32>
    %c0_44 = arith.constant 0 : index
    %c0_45 = arith.constant 0 : index
    %272 = vector.load %arg6[%c0_44, %c0_45] : memref<8x4xbf16, #tpu.memory_space<vmem>>, vector<8x4xbf16>
    %273 = arith.truncf %271 : vector<4x512xf32> to vector<4x512xbf16>
    %cst_46 = arith.constant dense<0.000000e+00> : vector<8x512xf32>
    %274 = tpu.matmul %272, %273, %cst_46 {dimension_numbers = #tpu.dot_dimension_numbers<[1], [0], [0], [1], [0, 0, 1, 1], [], []>} : vector<8x4xbf16>, vector<4x512xbf16>, vector<8x512xf32> -> vector<8x512xf32>
    %c0_47 = arith.constant 0 : index
    %c0_48 = arith.constant 0 : index
    %275 = vector.load %arg7[%c0_47, %c0_48] : memref<8x1xf32, #tpu.memory_space<vmem>>, vector<8x1xf32>
    %c0_49 = arith.constant 0 : index
    %c0_50 = arith.constant 0 : index
    %276 = vector.load %arg8[%c0_49, %c0_50] : memref<8x1xf32, #tpu.memory_space<vmem>>, vector<8x1xf32>
    %cst_51 = arith.constant dense<0.000000e+00> : vector<8xf32>
    %277 = vector.multi_reduction <add>, %274, %cst_51 [1] : vector<8x512xf32> to vector<8xf32>
    %278 = vector.shape_cast %277 : vector<8xf32> to vector<8x1xf32>
    %cst_52 = arith.constant 0.001953125 : f32
    %279 = vector.broadcast %cst_52 : f32 to vector<8x1xf32>
    %280 = arith.mulf %278, %279 : vector<8x1xf32>
    %281 = vector.broadcast %280 : vector<8x1xf32> to vector<8x512xf32>
    %282 = arith.subf %274, %281 : vector<8x512xf32>
    %283 = arith.mulf %282, %282 : vector<8x512xf32>
    %cst_53 = arith.constant dense<0.000000e+00> : vector<8xf32>
    %284 = vector.multi_reduction <add>, %283, %cst_53 [1] : vector<8x512xf32> to vector<8xf32>
    %285 = vector.shape_cast %284 : vector<8xf32> to vector<8x1xf32>
    %cst_54 = arith.constant 0.001953125 : f32
    %286 = vector.broadcast %cst_54 : f32 to vector<8x1xf32>
    %287 = arith.mulf %285, %286 : vector<8x1xf32>
    %cst_55 = arith.constant 9.99999974E-6 : f32
    %288 = vector.broadcast %cst_55 : f32 to vector<8x1xf32>
    %289 = arith.addf %287, %288 : vector<8x1xf32>
    %290 = math.rsqrt %289 : vector<8x1xf32>
    %291 = arith.mulf %275, %290 : vector<8x1xf32>
    %292 = vector.broadcast %291 : vector<8x1xf32> to vector<8x512xf32>
    %293 = arith.mulf %282, %292 : vector<8x512xf32>
    %294 = vector.broadcast %276 : vector<8x1xf32> to vector<8x512xf32>
    %295 = arith.addf %293, %294 : vector<8x512xf32>
    %cst_56 = arith.constant 0.000000e+00 : f32
    %296 = vector.broadcast %cst_56 : f32 to vector<8x512xf32>
    %297 = arith.maximumf %295, %296 : vector<8x512xf32>
    %298 = arith.addf %270, %297 : vector<8x512xf32>
    %c0_57 = arith.constant 0 : index
    %c0_58 = arith.constant 0 : index
    %c0_59 = arith.constant 0 : index
    %299 = vector.load %arg9[%c0_57, %c0_58, %c0_59] : memref<1x8x512xf32, #tpu.memory_space<vmem>>, vector<1x8x512xf32>
    %300 = vector.shape_cast %299 : vector<1x8x512xf32> to vector<8x512xf32>
    %301 = vector.shape_cast %298 : vector<8x512xf32> to vector<1x8x512xf32>
    tpu.vector_store %arg9[%c0_57, %c0_58, %c0_59], %301 {strides = array<i32>} : memref<1x8x512xf32, #tpu.memory_space<vmem>>, vector<1x8x512xf32>,
    return
  }
  func.func @transform_0(%arg0: i32) -> (i32, i32, i32) {
    %c0_i32 = arith.constant 0 : i32
    %c0_i32_0 = arith.constant 0 : i32
    %c0_i32_1 = arith.constant 0 : i32
    return %arg0, %c0_i32, %c0_i32_0 : i32, i32, i32
  }
  func.func @transform_1(%arg0: i32) -> (i32, i32, i32) {
    %c0_i32 = arith.constant 0 : i32
    %c0_i32_0 = arith.constant 0 : i32
    %c0_i32_1 = arith.constant 0 : i32
    %c0_i32_2 = arith.constant 0 : i32
    return %c0_i32, %c0_i32_0, %c0_i32_1 : i32, i32, i32
  }
  func.func @transform_2(%arg0: i32) -> (i32, i32) {
    %c0_i32 = arith.constant 0 : i32
    %c0_i32_0 = arith.constant 0 : i32
    %c0_i32_1 = arith.constant 0 : i32
    return %c0_i32, %c0_i32_0 : i32, i32
  }
  func.func @transform_3(%arg0: i32) -> (i32, i32) {
    %c0_i32 = arith.constant 0 : i32
    %c0_i32_0 = arith.constant 0 : i32
    %c0_i32_1 = arith.constant 0 : i32
    return %c0_i32, %c0_i32_0 : i32, i32
  }
  func.func @transform_4(%arg0: i32) -> (i32, i32) {
    %c0_i32 = arith.constant 0 : i32
    %c0_i32_0 = arith.constant 0 : i32
    %c0_i32_1 = arith.constant 0 : i32
    return %c0_i32, %c0_i32_0 : i32, i32
  }
  func.func @transform_5(%arg0: i32) -> (i32, i32) {
    %c0_i32 = arith.constant 0 : i32
    %c0_i32_0 = arith.constant 0 : i32
    %c0_i32_1 = arith.constant 0 : i32
    return %c0_i32, %c0_i32_0 : i32, i32
  }
  func.func @transform_6(%arg0: i32) -> (i32, i32) {
    %c0_i32 = arith.constant 0 : i32
    %c0_i32_0 = arith.constant 0 : i32
    %c0_i32_1 = arith.constant 0 : i32
    return %c0_i32, %c0_i32_0 : i32, i32
  }
  func.func @transform_7(%arg0: i32) -> (i32, i32) {
    %c0_i32 = arith.constant 0 : i32
    %c0_i32_0 = arith.constant 0 : i32
    %c0_i32_1 = arith.constant 0 : i32
    return %c0_i32, %c0_i32_0 : i32, i32
  }
  func.func @transform_8(%arg0: i32) -> (i32, i32, i32) {
    %c0_i32 = arith.constant 0 : i32
    %c0_i32_0 = arith.constant 0 : i32
    %c0_i32_1 = arith.constant 0 : i32
    return %arg0, %c0_i32, %c0_i32_0 : i32, i32, i32
  }
}

</mosaic_0001>

<llo_original>
// kernel: tpu_custom_call.1
$region0: #{tpu_custom_call.1}
  #allocation0 [shape = 'u32[]', space=smem, size = 0x4, offset = 0x4, fixed_abs, tag = 'smem constant byte address 0x4 - core index']
  #allocation1 [shape = 'u32[144,128]{1,0:T(1,128)}', space=vmem, size = 0x12000, scoped, tag = 'internal scratch']
  %s0 = inlined_call_operand.hbm [shape: f32[2,4,658], index: 0, kind: input, shape index: {}]
  %s1 = inlined_call_operand.vmem [shape: bf16[27,8,4], index: 1, kind: input, shape index: {}]
  %s2 = inlined_call_operand.vmem [shape: f32[27,512], index: 2, kind: input, shape index: {}]
  %s3 = inlined_call_operand.vmem [shape: f32[8,1], index: 3, kind: input, shape index: {}]
  %s4 = inlined_call_operand.vmem [shape: f32[8,1], index: 4, kind: input, shape index: {}]
  %s5 = inlined_call_operand.vmem [shape: bf16[8,4], index: 5, kind: input, shape index: {}]
  %s6 = inlined_call_operand.vmem [shape: f32[8,1], index: 6, kind: input, shape index: {}]
  %s7 = inlined_call_operand.vmem [shape: f32[8,1], index: 7, kind: input, shape index: {}]
  %s8 = inlined_call_operand.hbm [shape: f32[2,8,512], index: 8, kind: output, shape index: {}]
  %s9 = sld [smem:[#allocation0]]
  $region69: #{tpu_custom_call.1} parent=0
    _
  %s11 = ssub.s32 1, %s9
  %s12 = scalar_select 0, %s11, %s9
  $region1: #{tpu_custom_call.1} parent=0
    #allocation2 [shape = 'u8[24576]{0}', space=vmem, size = 0x6000, scoped, tag = 'input window, operand 0']
    #allocation3 [shape = 's32[2]{0}', space=sflag, size = 0x8, scoped, tag = 'scoped memory for tpu_custom_call.1']
    #allocation4 [shape = 's32[2]{0}', space=sflag, size = 0x8, scoped, tag = 'scoped memory for tpu_custom_call.1']
    #allocation5 [shape = 'u8[32768]{0}', space=vmem, size = 0x8000, scoped, tag = 'output window, operand 0']
    %13 = vsyncpa [#allocation3], 0
    %s14 = scalar_lea.sflag [#allocation3], 1
    %15 = vsyncpa %s14, 0
    %16 = vsyncpa [#allocation4], 0
    %s17 = scalar_lea.sflag [#allocation4], 1
    %18 = vsyncpa %s17, 0
    loop: start=0, step=1, limit=4
    $region2: #{tpu_custom_call.1} parent=1 // loop_pre_header
      _
    $region3: #{tpu_custom_call.1} parent=1 // loop_header
      %s20 = sphi 0, %s24
      %p21 = scmp.ge.s32.totalorder %s20, 4
      %s30 = sphi 0, %s32
      %s33 = sphi 0, %s30
      %s34 = sphi 0, %s33
      %s50 = sphi 0, %s34
      %s54 = sphi 0, %s54
      %s56 = sphi 0, %s54
      %s57 = sphi 0, %s56
      %s71 = sphi 0, %s57
      %s75 = sphi 0, %s75
      %s77 = sphi 0, %s75
      %s78 = sphi 0, %s77
      %s92 = sphi 0, %s78
      %s96 = sphi 0, %s96
      %s98 = sphi 0, %s96
      %s99 = sphi 0, %s98
      %s113 = sphi 0, %s99
      %s117 = sphi 0, %s117
      %s119 = sphi 0, %s117
      %s120 = sphi 0, %s119
      %s134 = sphi 0, %s120
      %s138 = sphi 0, %s138
      %s140 = sphi 0, %s138
      %s141 = sphi 0, %s140
      %s155 = sphi 0, %s141
      %s159 = sphi 0, %s159
      %s161 = sphi 0, %s159
      %s162 = sphi 0, %s161
      %s176 = sphi 0, %s162
      %s180 = sphi 0, %s180
      %s182 = sphi 0, %s180
      %s183 = sphi 0, %s182
      %s197 = sphi 0, %s183
      %s203 = sphi 0, %s205
      %s206 = sphi 0, %s203
      %s207 = sphi 0, %s206
      %s223 = sphi 0, %s207
    $region4: #{tpu_custom_call.1} parent=1 // loop_header_branch
      %23 = sbr.rel (%p21) target = $region8
    $region5: #{tpu_custom_call.1} parent=1 // loop_body
      %s25 = ssub.s32 %s20, 1
      %s26 = ssub.s32 %s20, 2
      %s27 = sadd.s32 %s20, 1
      %s28 = ssub.s32 %s20, %s27
      %p29 = scmp.eq.s32.totalorder %s28, 0
      %s31 = sadd.s32 %s30, 1
      %s32 = scalar_select %p29, %s30, %s31
      %p35 = pneg %p29
      %p36 = scmp.eq.s32.totalorder %s20, 1
      %p37 = por %p35, %p36
      %p38 = scmp.ne.s32.totalorder %s30, %s33
      %p39 = scmp.eq.s32.totalorder %s20, 0
      %p40 = por %p38, %p39
      %p41 = scmp.ne.s32.totalorder %s30, %s33
      %p42 = scmp.eq.s32.totalorder %s25, 1
      %p43 = por %p41, %p42
      %p44 = scmp.ne.s32.totalorder %s33, %s34
      %p45 = scmp.eq.s32.totalorder %s25, 0
      %p46 = por %p44, %p45
      %p47 = scmp.ne.s32.totalorder %s33, %s34
      %p48 = scmp.eq.s32.totalorder %s26, 1
      %p49 = por %p47, %p48
      %p51 = scmp.ne.s32.totalorder %s34, %s50
      %p52 = scmp.eq.s32.totalorder %s26, 0
      %p53 = por %p51, %p52
      %s55 = sadd.s32 %s54, 1
      %p58 = scmp.eq.s32.totalorder %s20, 1
      %p59 = scmp.ne.s32.totalorder %s54, %s56
      %p60 = scmp.eq.s32.totalorder %s20, 0
      %p61 = por %p59, %p60
      %p62 = scmp.ne.s32.totalorder %s54, %s56
      %p63 = scmp.eq.s32.totalorder %s25, 1
      %p64 = por %p62, %p63
      %p65 = scmp.ne.s32.totalorder %s56, %s57
      %p66 = scmp.eq.s32.totalorder %s25, 0
      %p67 = por %p65, %p66
      %p68 = scmp.ne.s32.totalorder %s56, %s57
      %p69 = scmp.eq.s32.totalorder %s26, 1
      %p70 = por %p68, %p69
      %p72 = scmp.ne.s32.totalorder %s57, %s71
      %p73 = scmp.eq.s32.totalorder %s26, 0
      %p74 = por %p72, %p73
      %s76 = sadd.s32 %s75, 1
      %p79 = scmp.eq.s32.totalorder %s20, 1
      %p80 = scmp.ne.s32.totalorder %s75, %s77
      %p81 = scmp.eq.s32.totalorder %s20, 0
      %p82 = por %p80, %p81
      %p83 = scmp.ne.s32.totalorder %s75, %s77
      %p84 = scmp.eq.s32.totalorder %s25, 1
      %p85 = por %p83, %p84
      %p86 = scmp.ne.s32.totalorder %s77, %s78
      %p87 = scmp.eq.s32.totalorder %s25, 0
      %p88 = por %p86, %p87
      %p89 = scmp.ne.s32.totalorder %s77, %s78
      %p90 = scmp.eq.s32.totalorder %s26, 1
      %p91 = por %p89, %p90
      %p93 = scmp.ne.s32.totalorder %s78, %s92
      %p94 = scmp.eq.s32.totalorder %s26, 0
      %p95 = por %p93, %p94
      %s97 = sadd.s32 %s96, 1
      %p100 = scmp.eq.s32.totalorder %s20, 1
      %p101 = scmp.ne.s32.totalorder %s96, %s98
      %p102 = scmp.eq.s32.totalorder %s20, 0
      %p103 = por %p101, %p102
      %p104 = scmp.ne.s32.totalorder %s96, %s98
      %p105 = scmp.eq.s32.totalorder %s25, 1
      %p106 = por %p104, %p105
      %p107 = scmp.ne.s32.totalorder %s98, %s99
      %p108 = scmp.eq.s32.totalorder %s25, 0
      %p109 = por %p107, %p108
      %p110 = scmp.ne.s32.totalorder %s98, %s99
      %p111 = scmp.eq.s32.totalorder %s26, 1
      %p112 = por %p110, %p111
      %p114 = scmp.ne.s32.totalorder %s99, %s113
      %p115 = scmp.eq.s32.totalorder %s26, 0
      %p116 = por %p114, %p115
      %s118 = sadd.s32 %s117, 1
      %p121 = scmp.eq.s32.totalorder %s20, 1
      %p122 = scmp.ne.s32.totalorder %s117, %s119
      %p123 = scmp.eq.s32.totalorder %s20, 0
      %p124 = por %p122, %p123
      %p125 = scmp.ne.s32.totalorder %s117, %s119
      %p126 = scmp.eq.s32.totalorder %s25, 1
      %p127 = por %p125, %p126
      %p128 = scmp.ne.s32.totalorder %s119, %s120
      %p129 = scmp.eq.s32.totalorder %s25, 0
      %p130 = por %p128, %p129
      %p131 = scmp.ne.s32.totalorder %s119, %s120
      %p132 = scmp.eq.s32.totalorder %s26, 1
      %p133 = por %p131, %p132
      %p135 = scmp.ne.s32.totalorder %s120, %s134
      %p136 = scmp.eq.s32.totalorder %s26, 0
      %p137 = por %p135, %p136
      %s139 = sadd.s32 %s138, 1
      %p142 = scmp.eq.s32.totalorder %s20, 1
      %p143 = scmp.ne.s32.totalorder %s138, %s140
      %p144 = scmp.eq.s32.totalorder %s20, 0
      %p145 = por %p143, %p144
      %p146 = scmp.ne.s32.totalorder %s138, %s140
      %p147 = scmp.eq.s32.totalorder %s25, 1
      %p148 = por %p146, %p147
      %p149 = scmp.ne.s32.totalorder %s140, %s141
      %p150 = scmp.eq.s32.totalorder %s25, 0
      %p151 = por %p149, %p150
      %p152 = scmp.ne.s32.totalorder %s140, %s141
      %p153 = scmp.eq.s32.totalorder %s26, 1
      %p154 = por %p152, %p153
      %p156 = scmp.ne.s32.totalorder %s141, %s155
      %p157 = scmp.eq.s32.totalorder %s26, 0
      %p158 = por %p156, %p157
      %s160 = sadd.s32 %s159, 1
      %p163 = scmp.eq.s32.totalorder %s20, 1
      %p164 = scmp.ne.s32.totalorder %s159, %s161
      %p165 = scmp.eq.s32.totalorder %s20, 0
      %p166 = por %p164, %p165
      %p167 = scmp.ne.s32.totalorder %s159, %s161
      %p168 = scmp.eq.s32.totalorder %s25, 1
      %p169 = por %p167, %p168
      %p170 = scmp.ne.s32.totalorder %s161, %s162
      %p171 = scmp.eq.s32.totalorder %s25, 0
      %p172 = por %p170, %p171
      %p173 = scmp.ne.s32.totalorder %s161, %s162
      %p174 = scmp.eq.s32.totalorder %s26, 1
      %p175 = por %p173, %p174
      %p177 = scmp.ne.s32.totalorder %s162, %s176
      %p178 = scmp.eq.s32.totalorder %s26, 0
      %p179 = por %p177, %p178
      %s181 = sadd.s32 %s180, 1
      %p184 = scmp.eq.s32.totalorder %s20, 1
      %p185 = scmp.ne.s32.totalorder %s180, %s182
      %p186 = scmp.eq.s32.totalorder %s20, 0
      %p187 = por %p185, %p186
      %p188 = scmp.ne.s32.totalorder %s180, %s182
      %p189 = scmp.eq.s32.totalorder %s25, 1
      %p190 = por %p188, %p189
      %p191 = scmp.ne.s32.totalorder %s182, %s183
      %p192 = scmp.eq.s32.totalorder %s25, 0
      %p193 = por %p191, %p192
      %p194 = scmp.ne.s32.totalorder %s182, %s183
      %p195 = scmp.eq.s32.totalorder %s26, 1
      %p196 = por %p194, %p195
      %p198 = scmp.ne.s32.totalorder %s183, %s197
      %p199 = scmp.eq.s32.totalorder %s26, 0
      %p200 = por %p198, %p199
      %s201 = ssub.s32 %s20, %s27
      %p202 = scmp.eq.s32.totalorder %s201, 0
      %s204 = sadd.s32 %s203, 1
      %s205 = scalar_select %p202, %s203, %s204
      %p208 = pneg %p202
      %p209 = scmp.eq.s32.totalorder %s20, 1
      %p210 = por %p208, %p209
      %p211 = scmp.ne.s32.totalorder %s203, %s206
      %p212 = scmp.eq.s32.totalorder %s20, 0
      %p213 = por %p211, %p212
      %p214 = scmp.ne.s32.totalorder %s203, %s206
      %p215 = scmp.eq.s32.totalorder %s25, 1
      %p216 = por %p214, %p215
      %p217 = scmp.ne.s32.totalorder %s206, %s207
      %p218 = scmp.eq.s32.totalorder %s25, 0
      %p219 = por %p217, %p218
      %p220 = scmp.ne.s32.totalorder %s206, %s207
      %p221 = scmp.eq.s32.totalorder %s26, 1
      %p222 = por %p220, %p221
      %p224 = scmp.ne.s32.totalorder %s207, %s223
      %p225 = scmp.eq.s32.totalorder %s26, 0
      %p226 = por %p224, %p225
      %p227 = scmp.le.s32.totalorder 1, %s20
      %p228 = scmp.lt.s32.totalorder %s20, 3
      %p229 = pnand %p227, %p228
      %p230 = pneg %p229
      // Predicated region
      $region9: #{tpu_custom_call.1} parent=5 // pred_check
        _
      $region10: #{tpu_custom_call.1} parent=5 // pred_check_branch
        %232 = sbr.rel (%p229) target = $region12
      $region11: #{tpu_custom_call.1} parent=5 // pred_region
        %s233 = ssub.s32 %s20, 1
        // Predicated region
        $region13: #{tpu_custom_call.1} parent=11 // pred_check
          %p234 = pneg %p67
        $region14: #{tpu_custom_call.1} parent=11 // pred_check_branch
          %236 = sbr.rel (%p234) target = $region16
        $region15: #{tpu_custom_call.1} parent=11 // pred_region
          _
        $region16: #{tpu_custom_call.1} parent=11 // pred_fallthru
          _
        // Predicated region
        $region17: #{tpu_custom_call.1} parent=11 // pred_check
          %p237 = pneg %p88
        $region18: #{tpu_custom_call.1} parent=11 // pred_check_branch
          %239 = sbr.rel (%p237) target = $region20
        $region19: #{tpu_custom_call.1} parent=11 // pred_region
          _
        $region20: #{tpu_custom_call.1} parent=11 // pred_fallthru
          _
        // Predicated region
        $region21: #{tpu_custom_call.1} parent=11 // pred_check
          %p240 = pneg %p109
        $region22: #{tpu_custom_call.1} parent=11 // pred_check_branch
          %242 = sbr.rel (%p240) target = $region24
        $region23: #{tpu_custom_call.1} parent=11 // pred_region
          _
        $region24: #{tpu_custom_call.1} parent=11 // pred_fallthru
          _
        // Predicated region
        $region25: #{tpu_custom_call.1} parent=11 // pred_check
          %p243 = pneg %p130
        $region26: #{tpu_custom_call.1} parent=11 // pred_check_branch
          %245 = sbr.rel (%p243) target = $region28
        $region27: #{tpu_custom_call.1} parent=11 // pred_region
          _
        $region28: #{tpu_custom_call.1} parent=11 // pred_fallthru
          _
        // Predicated region
        $region29: #{tpu_custom_call.1} parent=11 // pred_check
          %p246 = pneg %p151
        $region30: #{tpu_custom_call.1} parent=11 // pred_check_branch
          %248 = sbr.rel (%p246) target = $region32
        $region31: #{tpu_custom_call.1} parent=11 // pred_region
          _
        $region32: #{tpu_custom_call.1} parent=11 // pred_fallthru
          _
        // Predicated region
        $region33: #{tpu_custom_call.1} parent=11 // pred_check
          %p249 = pneg %p172
        $region34: #{tpu_custom_call.1} parent=11 // pred_check_branch
          %251 = sbr.rel (%p249) target = $region36
        $region35: #{tpu_custom_call.1} parent=11 // pred_region
          _
        $region36: #{tpu_custom_call.1} parent=11 // pred_fallthru
          _
        // Predicated region
        $region37: #{tpu_custom_call.1} parent=11 // pred_check
          %p252 = pneg %p193
        $region38: #{tpu_custom_call.1} parent=11 // pred_check_branch
          %254 = sbr.rel (%p252) target = $region40
        $region39: #{tpu_custom_call.1} parent=11 // pred_region
          _
        $region40: #{tpu_custom_call.1} parent=11 // pred_fallthru
          _
      $region12: #{tpu_custom_call.1} parent=5 // pred_fallthru
        _
      %p255 = scmp.lt.s32.totalorder %s20, 2
      // Predicated region
      $region41: #{tpu_custom_call.1} parent=5 // pred_check
        %p256 = pneg %p255
      $region42: #{tpu_custom_call.1} parent=5 // pred_check_branch
        %258 = sbr.rel (%p256) target = $region44
      $region43: #{tpu_custom_call.1} parent=5 // pred_region
        // Predicated region
        $region45: #{tpu_custom_call.1} parent=43 // pred_check
          %p259 = pneg %p40
        $region46: #{tpu_custom_call.1} parent=43 // pred_check_branch
          %261 = sbr.rel (%p259) target = $region48
        $region47: #{tpu_custom_call.1} parent=43 // pred_region
          %s262 = sand.u32 %s30, 1
          %s263 = scalar_lea.sflag [#allocation3], %s262
          %s264 = sand.u32 %s30, 1
          %s265 = smul.addr %s264, 24
          %s266 = scalar_lea.vmem [#allocation2], %s265
          %s268 = ssub.s32 384, 384
          %269 = vsyncadd %s263, %s268
          %s270 = smul.addr %s20, 6
          %s271 = smul.addr %s270, 64
          %s272 = scalar_lea.hbm %s0, %s271
          %s274 = sshll.u32 %s266, 4
          %s275 = int_to_ptr.vmem [resolvable:$true] %s274
          %277 = dma.hbm_to_vmem [thread:$0]  %s272, 384, %s275, %s263
        $region48: #{tpu_custom_call.1} parent=43 // pred_fallthru
          _
      $region44: #{tpu_custom_call.1} parent=5 // pred_fallthru
        _
      %p278 = scmp.le.s32.totalorder 1, %s20
      %p279 = scmp.lt.s32.totalorder %s20, 3
      %p280 = pnand %p278, %p279
      %p281 = pneg %p280
      // Predicated region
      $region49: #{tpu_custom_call.1} parent=5 // pred_check
        _
      $region50: #{tpu_custom_call.1} parent=5 // pred_check_branch
        %283 = sbr.rel (%p280) target = $region52
      $region51: #{tpu_custom_call.1} parent=5 // pred_region
        %s284 = ssub.s32 %s20, 1
        %s285 = sand.u32 %s33, 1
        %s286 = scalar_lea.sflag [#allocation3], %s285
        %s287 = sand.u32 %s33, 1
        %s288 = smul.addr %s287, 24
        %s289 = scalar_lea.vmem [#allocation2], %s288
        // Predicated region
        $region53: #{tpu_custom_call.1} parent=51 // pred_check
          %p290 = pneg %p46
        $region54: #{tpu_custom_call.1} parent=51 // pred_check_branch
          %292 = sbr.rel (%p290) target = $region56
        $region55: #{tpu_custom_call.1} parent=51 // pred_region
          %293 = dma.done %s286, 384
        $region56: #{tpu_custom_call.1} parent=51 // pred_fallthru
          _
        %s294 = sand.u32 %s33, 1
        %s295 = scalar_lea.sflag [#allocation3], %s294
        %s296 = sand.u32 %s33, 1
        %s297 = smul.addr %s296, 24
        %s298 = scalar_lea.vmem [#allocation2], %s297
        %p299 = pneg %p46
        %p300 = pneg %p43
        %p301 = pneg %p67
        %p302 = pneg %p64
        %p303 = pneg %p88
        %p304 = pneg %p85
        %p305 = pneg %p109
        %p306 = pneg %p106
        %p307 = pneg %p130
        %p308 = pneg %p127
        %p309 = pneg %p151
        %p310 = pneg %p148
        %p311 = pneg %p172
        %p312 = pneg %p169
        %p313 = pneg %p193
        %p314 = pneg %p190
        %p315 = pneg %p219
        %p316 = pneg %p216
        %s317 = sand.u32 %s206, 1
        %s318 = scalar_lea.sflag [#allocation4], %s317
        %s319 = sand.u32 %s206, 1
        %s320 = smul.addr %s319, 32
        %s321 = scalar_lea.vmem [#allocation5], %s320
        %v323 = vld [vmem:[%s289] sm:$0xff]
        %v324 = vld [vmem:[%s289 + $0x8] sm:$0xff]
        %v325 = vld [vmem:[%s289 + $0x10] sm:$0xff]
        %v326 = vld [vmem:[%s2] sm:$0xff]
        %v327 = vld [vmem:[%s2 + $0x8] sm:$0xff]
        %v328 = vld [vmem:[%s2 + $0x10] sm:$0xff]
        %v329 = vld [vmem:[%s2 + $0x18] sm:$0xff]
        %v330 = vld [vmem:[%s2 + $0x20] sm:$0xff]
        %v331 = vld [vmem:[%s2 + $0x28] sm:$0xff]
        %v332 = vld [vmem:[%s2 + $0x30] sm:$0xff]
        %v333 = vld [vmem:[%s2 + $0x38] sm:$0xff]
        %v334 = vld [vmem:[%s2 + $0x40] sm:$0xff]
        %v335 = vld [vmem:[%s2 + $0x48] sm:$0xff]
        %v336 = vld [vmem:[%s2 + $0x50] sm:$0xff]
        %v337 = vld [vmem:[%s2 + $0x58] sm:$0xff]
        %v338 = vld [vmem:[%s2 + $0x60] sm:$0x7]
        %v339 = vld [vmem:[%s2 + $0x68] sm:$0x7]
        %v340 = vld [vmem:[%s2 + $0x70] sm:$0x7]
        %v341 = vld [vmem:[%s2 + $0x78] sm:$0x7]
        %v342 = vld [vmem:[%s1] sm:$0xf]
        %v343 = vld [vmem:[%s1 + $0x4] sm:$0xf]
        %v344 = vld [vmem:[%s1 + $0x8] sm:$0xf]
        %v345 = vld [vmem:[%s1 + $0xc] sm:$0xf]
        %v346 = vld [vmem:[%s1 + $0x10] sm:$0xf]
        %v347 = vld [vmem:[%s1 + $0x14] sm:$0xf]
        %v348 = vld [vmem:[%s1 + $0x18] sm:$0xf]
        %v349 = vld [vmem:[%s1 + $0x1c] sm:$0xf]
        %v350 = vld [vmem:[%s1 + $0x20] sm:$0xf]
        %v351 = vld [vmem:[%s1 + $0x24] sm:$0xf]
        %v352 = vld [vmem:[%s1 + $0x28] sm:$0xf]
        %v353 = vld [vmem:[%s1 + $0x2c] sm:$0xf]
        %v354 = vld [vmem:[%s1 + $0x30] sm:$0xf]
        %v355 = vld [vmem:[%s1 + $0x34] sm:$0xf]
        %v356 = vld [vmem:[%s1 + $0x38] sm:$0xf]
        %v357 = vld [vmem:[%s1 + $0x3c] sm:$0xf]
        %v358 = vld [vmem:[%s1 + $0x40] sm:$0xf]
        %v359 = vld [vmem:[%s1 + $0x44] sm:$0xf]
        %v360 = vld [vmem:[%s1 + $0x48] sm:$0xf]
        %v361 = vld [vmem:[%s1 + $0x4c] sm:$0xf]
        %v362 = vld [vmem:[%s1 + $0x50] sm:$0xf]
        %v363 = vld [vmem:[%s1 + $0x54] sm:$0xf]
        %v364 = vld [vmem:[%s1 + $0x58] sm:$0xf]
        %v365 = vld [vmem:[%s1 + $0x5c] sm:$0xf]
        %v366 = vld [vmem:[%s1 + $0x60] sm:$0xf]
        %v367 = vld [vmem:[%s1 + $0x64] sm:$0xf]
        %v368 = vld [vmem:[%s1 + $0x68] sm:$0xf]
        %v369 = vlaneseq
        %v370 = vshrl.u32 %v369, 7
        %v371 = vsub.s32 0, %v370
        %v372 = vrot.slane %v326, %v371
        %v373 = vlaneseq
        %v374 = vshrl.u32 %v373, 7
        %v375 = vsub.s32 0, %v374
        %v376 = vrot.slane %v327, %v375
        %v377 = vlaneseq
        %v378 = vshrl.u32 %v377, 7
        %v379 = vsub.s32 0, %v378
        %v380 = vrot.slane %v328, %v379
        %v381 = vlaneseq
        %v382 = vshrl.u32 %v381, 7
        %v383 = vsub.s32 0, %v382
        %v384 = vrot.slane %v329, %v383
        %v389 = vcombine.low %v372, %v376
        %v390 = vcombine.low %v380, %v384
        %v393 = vmul.f32 %v323, %v389
        %v394 = vmul.f32 %v324, %v390
        %v397 = vcombine.high %v393, %v393
        %v398 = vcombine.high %v394, %v394
        %v401 = vpack.c.bf16 %v393, %v393
        %v402 = vpack.c.bf16 %v397, %v397
        %v403 = vpack.c.bf16 %v394, %v394
        %v404 = vpack.c.bf16 %v398, %v398
        %v405 = vlaneseq
        %v406 = vshrl.u32 %v405, 7
        %v407 = vsub.s32 1, %v406
        %v408 = vrot.slane %v326, %v407
        %v409 = vlaneseq
        %v410 = vshrl.u32 %v409, 7
        %v411 = vsub.s32 1, %v410
        %v412 = vrot.slane %v327, %v411
        %v413 = vlaneseq
        %v414 = vshrl.u32 %v413, 7
        %v415 = vsub.s32 1, %v414
        %v416 = vrot.slane %v328, %v415
        %v417 = vlaneseq
        %v418 = vshrl.u32 %v417, 7
        %v419 = vsub.s32 1, %v418
        %v420 = vrot.slane %v329, %v419
        %v425 = vcombine.low %v408, %v412
        %v426 = vcombine.low %v416, %v420
        %427 = vrot.lane.b32.xlu0 %v425, 1
        %v428 = vpop.permute.xlu0 %427
        %429 = vrot.lane.b32.xlu0 %v426, 1
        %v430 = vpop.permute.xlu0 %429
        %v431 = vrot.slane %v428, 4
        %v432 = vrot.slane %v430, 4
        %vm433 = vcmask 7168
        %v434 = vsel %vm433, %v431, %v428
        %vm435 = vcmask 1043456
        %v436 = vsel %vm435, %v431, %v432
        %v437 = vsel %vm433, %v436, %v430
        %v441 = vmul.f32 %v323, %v434
        %v442 = vmul.f32 %v324, %v437
        %v443 = vmul.f32 %v325, %v432
        %v446 = vcombine.high %v441, %v441
        %v447 = vcombine.high %v442, %v442
        %v450 = vpack.c.bf16 %v441, %v441
        %v451 = vpack.c.bf16 %v446, %v446
        %v452 = vpack.c.bf16 %v442, %v442
        %v453 = vpack.c.bf16 %v447, %v447
        %v454 = vpack.c.bf16 %v443, %v443
        %460 = vrot.lane.b32.xlu0 %v450, 127
        %v461 = vpop.permute.xlu0 %460
        %462 = vrot.lane.b32.xlu0 %v451, 127
        %v463 = vpop.permute.xlu0 %462
        %464 = vrot.lane.b32.xlu0 %v452, 127
        %v465 = vpop.permute.xlu0 %464
        %466 = vrot.lane.b32.xlu0 %v453, 127
        %v467 = vpop.permute.xlu0 %466
        %468 = vrot.lane.b32.xlu0 %v454, 127
        %v469 = vpop.permute.xlu0 %468
        %vm470 = vcmask 1039360
        %v471 = vsel %vm470, %v461, %v463
        %v472 = vsel %vm470, %v463, %v465
        %v473 = vsel %vm470, %v465, %v467
        %v474 = vsel %vm470, %v467, %v469
        %vm475 = vcmask 31744
        %v477 = vsel %vm475, %v343, 0
        %vm479 = vcmask 1041408
        %v481 = vsel %vm479, %v471, 0
        %v484 = vsel %vm479, %v472, 0
        %v487 = vsel %vm479, %v473, 0
        %v490 = vsel %vm479, %v474, 0
        %492 = vmatprep.subr.bf16.mxu0 %v484
        %493 = vmatpush1.bf16.msra.mxu0 %v481
        %494 = vmatprep.subr.bf16.mxu0 0
        %495 = vmatpush1.bf16.msra.mxu0 0
        %496 = vmatprep.subr.bf16.mxu0 0
        %497 = vmatpush1.bf16.msra.mxu0 0
        %498 = vmatprep.subr.bf16.mxu0 0
        %499 = vmatpush1.bf16.msra.mxu0 0
        %500 = vmatprep.subr.bf16.mxu0 0
        %501 = vmatpush1.bf16.msra.mxu0 0
        %502 = vmatprep.subr.bf16.mxu0 0
        %503 = vmatpush1.bf16.msra.mxu0 0
        %504 = vmatprep.subr.bf16.mxu0 0
        %505 = vmatpush1.bf16.msra.mxu0 0
        %506 = vmatprep.subr.bf16.mxu0 0
        %507 = vmatpush1.bf16.msra.mxu0 0
        %508 = vmatprep.subr.bf16.mxu0 0
        %509 = vmatpush1.bf16.msra.mxu0 0
        %510 = vmatprep.subr.bf16.mxu0 0
        %511 = vmatpush1.bf16.msra.mxu0 0
        %512 = vmatprep.subr.bf16.mxu0 0
        %513 = vmatpush1.bf16.msra.mxu0 0
        %514 = vmatprep.subr.bf16.mxu0 0
        %515 = vmatpush1.bf16.msra.mxu0 0
        %516 = vmatprep.subr.bf16.mxu0 0
        %517 = vmatpush1.bf16.msra.mxu0 0
        %518 = vmatprep.subr.bf16.mxu0 0
        %519 = vmatpush1.bf16.msra.mxu0 0
        %520 = vmatprep.subr.bf16.mxu0 0
        %521 = vmatpush1.bf16.msra.mxu0 0
        %522 = vmatprep.subr.bf16.mxu0 0
        %523 = vmatpush1.bf16.msra.mxu0 0
        %524 = vmatprep.mubr.bf16.mxu0 0
        %525 = vmatmul.mubr.bf16.gmra.mrb[0].mxu0 %v477
        %v526 = vpop.f32.mrb[0].mxu0
        %v527 = vadd.f32 0.0, %v526
        %v528 = vpop.f32.mrb[0].mxu0
        %v529 = vadd.f32 0.0, %v528
        %v530 = vpop.f32.mrb[0].mxu0
        %v531 = vpop.f32.mrb[0].mxu0
        %532 = vdwg.mxu0
        %533 = vmatprep.subr.bf16.mxu0 %v490
        %534 = vmatpush1.bf16.msra.mxu0 %v487
        %535 = vmatprep.subr.bf16.mxu0 0
        %536 = vmatpush1.bf16.msra.mxu0 0
        %537 = vmatprep.subr.bf16.mxu0 0
        %538 = vmatpush1.bf16.msra.mxu0 0
        %539 = vmatprep.subr.bf16.mxu0 0
        %540 = vmatpush1.bf16.msra.mxu0 0
        %541 = vmatprep.subr.bf16.mxu0 0
        %542 = vmatpush1.bf16.msra.mxu0 0
        %543 = vmatprep.subr.bf16.mxu0 0
        %544 = vmatpush1.bf16.msra.mxu0 0
        %545 = vmatprep.subr.bf16.mxu0 0
        %546 = vmatpush1.bf16.msra.mxu0 0
        %547 = vmatprep.subr.bf16.mxu0 0
        %548 = vmatpush1.bf16.msra.mxu0 0
        %549 = vmatprep.subr.bf16.mxu0 0
        %550 = vmatpush1.bf16.msra.mxu0 0
        %551 = vmatprep.subr.bf16.mxu0 0
        %552 = vmatpush1.bf16.msra.mxu0 0
        %553 = vmatprep.subr.bf16.mxu0 0
        %554 = vmatpush1.bf16.msra.mxu0 0
        %555 = vmatprep.subr.bf16.mxu0 0
        %556 = vmatpush1.bf16.msra.mxu0 0
        %557 = vmatprep.subr.bf16.mxu0 0
        %558 = vmatpush1.bf16.msra.mxu0 0
        %559 = vmatprep.subr.bf16.mxu0 0
        %560 = vmatpush1.bf16.msra.mxu0 0
        %561 = vmatprep.subr.bf16.mxu0 0
        %562 = vmatpush1.bf16.msra.mxu0 0
        %563 = vmatprep.subr.bf16.mxu0 0
        %564 = vmatpush1.bf16.msra.mxu0 0
        %565 = vmatprep.mubr.bf16.mxu0 0
        %566 = vmatmul.mubr.bf16.gmra.mrb[0].mxu0 %v477
        %v567 = vpop.f32.mrb[0].mxu0
        %v568 = vadd.f32 0.0, %v567
        %v569 = vpop.f32.mrb[0].mxu0
        %v570 = vadd.f32 0.0, %v569
        %v571 = vpop.f32.mrb[0].mxu0
        %v572 = vpop.f32.mrb[0].mxu0
        %573 = vdwg.mxu0
        %v575 = vsel %vm475, %v342, 0
        %v578 = vsel %vm479, %v401, 0
        %v581 = vsel %vm479, %v402, 0
        %v584 = vsel %vm479, %v403, 0
        %v587 = vsel %vm479, %v404, 0
        %589 = vmatprep.subr.bf16.mxu0 %v581
        %590 = vmatpush1.bf16.msra.mxu0 %v578
        %591 = vmatprep.subr.bf16.mxu0 0
        %592 = vmatpush1.bf16.msra.mxu0 0
        %593 = vmatprep.subr.bf16.mxu0 0
        %594 = vmatpush1.bf16.msra.mxu0 0
        %595 = vmatprep.subr.bf16.mxu0 0
        %596 = vmatpush1.bf16.msra.mxu0 0
        %597 = vmatprep.subr.bf16.mxu0 0
        %598 = vmatpush1.bf16.msra.mxu0 0
        %599 = vmatprep.subr.bf16.mxu0 0
        %600 = vmatpush1.bf16.msra.mxu0 0
        %601 = vmatprep.subr.bf16.mxu0 0
        %602 = vmatpush1.bf16.msra.mxu0 0
        %603 = vmatprep.subr.bf16.mxu0 0
        %604 = vmatpush1.bf16.msra.mxu0 0
        %605 = vmatprep.subr.bf16.mxu0 0
        %606 = vmatpush1.bf16.msra.mxu0 0
        %607 = vmatprep.subr.bf16.mxu0 0
        %608 = vmatpush1.bf16.msra.mxu0 0
        %609 = vmatprep.subr.bf16.mxu0 0
        %610 = vmatpush1.bf16.msra.mxu0 0
        %611 = vmatprep.subr.bf16.mxu0 0
        %612 = vmatpush1.bf16.msra.mxu0 0
        %613 = vmatprep.subr.bf16.mxu0 0
        %614 = vmatpush1.bf16.msra.mxu0 0
        %615 = vmatprep.subr.bf16.mxu0 0
        %616 = vmatpush1.bf16.msra.mxu0 0
        %617 = vmatprep.subr.bf16.mxu0 0
        %618 = vmatpush1.bf16.msra.mxu0 0
        %619 = vmatprep.subr.bf16.mxu0 0
        %620 = vmatpush1.bf16.msra.mxu0 0
        %621 = vmatprep.mubr.bf16.mxu0 0
        %622 = vmatmul.mubr.bf16.gmra.mrb[0].mxu0 %v575
        %v623 = vpop.f32.mrb[0].mxu0
        %v624 = vadd.f32 %v527, %v623
        %v625 = vpop.f32.mrb[0].mxu0
        %v626 = vadd.f32 %v529, %v625
        %v627 = vpop.f32.mrb[0].mxu0
        %v628 = vpop.f32.mrb[0].mxu0
        %629 = vdwg.mxu0
        %630 = vmatprep.subr.bf16.mxu0 %v587
        %631 = vmatpush1.bf16.msra.mxu0 %v584
        %632 = vmatprep.subr.bf16.mxu0 0
        %633 = vmatpush1.bf16.msra.mxu0 0
        %634 = vmatprep.subr.bf16.mxu0 0
        %635 = vmatpush1.bf16.msra.mxu0 0
        %636 = vmatprep.subr.bf16.mxu0 0
        %637 = vmatpush1.bf16.msra.mxu0 0
        %638 = vmatprep.subr.bf16.mxu0 0
        %639 = vmatpush1.bf16.msra.mxu0 0
        %640 = vmatprep.subr.bf16.mxu0 0
        %641 = vmatpush1.bf16.msra.mxu0 0
        %642 = vmatprep.subr.bf16.mxu0 0
        %643 = vmatpush1.bf16.msra.mxu0 0
        %644 = vmatprep.subr.bf16.mxu0 0
        %645 = vmatpush1.bf16.msra.mxu0 0
        %646 = vmatprep.subr.bf16.mxu0 0
        %647 = vmatpush1.bf16.msra.mxu0 0
        %648 = vmatprep.subr.bf16.mxu0 0
        %649 = vmatpush1.bf16.msra.mxu0 0
        %650 = vmatprep.subr.bf16.mxu0 0
        %651 = vmatpush1.bf16.msra.mxu0 0
        %652 = vmatprep.subr.bf16.mxu0 0
        %653 = vmatpush1.bf16.msra.mxu0 0
        %654 = vmatprep.subr.bf16.mxu0 0
        %655 = vmatpush1.bf16.msra.mxu0 0
        %656 = vmatprep.subr.bf16.mxu0 0
        %657 = vmatpush1.bf16.msra.mxu0 0
        %658 = vmatprep.subr.bf16.mxu0 0
        %659 = vmatpush1.bf16.msra.mxu0 0
        %660 = vmatprep.subr.bf16.mxu0 0
        %661 = vmatpush1.bf16.msra.mxu0 0
        %662 = vmatprep.mubr.bf16.mxu0 0
        %663 = vmatmul.mubr.bf16.gmra.mrb[0].mxu0 %v575
        %v664 = vpop.f32.mrb[0].mxu0
        %v665 = vadd.f32 %v568, %v664
        %v666 = vpop.f32.mrb[0].mxu0
        %v667 = vadd.f32 %v570, %v666
        %v668 = vpop.f32.mrb[0].mxu0
        %v669 = vpop.f32.mrb[0].mxu0
        %670 = vdwg.mxu0
        %v671 = vlaneseq
        %v672 = vshrl.u32 %v671, 7
        %v673 = vsub.s32 2, %v672
        %v674 = vrot.slane %v326, %v673
        %v675 = vlaneseq
        %v676 = vshrl.u32 %v675, 7
        %v677 = vsub.s32 2, %v676
        %v678 = vrot.slane %v327, %v677
        %v679 = vlaneseq
        %v680 = vshrl.u32 %v679, 7
        %v681 = vsub.s32 2, %v680
        %v682 = vrot.slane %v328, %v681
        %v683 = vlaneseq
        %v684 = vshrl.u32 %v683, 7
        %v685 = vsub.s32 2, %v684
        %v686 = vrot.slane %v329, %v685
        %v691 = vcombine.low %v674, %v678
        %v692 = vcombine.low %v682, %v686
        %693 = vrot.lane.b32.xlu0 %v691, 2
        %v694 = vpop.permute.xlu0 %693
        %695 = vrot.lane.b32.xlu0 %v692, 2
        %v696 = vpop.permute.xlu0 %695
        %v697 = vrot.slane %v694, 4
        %v698 = vrot.slane %v696, 4
        %vm699 = vcmask 15360
        %v700 = vsel %vm699, %v697, %v694
        %v701 = vsel %vm435, %v697, %v698
        %v702 = vsel %vm699, %v701, %v696
        %v706 = vmul.f32 %v323, %v700
        %v707 = vmul.f32 %v324, %v702
        %v708 = vmul.f32 %v325, %v698
        %v711 = vcombine.high %v706, %v706
        %v712 = vcombine.high %v707, %v707
        %v715 = vpack.c.bf16 %v706, %v706
        %v716 = vpack.c.bf16 %v711, %v711
        %v717 = vpack.c.bf16 %v707, %v707
        %v718 = vpack.c.bf16 %v712, %v712
        %v719 = vpack.c.bf16 %v708, %v708
        %725 = vrot.lane.b32.xlu0 %v715, 126
        %v726 = vpop.permute.xlu0 %725
        %727 = vrot.lane.b32.xlu0 %v716, 126
        %v728 = vpop.permute.xlu0 %727
        %729 = vrot.lane.b32.xlu0 %v717, 126
        %v730 = vpop.permute.xlu0 %729
        %731 = vrot.lane.b32.xlu0 %v718, 126
        %v732 = vpop.permute.xlu0 %731
        %733 = vrot.lane.b32.xlu0 %v719, 126
        %v734 = vpop.permute.xlu0 %733
        %vm735 = vcmask 1031168
        %v736 = vsel %vm735, %v726, %v728
        %v737 = vsel %vm735, %v728, %v730
        %v738 = vsel %vm735, %v730, %v732
        %v739 = vsel %vm735, %v732, %v734
        %v741 = vsel %vm475, %v344, 0
        %v744 = vsel %vm479, %v736, 0
        %v747 = vsel %vm479, %v737, 0
        %v750 = vsel %vm479, %v738, 0
        %v753 = vsel %vm479, %v739, 0
        %755 = vmatprep.subr.bf16.mxu0 %v747
        %756 = vmatpush1.bf16.msra.mxu0 %v744
        %757 = vmatprep.subr.bf16.mxu0 0
        %758 = vmatpush1.bf16.msra.mxu0 0
        %759 = vmatprep.subr.bf16.mxu0 0
        %760 = vmatpush1.bf16.msra.mxu0 0
        %761 = vmatprep.subr.bf16.mxu0 0
        %762 = vmatpush1.bf16.msra.mxu0 0
        %763 = vmatprep.subr.bf16.mxu0 0
        %764 = vmatpush1.bf16.msra.mxu0 0
        %765 = vmatprep.subr.bf16.mxu0 0
        %766 = vmatpush1.bf16.msra.mxu0 0
        %767 = vmatprep.subr.bf16.mxu0 0
        %768 = vmatpush1.bf16.msra.mxu0 0
        %769 = vmatprep.subr.bf16.mxu0 0
        %770 = vmatpush1.bf16.msra.mxu0 0
        %771 = vmatprep.subr.bf16.mxu0 0
        %772 = vmatpush1.bf16.msra.mxu0 0
        %773 = vmatprep.subr.bf16.mxu0 0
        %774 = vmatpush1.bf16.msra.mxu0 0
        %775 = vmatprep.subr.bf16.mxu0 0
        %776 = vmatpush1.bf16.msra.mxu0 0
        %777 = vmatprep.subr.bf16.mxu0 0
        %778 = vmatpush1.bf16.msra.mxu0 0
        %779 = vmatprep.subr.bf16.mxu0 0
        %780 = vmatpush1.bf16.msra.mxu0 0
        %781 = vmatprep.subr.bf16.mxu0 0
        %782 = vmatpush1.bf16.msra.mxu0 0
        %783 = vmatprep.subr.bf16.mxu0 0
        %784 = vmatpush1.bf16.msra.mxu0 0
        %785 = vmatprep.subr.bf16.mxu0 0
        %786 = vmatpush1.bf16.msra.mxu0 0
        %787 = vmatprep.mubr.bf16.mxu0 0
        %788 = vmatmul.mubr.bf16.gmra.mrb[0].mxu0 %v741
        %v789 = vpop.f32.mrb[0].mxu0
        %v790 = vadd.f32 0.0, %v789
        %v791 = vpop.f32.mrb[0].mxu0
        %v792 = vadd.f32 0.0, %v791
        %v793 = vpop.f32.mrb[0].mxu0
        %v794 = vpop.f32.mrb[0].mxu0
        %795 = vdwg.mxu0
        %796 = vmatprep.subr.bf16.mxu0 %v753
        %797 = vmatpush1.bf16.msra.mxu0 %v750
        %798 = vmatprep.subr.bf16.mxu0 0
        %799 = vmatpush1.bf16.msra.mxu0 0
        %800 = vmatprep.subr.bf16.mxu0 0
        %801 = vmatpush1.bf16.msra.mxu0 0
        %802 = vmatprep.subr.bf16.mxu0 0
        %803 = vmatpush1.bf16.msra.mxu0 0
        %804 = vmatprep.subr.bf16.mxu0 0
        %805 = vmatpush1.bf16.msra.mxu0 0
        %806 = vmatprep.subr.bf16.mxu0 0
        %807 = vmatpush1.bf16.msra.mxu0 0
        %808 = vmatprep.subr.bf16.mxu0 0
        %809 = vmatpush1.bf16.msra.mxu0 0
        %810 = vmatprep.subr.bf16.mxu0 0
        %811 = vmatpush1.bf16.msra.mxu0 0
        %812 = vmatprep.subr.bf16.mxu0 0
        %813 = vmatpush1.bf16.msra.mxu0 0
        %814 = vmatprep.subr.bf16.mxu0 0
        %815 = vmatpush1.bf16.msra.mxu0 0
        %816 = vmatprep.subr.bf16.mxu0 0
        %817 = vmatpush1.bf16.msra.mxu0 0
        %818 = vmatprep.subr.bf16.mxu0 0
        %819 = vmatpush1.bf16.msra.mxu0 0
        %820 = vmatprep.subr.bf16.mxu0 0
        %821 = vmatpush1.bf16.msra.mxu0 0
        %822 = vmatprep.subr.bf16.mxu0 0
        %823 = vmatpush1.bf16.msra.mxu0 0
        %824 = vmatprep.subr.bf16.mxu0 0
        %825 = vmatpush1.bf16.msra.mxu0 0
        %826 = vmatprep.subr.bf16.mxu0 0
        %827 = vmatpush1.bf16.msra.mxu0 0
        %828 = vmatprep.mubr.bf16.mxu0 0
        %829 = vmatmul.mubr.bf16.gmra.mrb[0].mxu0 %v741
        %v830 = vpop.f32.mrb[0].mxu0
        %v831 = vadd.f32 0.0, %v830
        %v832 = vpop.f32.mrb[0].mxu0
        %v833 = vadd.f32 0.0, %v832
        %v834 = vpop.f32.mrb[0].mxu0
        %v835 = vpop.f32.mrb[0].mxu0
        %836 = vdwg.mxu0
        %v837 = vadd.f32 %v624, %v790
        %v838 = vadd.f32 %v626, %v792
        %v839 = vadd.f32 %v665, %v831
        %v840 = vadd.f32 %v667, %v833
        %v841 = vlaneseq
        %v842 = vshrl.u32 %v841, 7
        %v843 = vsub.s32 3, %v842
        %v844 = vrot.slane %v326, %v843
        %v845 = vlaneseq
        %v846 = vshrl.u32 %v845, 7
        %v847 = vsub.s32 3, %v846
        %v848 = vrot.slane %v327, %v847
        %v849 = vlaneseq
        %v850 = vshrl.u32 %v849, 7
        %v851 = vsub.s32 3, %v850
        %v852 = vrot.slane %v328, %v851
        %v853 = vlaneseq
        %v854 = vshrl.u32 %v853, 7
        %v855 = vsub.s32 3, %v854
        %v856 = vrot.slane %v329, %v855
        %v861 = vcombine.low %v844, %v848
        %v862 = vcombine.low %v852, %v856
        %863 = vrot.lane.b32.xlu0 %v861, 8
        %v864 = vpop.permute.xlu0 %863
        %865 = vrot.lane.b32.xlu0 %v862, 8
        %v866 = vpop.permute.xlu0 %865
        %v867 = vrot.slane %v864, 4
        %v868 = vrot.slane %v866, 4
        %vm869 = vcmask 64512
        %v870 = vsel %vm869, %v867, %v864
        %v871 = vsel %vm435, %v867, %v868
        %v872 = vsel %vm869, %v871, %v866
        %v876 = vmul.f32 %v323, %v870
        %v877 = vmul.f32 %v324, %v872
        %v878 = vmul.f32 %v325, %v868
        %v881 = vcombine.high %v876, %v876
        %v882 = vcombine.high %v877, %v877
        %v885 = vpack.c.bf16 %v876, %v876
        %v886 = vpack.c.bf16 %v881, %v881
        %v887 = vpack.c.bf16 %v877, %v877
        %v888 = vpack.c.bf16 %v882, %v882
        %v889 = vpack.c.bf16 %v878, %v878
        %895 = vrot.lane.b32.xlu0 %v885, 120
        %v896 = vpop.permute.xlu0 %895
        %897 = vrot.lane.b32.xlu0 %v886, 120
        %v898 = vpop.permute.xlu0 %897
        %899 = vrot.lane.b32.xlu0 %v887, 120
        %v900 = vpop.permute.xlu0 %899
        %901 = vrot.lane.b32.xlu0 %v888, 120
        %v902 = vpop.permute.xlu0 %901
        %903 = vrot.lane.b32.xlu0 %v889, 120
        %v904 = vpop.permute.xlu0 %903
        %vm905 = vcmask 982016
        %v906 = vsel %vm905, %v896, %v898
        %v907 = vsel %vm905, %v898, %v900
        %v908 = vsel %vm905, %v900, %v902
        %v909 = vsel %vm905, %v902, %v904
        %v911 = vsel %vm475, %v345, 0
        %v914 = vsel %vm479, %v906, 0
        %v917 = vsel %vm479, %v907, 0
        %v920 = vsel %vm479, %v908, 0
        %v923 = vsel %vm479, %v909, 0
        %925 = vmatprep.subr.bf16.mxu0 %v917
        %926 = vmatpush1.bf16.msra.mxu0 %v914
        %927 = vmatprep.subr.bf16.mxu0 0
        %928 = vmatpush1.bf16.msra.mxu0 0
        %929 = vmatprep.subr.bf16.mxu0 0
        %930 = vmatpush1.bf16.msra.mxu0 0
        %931 = vmatprep.subr.bf16.mxu0 0
        %932 = vmatpush1.bf16.msra.mxu0 0
        %933 = vmatprep.subr.bf16.mxu0 0
        %934 = vmatpush1.bf16.msra.mxu0 0
        %935 = vmatprep.subr.bf16.mxu0 0
        %936 = vmatpush1.bf16.msra.mxu0 0
        %937 = vmatprep.subr.bf16.mxu0 0
        %938 = vmatpush1.bf16.msra.mxu0 0
        %939 = vmatprep.subr.bf16.mxu0 0
        %940 = vmatpush1.bf16.msra.mxu0 0
        %941 = vmatprep.subr.bf16.mxu0 0
        %942 = vmatpush1.bf16.msra.mxu0 0
        %943 = vmatprep.subr.bf16.mxu0 0
        %944 = vmatpush1.bf16.msra.mxu0 0
        %945 = vmatprep.subr.bf16.mxu0 0
        %946 = vmatpush1.bf16.msra.mxu0 0
        %947 = vmatprep.subr.bf16.mxu0 0
        %948 = vmatpush1.bf16.msra.mxu0 0
        %949 = vmatprep.subr.bf16.mxu0 0
        %950 = vmatpush1.bf16.msra.mxu0 0
        %951 = vmatprep.subr.bf16.mxu0 0
        %952 = vmatpush1.bf16.msra.mxu0 0
        %953 = vmatprep.subr.bf16.mxu0 0
        %954 = vmatpush1.bf16.msra.mxu0 0
        %955 = vmatprep.subr.bf16.mxu0 0
        %956 = vmatpush1.bf16.msra.mxu0 0
        %957 = vmatprep.mubr.bf16.mxu0 0
        %958 = vmatmul.mubr.bf16.gmra.mrb[0].mxu0 %v911
        %v959 = vpop.f32.mrb[0].mxu0
        %v960 = vadd.f32 0.0, %v959
        %v961 = vpop.f32.mrb[0].mxu0
        %v962 = vadd.f32 0.0, %v961
        %v963 = vpop.f32.mrb[0].mxu0
        %v964 = vpop.f32.mrb[0].mxu0
        %965 = vdwg.mxu0
        %966 = vmatprep.subr.bf16.mxu0 %v923
        %967 = vmatpush1.bf16.msra.mxu0 %v920
        %968 = vmatprep.subr.bf16.mxu0 0
        %969 = vmatpush1.bf16.msra.mxu0 0
        %970 = vmatprep.subr.bf16.mxu0 0
        %971 = vmatpush1.bf16.msra.mxu0 0
        %972 = vmatprep.subr.bf16.mxu0 0
        %973 = vmatpush1.bf16.msra.mxu0 0
        %974 = vmatprep.subr.bf16.mxu0 0
        %975 = vmatpush1.bf16.msra.mxu0 0
        %976 = vmatprep.subr.bf16.mxu0 0
        %977 = vmatpush1.bf16.msra.mxu0 0
        %978 = vmatprep.subr.bf16.mxu0 0
        %979 = vmatpush1.bf16.msra.mxu0 0
        %980 = vmatprep.subr.bf16.mxu0 0
        %981 = vmatpush1.bf16.msra.mxu0 0
        %982 = vmatprep.subr.bf16.mxu0 0
        %983 = vmatpush1.bf16.msra.mxu0 0
        %984 = vmatprep.subr.bf16.mxu0 0
        %985 = vmatpush1.bf16.msra.mxu0 0
        %986 = vmatprep.subr.bf16.mxu0 0
        %987 = vmatpush1.bf16.msra.mxu0 0
        %988 = vmatprep.subr.bf16.mxu0 0
        %989 = vmatpush1.bf16.msra.mxu0 0
        %990 = vmatprep.subr.bf16.mxu0 0
        %991 = vmatpush1.bf16.msra.mxu0 0
        %992 = vmatprep.subr.bf16.mxu0 0
        %993 = vmatpush1.bf16.msra.mxu0 0
        %994 = vmatprep.subr.bf16.mxu0 0
        %995 = vmatpush1.bf16.msra.mxu0 0
        %996 = vmatprep.subr.bf16.mxu0 0
        %997 = vmatpush1.bf16.msra.mxu0 0
        %998 = vmatprep.mubr.bf16.mxu0 0
        %999 = vmatmul.mubr.bf16.gmra.mrb[0].mxu0 %v911
        %v1000 = vpop.f32.mrb[0].mxu0
        %v1001 = vadd.f32 0.0, %v1000
        %v1002 = vpop.f32.mrb[0].mxu0
        %v1003 = vadd.f32 0.0, %v1002
        %v1004 = vpop.f32.mrb[0].mxu0
        %v1005 = vpop.f32.mrb[0].mxu0
        %1006 = vdwg.mxu0
        %v1007 = vadd.f32 %v837, %v960
        %v1008 = vadd.f32 %v838, %v962
        %v1009 = vadd.f32 %v839, %v1001
        %v1010 = vadd.f32 %v840, %v1003
        %v1011 = vlaneseq
        %v1012 = vshrl.u32 %v1011, 7
        %v1013 = vsub.s32 4, %v1012
        %v1014 = vrot.slane %v326, %v1013
        %v1015 = vlaneseq
        %v1016 = vshrl.u32 %v1015, 7
        %v1017 = vsub.s32 4, %v1016
        %v1018 = vrot.slane %v327, %v1017
        %v1019 = vlaneseq
        %v1020 = vshrl.u32 %v1019, 7
        %v1021 = vsub.s32 4, %v1020
        %v1022 = vrot.slane %v328, %v1021
        %v1023 = vlaneseq
        %v1024 = vshrl.u32 %v1023, 7
        %v1025 = vsub.s32 4, %v1024
        %v1026 = vrot.slane %v329, %v1025
        %v1031 = vcombine.low %v1014, %v1018
        %v1032 = vcombine.low %v1022, %v1026
        %1033 = vrot.lane.b32.xlu0 %v1031, 9
        %v1034 = vpop.permute.xlu0 %1033
        %1035 = vrot.lane.b32.xlu0 %v1032, 9
        %v1036 = vpop.permute.xlu0 %1035
        %v1037 = vrot.slane %v1034, 4
        %v1038 = vrot.slane %v1036, 4
        %vm1039 = vcmask 72704
        %v1040 = vsel %vm1039, %v1037, %v1034
        %v1041 = vsel %vm435, %v1037, %v1038
        %v1042 = vsel %vm1039, %v1041, %v1036
        %v1046 = vmul.f32 %v323, %v1040
        %v1047 = vmul.f32 %v324, %v1042
        %v1048 = vmul.f32 %v325, %v1038
        %v1051 = vcombine.high %v1046, %v1046
        %v1052 = vcombine.high %v1047, %v1047
        %v1055 = vpack.c.bf16 %v1046, %v1046
        %v1056 = vpack.c.bf16 %v1051, %v1051
        %v1057 = vpack.c.bf16 %v1047, %v1047
        %v1058 = vpack.c.bf16 %v1052, %v1052
        %v1059 = vpack.c.bf16 %v1048, %v1048
        %1065 = vrot.lane.b32.xlu0 %v1055, 119
        %v1066 = vpop.permute.xlu0 %1065
        %1067 = vrot.lane.b32.xlu0 %v1056, 119
        %v1068 = vpop.permute.xlu0 %1067
        %1069 = vrot.lane.b32.xlu0 %v1057, 119
        %v1070 = vpop.permute.xlu0 %1069
        %1071 = vrot.lane.b32.xlu0 %v1058, 119
        %v1072 = vpop.permute.xlu0 %1071
        %1073 = vrot.lane.b32.xlu0 %v1059, 119
        %v1074 = vpop.permute.xlu0 %1073
        %vm1075 = vcmask 973824
        %v1076 = vsel %vm1075, %v1066, %v1068
        %v1077 = vsel %vm1075, %v1068, %v1070
        %v1078 = vsel %vm1075, %v1070, %v1072
        %v1079 = vsel %vm1075, %v1072, %v1074
        %v1081 = vsel %vm475, %v346, 0
        %v1084 = vsel %vm479, %v1076, 0
        %v1087 = vsel %vm479, %v1077, 0
        %v1090 = vsel %vm479, %v1078, 0
        %v1093 = vsel %vm479, %v1079, 0
        %1095 = vmatprep.subr.bf16.mxu0 %v1087
        %1096 = vmatpush1.bf16.msra.mxu0 %v1084
        %1097 = vmatprep.subr.bf16.mxu0 0
        %1098 = vmatpush1.bf16.msra.mxu0 0
        %1099 = vmatprep.subr.bf16.mxu0 0
        %1100 = vmatpush1.bf16.msra.mxu0 0
        %1101 = vmatprep.subr.bf16.mxu0 0
        %1102 = vmatpush1.bf16.msra.mxu0 0
        %1103 = vmatprep.subr.bf16.mxu0 0
        %1104 = vmatpush1.bf16.msra.mxu0 0
        %1105 = vmatprep.subr.bf16.mxu0 0
        %1106 = vmatpush1.bf16.msra.mxu0 0
        %1107 = vmatprep.subr.bf16.mxu0 0
        %1108 = vmatpush1.bf16.msra.mxu0 0
        %1109 = vmatprep.subr.bf16.mxu0 0
        %1110 = vmatpush1.bf16.msra.mxu0 0
        %1111 = vmatprep.subr.bf16.mxu0 0
        %1112 = vmatpush1.bf16.msra.mxu0 0
        %1113 = vmatprep.subr.bf16.mxu0 0
        %1114 = vmatpush1.bf16.msra.mxu0 0
        %1115 = vmatprep.subr.bf16.mxu0 0
        %1116 = vmatpush1.bf16.msra.mxu0 0
        %1117 = vmatprep.subr.bf16.mxu0 0
        %1118 = vmatpush1.bf16.msra.mxu0 0
        %1119 = vmatprep.subr.bf16.mxu0 0
        %1120 = vmatpush1.bf16.msra.mxu0 0
        %1121 = vmatprep.subr.bf16.mxu0 0
        %1122 = vmatpush1.bf16.msra.mxu0 0
        %1123 = vmatprep.subr.bf16.mxu0 0
        %1124 = vmatpush1.bf16.msra.mxu0 0
        %1125 = vmatprep.subr.bf16.mxu0 0
        %1126 = vmatpush1.bf16.msra.mxu0 0
        %1127 = vmatprep.mubr.bf16.mxu0 0
        %1128 = vmatmul.mubr.bf16.gmra.mrb[0].mxu0 %v1081
        %v1129 = vpop.f32.mrb[0].mxu0
        %v1130 = vadd.f32 0.0, %v1129
        %v1131 = vpop.f32.mrb[0].mxu0
        %v1132 = vadd.f32 0.0, %v1131
        %v1133 = vpop.f32.mrb[0].mxu0
        %v1134 = vpop.f32.mrb[0].mxu0
        %1135 = vdwg.mxu0
        %1136 = vmatprep.subr.bf16.mxu0 %v1093
        %1137 = vmatpush1.bf16.msra.mxu0 %v1090
        %1138 = vmatprep.subr.bf16.mxu0 0
        %1139 = vmatpush1.bf16.msra.mxu0 0
        %1140 = vmatprep.subr.bf16.mxu0 0
        %1141 = vmatpush1.bf16.msra.mxu0 0
        %1142 = vmatprep.subr.bf16.mxu0 0
        %1143 = vmatpush1.bf16.msra.mxu0 0
        %1144 = vmatprep.subr.bf16.mxu0 0
        %1145 = vmatpush1.bf16.msra.mxu0 0
        %1146 = vmatprep.subr.bf16.mxu0 0
        %1147 = vmatpush1.bf16.msra.mxu0 0
        %1148 = vmatprep.subr.bf16.mxu0 0
        %1149 = vmatpush1.bf16.msra.mxu0 0
        %1150 = vmatprep.subr.bf16.mxu0 0
        %1151 = vmatpush1.bf16.msra.mxu0 0
        %1152 = vmatprep.subr.bf16.mxu0 0
        %1153 = vmatpush1.bf16.msra.mxu0 0
        %1154 = vmatprep.subr.bf16.mxu0 0
        %1155 = vmatpush1.bf16.msra.mxu0 0
        %1156 = vmatprep.subr.bf16.mxu0 0
        %1157 = vmatpush1.bf16.msra.mxu0 0
        %1158 = vmatprep.subr.bf16.mxu0 0
        %1159 = vmatpush1.bf16.msra.mxu0 0
        %1160 = vmatprep.subr.bf16.mxu0 0
        %1161 = vmatpush1.bf16.msra.mxu0 0
        %1162 = vmatprep.subr.bf16.mxu0 0
        %1163 = vmatpush1.bf16.msra.mxu0 0
        %1164 = vmatprep.subr.bf16.mxu0 0
        %1165 = vmatpush1.bf16.msra.mxu0 0
        %1166 = vmatprep.subr.bf16.mxu0 0
        %1167 = vmatpush1.bf16.msra.mxu0 0
        %1168 = vmatprep.mubr.bf16.mxu0 0
        %1169 = vmatmul.mubr.bf16.gmra.mrb[0].mxu0 %v1081
        %v1170 = vpop.f32.mrb[0].mxu0
        %v1171 = vadd.f32 0.0, %v1170
        %v1172 = vpop.f32.mrb[0].mxu0
        %v1173 = vadd.f32 0.0, %v1172
        %v1174 = vpop.f32.mrb[0].mxu0
        %v1175 = vpop.f32.mrb[0].mxu0
        %1176 = vdwg.mxu0
        %v1177 = vadd.f32 %v1007, %v1130
        %v1178 = vadd.f32 %v1008, %v1132
        %v1179 = vadd.f32 %v1009, %v1171
        %v1180 = vadd.f32 %v1010, %v1173
        %v1181 = vlaneseq
        %v1182 = vshrl.u32 %v1181, 7
        %v1183 = vsub.s32 5, %v1182
        %v1184 = vrot.slane %v326, %v1183
        %v1185 = vlaneseq
        %v1186 = vshrl.u32 %v1185, 7
        %v1187 = vsub.s32 5, %v1186
        %v1188 = vrot.slane %v327, %v1187
        %v1189 = vlaneseq
        %v1190 = vshrl.u32 %v1189, 7
        %v1191 = vsub.s32 5, %v1190
        %v1192 = vrot.slane %v328, %v1191
        %v1193 = vlaneseq
        %v1194 = vshrl.u32 %v1193, 7
        %v1195 = vsub.s32 5, %v1194
        %v1196 = vrot.slane %v329, %v1195
        %v1201 = vcombine.low %v1184, %v1188
        %v1202 = vcombine.low %v1192, %v1196
        %1203 = vrot.lane.b32.xlu0 %v1201, 10
        %v1204 = vpop.permute.xlu0 %1203
        %1205 = vrot.lane.b32.xlu0 %v1202, 10
        %v1206 = vpop.permute.xlu0 %1205
        %v1207 = vrot.slane %v1204, 4
        %v1208 = vrot.slane %v1206, 4
        %vm1209 = vcmask 80896
        %v1210 = vsel %vm1209, %v1207, %v1204
        %v1211 = vsel %vm435, %v1207, %v1208
        %v1212 = vsel %vm1209, %v1211, %v1206
        %v1216 = vmul.f32 %v323, %v1210
        %v1217 = vmul.f32 %v324, %v1212
        %v1218 = vmul.f32 %v325, %v1208
        %v1221 = vcombine.high %v1216, %v1216
        %v1222 = vcombine.high %v1217, %v1217
        %v1225 = vpack.c.bf16 %v1216, %v1216
        %v1226 = vpack.c.bf16 %v1221, %v1221
        %v1227 = vpack.c.bf16 %v1217, %v1217
        %v1228 = vpack.c.bf16 %v1222, %v1222
        %v1229 = vpack.c.bf16 %v1218, %v1218
        %1235 = vrot.lane.b32.xlu0 %v1225, 118
        %v1236 = vpop.permute.xlu0 %1235
        %1237 = vrot.lane.b32.xlu0 %v1226, 118
        %v1238 = vpop.permute.xlu0 %1237
        %1239 = vrot.lane.b32.xlu0 %v1227, 118
        %v1240 = vpop.permute.xlu0 %1239
        %1241 = vrot.lane.b32.xlu0 %v1228, 118
        %v1242 = vpop.permute.xlu0 %1241
        %1243 = vrot.lane.b32.xlu0 %v1229, 118
        %v1244 = vpop.permute.xlu0 %1243
        %vm1245 = vcmask 965632
        %v1246 = vsel %vm1245, %v1236, %v1238
        %v1247 = vsel %vm1245, %v1238, %v1240
        %v1248 = vsel %vm1245, %v1240, %v1242
        %v1249 = vsel %vm1245, %v1242, %v1244
        %v1251 = vsel %vm475, %v347, 0
        %v1254 = vsel %vm479, %v1246, 0
        %v1257 = vsel %vm479, %v1247, 0
        %v1260 = vsel %vm479, %v1248, 0
        %v1263 = vsel %vm479, %v1249, 0
        %1265 = vmatprep.subr.bf16.mxu0 %v1257
        %1266 = vmatpush1.bf16.msra.mxu0 %v1254
        %1267 = vmatprep.subr.bf16.mxu0 0
        %1268 = vmatpush1.bf16.msra.mxu0 0
        %1269 = vmatprep.subr.bf16.mxu0 0
        %1270 = vmatpush1.bf16.msra.mxu0 0
        %1271 = vmatprep.subr.bf16.mxu0 0
        %1272 = vmatpush1.bf16.msra.mxu0 0
        %1273 = vmatprep.subr.bf16.mxu0 0
        %1274 = vmatpush1.bf16.msra.mxu0 0
        %1275 = vmatprep.subr.bf16.mxu0 0
        %1276 = vmatpush1.bf16.msra.mxu0 0
        %1277 = vmatprep.subr.bf16.mxu0 0
        %1278 = vmatpush1.bf16.msra.mxu0 0
        %1279 = vmatprep.subr.bf16.mxu0 0
        %1280 = vmatpush1.bf16.msra.mxu0 0
        %1281 = vmatprep.subr.bf16.mxu0 0
        %1282 = vmatpush1.bf16.msra.mxu0 0
        %1283 = vmatprep.subr.bf16.mxu0 0
        %1284 = vmatpush1.bf16.msra.mxu0 0
        %1285 = vmatprep.subr.bf16.mxu0 0
        %1286 = vmatpush1.bf16.msra.mxu0 0
        %1287 = vmatprep.subr.bf16.mxu0 0
        %1288 = vmatpush1.bf16.msra.mxu0 0
        %1289 = vmatprep.subr.bf16.mxu0 0
        %1290 = vmatpush1.bf16.msra.mxu0 0
        %1291 = vmatprep.subr.bf16.mxu0 0
        %1292 = vmatpush1.bf16.msra.mxu0 0
        %1293 = vmatprep.subr.bf16.mxu0 0
        %1294 = vmatpush1.bf16.msra.mxu0 0
        %1295 = vmatprep.subr.bf16.mxu0 0
        %1296 = vmatpush1.bf16.msra.mxu0 0
        %1297 = vmatprep.mubr.bf16.mxu0 0
        %1298 = vmatmul.mubr.bf16.gmra.mrb[0].mxu0 %v1251
        %v1299 = vpop.f32.mrb[0].mxu0
        %v1300 = vadd.f32 0.0, %v1299
        %v1301 = vpop.f32.mrb[0].mxu0
        %v1302 = vadd.f32 0.0, %v1301
        %v1303 = vpop.f32.mrb[0].mxu0
        %v1304 = vpop.f32.mrb[0].mxu0
        %1305 = vdwg.mxu0
        %1306 = vmatprep.subr.bf16.mxu0 %v1263
        %1307 = vmatpush1.bf16.msra.mxu0 %v1260
        %1308 = vmatprep.subr.bf16.mxu0 0
        %1309 = vmatpush1.bf16.msra.mxu0 0
        %1310 = vmatprep.subr.bf16.mxu0 0
        %1311 = vmatpush1.bf16.msra.mxu0 0
        %1312 = vmatprep.subr.bf16.mxu0 0
        %1313 = vmatpush1.bf16.msra.mxu0 0
        %1314 = vmatprep.subr.bf16.mxu0 0
        %1315 = vmatpush1.bf16.msra.mxu0 0
        %1316 = vmatprep.subr.bf16.mxu0 0
        %1317 = vmatpush1.bf16.msra.mxu0 0
        %1318 = vmatprep.subr.bf16.mxu0 0
        %1319 = vmatpush1.bf16.msra.mxu0 0
        %1320 = vmatprep.subr.bf16.mxu0 0
        %1321 = vmatpush1.bf16.msra.mxu0 0
        %1322 = vmatprep.subr.bf16.mxu0 0
        %1323 = vmatpush1.bf16.msra.mxu0 0
        %1324 = vmatprep.subr.bf16.mxu0 0
        %1325 = vmatpush1.bf16.msra.mxu0 0
        %1326 = vmatprep.subr.bf16.mxu0 0
        %1327 = vmatpush1.bf16.msra.mxu0 0
        %1328 = vmatprep.subr.bf16.mxu0 0
        %1329 = vmatpush1.bf16.msra.mxu0 0
        %1330 = vmatprep.subr.bf16.mxu0 0
        %1331 = vmatpush1.bf16.msra.mxu0 0
        %1332 = vmatprep.subr.bf16.mxu0 0
        %1333 = vmatpush1.bf16.msra.mxu0 0
        %1334 = vmatprep.subr.bf16.mxu0 0
        %1335 = vmatpush1.bf16.msra.mxu0 0
        %1336 = vmatprep.subr.bf16.mxu0 0
        %1337 = vmatpush1.bf16.msra.mxu0 0
        %1338 = vmatprep.mubr.bf16.mxu0 0
        %1339 = vmatmul.mubr.bf16.gmra.mrb[0].mxu0 %v1251
        %v1340 = vpop.f32.mrb[0].mxu0
        %v1341 = vadd.f32 0.0, %v1340
        %v1342 = vpop.f32.mrb[0].mxu0
        %v1343 = vadd.f32 0.0, %v1342
        %v1344 = vpop.f32.mrb[0].mxu0
        %v1345 = vpop.f32.mrb[0].mxu0
        %1346 = vdwg.mxu0
        %v1347 = vadd.f32 %v1177, %v1300
        %v1348 = vadd.f32 %v1178, %v1302
        %v1349 = vadd.f32 %v1179, %v1341
        %v1350 = vadd.f32 %v1180, %v1343
        %v1351 = vlaneseq
        %v1352 = vshrl.u32 %v1351, 7
        %v1353 = vsub.s32 6, %v1352
        %v1354 = vrot.slane %v326, %v1353
        %v1355 = vlaneseq
        %v1356 = vshrl.u32 %v1355, 7
        %v1357 = vsub.s32 6, %v1356
        %v1358 = vrot.slane %v327, %v1357
        %v1359 = vlaneseq
        %v1360 = vshrl.u32 %v1359, 7
        %v1361 = vsub.s32 6, %v1360
        %v1362 = vrot.slane %v328, %v1361
        %v1363 = vlaneseq
        %v1364 = vshrl.u32 %v1363, 7
        %v1365 = vsub.s32 6, %v1364
        %v1366 = vrot.slane %v329, %v1365
        %v1371 = vcombine.low %v1354, %v1358
        %v1372 = vcombine.low %v1362, %v1366
        %1373 = vrot.lane.b32.xlu0 %v1371, 16
        %v1374 = vpop.permute.xlu0 %1373
        %1375 = vrot.lane.b32.xlu0 %v1372, 16
        %v1376 = vpop.permute.xlu0 %1375
        %v1377 = vrot.slane %v1374, 4
        %v1378 = vrot.slane %v1376, 4
        %vm1379 = vcmask 130048
        %v1380 = vsel %vm1379, %v1377, %v1374
        %v1381 = vsel %vm435, %v1377, %v1378
        %v1382 = vsel %vm1379, %v1381, %v1376
        %v1386 = vmul.f32 %v323, %v1380
        %v1387 = vmul.f32 %v324, %v1382
        %v1388 = vmul.f32 %v325, %v1378
        %v1391 = vcombine.high %v1386, %v1386
        %v1392 = vcombine.high %v1387, %v1387
        %v1395 = vpack.c.bf16 %v1386, %v1386
        %v1396 = vpack.c.bf16 %v1391, %v1391
        %v1397 = vpack.c.bf16 %v1387, %v1387
        %v1398 = vpack.c.bf16 %v1392, %v1392
        %v1399 = vpack.c.bf16 %v1388, %v1388
        %1405 = vrot.lane.b32.xlu0 %v1395, 112
        %v1406 = vpop.permute.xlu0 %1405
        %1407 = vrot.lane.b32.xlu0 %v1396, 112
        %v1408 = vpop.permute.xlu0 %1407
        %1409 = vrot.lane.b32.xlu0 %v1397, 112
        %v1410 = vpop.permute.xlu0 %1409
        %1411 = vrot.lane.b32.xlu0 %v1398, 112
        %v1412 = vpop.permute.xlu0 %1411
        %1413 = vrot.lane.b32.xlu0 %v1399, 112
        %v1414 = vpop.permute.xlu0 %1413
        %vm1415 = vcmask 916480
        %v1416 = vsel %vm1415, %v1406, %v1408
        %v1417 = vsel %vm1415, %v1408, %v1410
        %v1418 = vsel %vm1415, %v1410, %v1412
        %v1419 = vsel %vm1415, %v1412, %v1414
        %v1421 = vsel %vm475, %v348, 0
        %v1424 = vsel %vm479, %v1416, 0
        %v1427 = vsel %vm479, %v1417, 0
        %v1430 = vsel %vm479, %v1418, 0
        %v1433 = vsel %vm479, %v1419, 0
        %1435 = vmatprep.subr.bf16.mxu0 %v1427
        %1436 = vmatpush1.bf16.msra.mxu0 %v1424
        %1437 = vmatprep.subr.bf16.mxu0 0
        %1438 = vmatpush1.bf16.msra.mxu0 0
        %1439 = vmatprep.subr.bf16.mxu0 0
        %1440 = vmatpush1.bf16.msra.mxu0 0
        %1441 = vmatprep.subr.bf16.mxu0 0
        %1442 = vmatpush1.bf16.msra.mxu0 0
        %1443 = vmatprep.subr.bf16.mxu0 0
        %1444 = vmatpush1.bf16.msra.mxu0 0
        %1445 = vmatprep.subr.bf16.mxu0 0
        %1446 = vmatpush1.bf16.msra.mxu0 0
        %1447 = vmatprep.subr.bf16.mxu0 0
        %1448 = vmatpush1.bf16.msra.mxu0 0
        %1449 = vmatprep.subr.bf16.mxu0 0
        %1450 = vmatpush1.bf16.msra.mxu0 0
        %1451 = vmatprep.subr.bf16.mxu0 0
        %1452 = vmatpush1.bf16.msra.mxu0 0
        %1453 = vmatprep.subr.bf16.mxu0 0
        %1454 = vmatpush1.bf16.msra.mxu0 0
        %1455 = vmatprep.subr.bf16.mxu0 0
        %1456 = vmatpush1.bf16.msra.mxu0 0
        %1457 = vmatprep.subr.bf16.mxu0 0
        %1458 = vmatpush1.bf16.msra.mxu0 0
        %1459 = vmatprep.subr.bf16.mxu0 0
        %1460 = vmatpush1.bf16.msra.mxu0 0
        %1461 = vmatprep.subr.bf16.mxu0 0
        %1462 = vmatpush1.bf16.msra.mxu0 0
        %1463 = vmatprep.subr.bf16.mxu0 0
        %1464 = vmatpush1.bf16.msra.mxu0 0
        %1465 = vmatprep.subr.bf16.mxu0 0
        %1466 = vmatpush1.bf16.msra.mxu0 0
        %1467 = vmatprep.mubr.bf16.mxu0 0
        %1468 = vmatmul.mubr.bf16.gmra.mrb[0].mxu0 %v1421
        %v1469 = vpop.f32.mrb[0].mxu0
        %v1470 = vadd.f32 0.0, %v1469
        %v1471 = vpop.f32.mrb[0].mxu0
        %v1472 = vadd.f32 0.0, %v1471
        %v1473 = vpop.f32.mrb[0].mxu0
        %v1474 = vpop.f32.mrb[0].mxu0
        %1475 = vdwg.mxu0
        %1476 = vmatprep.subr.bf16.mxu0 %v1433
        %1477 = vmatpush1.bf16.msra.mxu0 %v1430
        %1478 = vmatprep.subr.bf16.mxu0 0
        %1479 = vmatpush1.bf16.msra.mxu0 0
        %1480 = vmatprep.subr.bf16.mxu0 0
        %1481 = vmatpush1.bf16.msra.mxu0 0
        %1482 = vmatprep.subr.bf16.mxu0 0
        %1483 = vmatpush1.bf16.msra.mxu0 0
        %1484 = vmatprep.subr.bf16.mxu0 0
        %1485 = vmatpush1.bf16.msra.mxu0 0
        %1486 = vmatprep.subr.bf16.mxu0 0
        %1487 = vmatpush1.bf16.msra.mxu0 0
        %1488 = vmatprep.subr.bf16.mxu0 0
        %1489 = vmatpush1.bf16.msra.mxu0 0
        %1490 = vmatprep.subr.bf16.mxu0 0
        %1491 = vmatpush1.bf16.msra.mxu0 0
        %1492 = vmatprep.subr.bf16.mxu0 0
        %1493 = vmatpush1.bf16.msra.mxu0 0
        %1494 = vmatprep.subr.bf16.mxu0 0
        %1495 = vmatpush1.bf16.msra.mxu0 0
        %1496 = vmatprep.subr.bf16.mxu0 0
        %1497 = vmatpush1.bf16.msra.mxu0 0
        %1498 = vmatprep.subr.bf16.mxu0 0
        %1499 = vmatpush1.bf16.msra.mxu0 0
        %1500 = vmatprep.subr.bf16.mxu0 0
        %1501 = vmatpush1.bf16.msra.mxu0 0
        %1502 = vmatprep.subr.bf16.mxu0 0
        %1503 = vmatpush1.bf16.msra.mxu0 0
        %1504 = vmatprep.subr.bf16.mxu0 0
        %1505 = vmatpush1.bf16.msra.mxu0 0
        %1506 = vmatprep.subr.bf16.mxu0 0
        %1507 = vmatpush1.bf16.msra.mxu0 0
        %1508 = vmatprep.mubr.bf16.mxu0 0
        %1509 = vmatmul.mubr.bf16.gmra.mrb[0].mxu0 %v1421
        %v1510 = vpop.f32.mrb[0].mxu0
        %v1511 = vadd.f32 0.0, %v1510
        %v1512 = vpop.f32.mrb[0].mxu0
        %v1513 = vadd.f32 0.0, %v1512
        %v1514 = vpop.f32.mrb[0].mxu0
        %v1515 = vpop.f32.mrb[0].mxu0
        %1516 = vdwg.mxu0
        %v1517 = vadd.f32 %v1347, %v1470
        %v1518 = vadd.f32 %v1348, %v1472
        %v1519 = vadd.f32 %v1349, %v1511
        %v1520 = vadd.f32 %v1350, %v1513
        %v1521 = vlaneseq
        %v1522 = vshrl.u32 %v1521, 7
        %v1523 = vsub.s32 7, %v1522
        %v1524 = vrot.slane %v326, %v1523
        %v1525 = vlaneseq
        %v1526 = vshrl.u32 %v1525, 7
        %v1527 = vsub.s32 7, %v1526
        %v1528 = vrot.slane %v327, %v1527
        %v1529 = vlaneseq
        %v1530 = vshrl.u32 %v1529, 7
        %v1531 = vsub.s32 7, %v1530
        %v1532 = vrot.slane %v328, %v1531
        %v1533 = vlaneseq
        %v1534 = vshrl.u32 %v1533, 7
        %v1535 = vsub.s32 7, %v1534
        %v1536 = vrot.slane %v329, %v1535
        %v1541 = vcombine.low %v1524, %v1528
        %v1542 = vcombine.low %v1532, %v1536
        %1543 = vrot.lane.b32.xlu0 %v1541, 17
        %v1544 = vpop.permute.xlu0 %1543
        %1545 = vrot.lane.b32.xlu0 %v1542, 17
        %v1546 = vpop.permute.xlu0 %1545
        %v1547 = vrot.slane %v1544, 4
        %v1548 = vrot.slane %v1546, 4
        %vm1549 = vcmask 138240
        %v1550 = vsel %vm1549, %v1547, %v1544
        %v1551 = vsel %vm435, %v1547, %v1548
        %v1552 = vsel %vm1549, %v1551, %v1546
        %v1556 = vmul.f32 %v323, %v1550
        %v1557 = vmul.f32 %v324, %v1552
        %v1558 = vmul.f32 %v325, %v1548
        %v1561 = vcombine.high %v1556, %v1556
        %v1562 = vcombine.high %v1557, %v1557
        %v1565 = vpack.c.bf16 %v1556, %v1556
        %v1566 = vpack.c.bf16 %v1561, %v1561
        %v1567 = vpack.c.bf16 %v1557, %v1557
        %v1568 = vpack.c.bf16 %v1562, %v1562
        %v1569 = vpack.c.bf16 %v1558, %v1558
        %1575 = vrot.lane.b32.xlu0 %v1565, 111
        %v1576 = vpop.permute.xlu0 %1575
        %1577 = vrot.lane.b32.xlu0 %v1566, 111
        %v1578 = vpop.permute.xlu0 %1577
        %1579 = vrot.lane.b32.xlu0 %v1567, 111
        %v1580 = vpop.permute.xlu0 %1579
        %1581 = vrot.lane.b32.xlu0 %v1568, 111
        %v1582 = vpop.permute.xlu0 %1581
        %1583 = vrot.lane.b32.xlu0 %v1569, 111
        %v1584 = vpop.permute.xlu0 %1583
        %vm1585 = vcmask 908288
        %v1586 = vsel %vm1585, %v1576, %v1578
        %v1587 = vsel %vm1585, %v1578, %v1580
        %v1588 = vsel %vm1585, %v1580, %v1582
        %v1589 = vsel %vm1585, %v1582, %v1584
        %v1591 = vsel %vm475, %v349, 0
        %v1594 = vsel %vm479, %v1586, 0
        %v1597 = vsel %vm479, %v1587, 0
        %v1600 = vsel %vm479, %v1588, 0
        %v1603 = vsel %vm479, %v1589, 0
        %1605 = vmatprep.subr.bf16.mxu0 %v1597
        %1606 = vmatpush1.bf16.msra.mxu0 %v1594
        %1607 = vmatprep.subr.bf16.mxu0 0
        %1608 = vmatpush1.bf16.msra.mxu0 0
        %1609 = vmatprep.subr.bf16.mxu0 0
        %1610 = vmatpush1.bf16.msra.mxu0 0
        %1611 = vmatprep.subr.bf16.mxu0 0
        %1612 = vmatpush1.bf16.msra.mxu0 0
        %1613 = vmatprep.subr.bf16.mxu0 0
        %1614 = vmatpush1.bf16.msra.mxu0 0
        %1615 = vmatprep.subr.bf16.mxu0 0
        %1616 = vmatpush1.bf16.msra.mxu0 0
        %1617 = vmatprep.subr.bf16.mxu0 0
        %1618 = vmatpush1.bf16.msra.mxu0 0
        %1619 = vmatprep.subr.bf16.mxu0 0
        %1620 = vmatpush1.bf16.msra.mxu0 0
        %1621 = vmatprep.subr.bf16.mxu0 0
        %1622 = vmatpush1.bf16.msra.mxu0 0
        %1623 = vmatprep.subr.bf16.mxu0 0
        %1624 = vmatpush1.bf16.msra.mxu0 0
        %1625 = vmatprep.subr.bf16.mxu0 0
        %1626 = vmatpush1.bf16.msra.mxu0 0
        %1627 = vmatprep.subr.bf16.mxu0 0
        %1628 = vmatpush1.bf16.msra.mxu0 0
        %1629 = vmatprep.subr.bf16.mxu0 0
        %1630 = vmatpush1.bf16.msra.mxu0 0
        %1631 = vmatprep.subr.bf16.mxu0 0
        %1632 = vmatpush1.bf16.msra.mxu0 0
        %1633 = vmatprep.subr.bf16.mxu0 0
        %1634 = vmatpush1.bf16.msra.mxu0 0
        %1635 = vmatprep.subr.bf16.mxu0 0
        %1636 = vmatpush1.bf16.msra.mxu0 0
        %1637 = vmatprep.mubr.bf16.mxu0 0
        %1638 = vmatmul.mubr.bf16.gmra.mrb[0].mxu0 %v1591
        %v1639 = vpop.f32.mrb[0].mxu0
        %v1640 = vadd.f32 0.0, %v1639
        %v1641 = vpop.f32.mrb[0].mxu0
        %v1642 = vadd.f32 0.0, %v1641
        %v1643 = vpop.f32.mrb[0].mxu0
        %v1644 = vpop.f32.mrb[0].mxu0
        %1645 = vdwg.mxu0
        %1646 = vmatprep.subr.bf16.mxu0 %v1603
        %1647 = vmatpush1.bf16.msra.mxu0 %v1600
        %1648 = vmatprep.subr.bf16.mxu0 0
        %1649 = vmatpush1.bf16.msra.mxu0 0
        %1650 = vmatprep.subr.bf16.mxu0 0
        %1651 = vmatpush1.bf16.msra.mxu0 0
        %1652 = vmatprep.subr.bf16.mxu0 0
        %1653 = vmatpush1.bf16.msra.mxu0 0
        %1654 = vmatprep.subr.bf16.mxu0 0
        %1655 = vmatpush1.bf16.msra.mxu0 0
        %1656 = vmatprep.subr.bf16.mxu0 0
        %1657 = vmatpush1.bf16.msra.mxu0 0
        %1658 = vmatprep.subr.bf16.mxu0 0
        %1659 = vmatpush1.bf16.msra.mxu0 0
        %1660 = vmatprep.subr.bf16.mxu0 0
        %1661 = vmatpush1.bf16.msra.mxu0 0
        %1662 = vmatprep.subr.bf16.mxu0 0
        %1663 = vmatpush1.bf16.msra.mxu0 0
        %1664 = vmatprep.subr.bf16.mxu0 0
        %1665 = vmatpush1.bf16.msra.mxu0 0
        %1666 = vmatprep.subr.bf16.mxu0 0
        %1667 = vmatpush1.bf16.msra.mxu0 0
        %1668 = vmatprep.subr.bf16.mxu0 0
        %1669 = vmatpush1.bf16.msra.mxu0 0
        %1670 = vmatprep.subr.bf16.mxu0 0
        %1671 = vmatpush1.bf16.msra.mxu0 0
        %1672 = vmatprep.subr.bf16.mxu0 0
        %1673 = vmatpush1.bf16.msra.mxu0 0
        %1674 = vmatprep.subr.bf16.mxu0 0
        %1675 = vmatpush1.bf16.msra.mxu0 0
        %1676 = vmatprep.subr.bf16.mxu0 0
        %1677 = vmatpush1.bf16.msra.mxu0 0
        %1678 = vmatprep.mubr.bf16.mxu0 0
        %1679 = vmatmul.mubr.bf16.gmra.mrb[0].mxu0 %v1591
        %v1680 = vpop.f32.mrb[0].mxu0
        %v1681 = vadd.f32 0.0, %v1680
        %v1682 = vpop.f32.mrb[0].mxu0
        %v1683 = vadd.f32 0.0, %v1682
        %v1684 = vpop.f32.mrb[0].mxu0
        %v1685 = vpop.f32.mrb[0].mxu0
        %1686 = vdwg.mxu0
        %v1687 = vadd.f32 %v1517, %v1640
        %v1688 = vadd.f32 %v1518, %v1642
        %v1689 = vadd.f32 %v1519, %v1681
        %v1690 = vadd.f32 %v1520, %v1683
        %v1691 = vlaneseq
        %v1692 = vshrl.u32 %v1691, 7
        %v1693 = vsub.s32 0, %v1692
        %v1694 = vrot.slane %v330, %v1693
        %v1695 = vlaneseq
        %v1696 = vshrl.u32 %v1695, 7
        %v1697 = vsub.s32 0, %v1696
        %v1698 = vrot.slane %v331, %v1697
        %v1699 = vlaneseq
        %v1700 = vshrl.u32 %v1699, 7
        %v1701 = vsub.s32 0, %v1700
        %v1702 = vrot.slane %v332, %v1701
        %v1703 = vlaneseq
        %v1704 = vshrl.u32 %v1703, 7
        %v1705 = vsub.s32 0, %v1704
        %v1706 = vrot.slane %v333, %v1705
        %v1711 = vcombine.low %v1694, %v1698
        %v1712 = vcombine.low %v1702, %v1706
        %1713 = vrot.lane.b32.xlu0 %v1711, 18
        %v1714 = vpop.permute.xlu0 %1713
        %1715 = vrot.lane.b32.xlu0 %v1712, 18
        %v1716 = vpop.permute.xlu0 %1715
        %v1717 = vrot.slane %v1714, 4
        %v1718 = vrot.slane %v1716, 4
        %vm1719 = vcmask 146432
        %v1720 = vsel %vm1719, %v1717, %v1714
        %v1721 = vsel %vm435, %v1717, %v1718
        %v1722 = vsel %vm1719, %v1721, %v1716
        %v1726 = vmul.f32 %v323, %v1720
        %v1727 = vmul.f32 %v324, %v1722
        %v1728 = vmul.f32 %v325, %v1718
        %v1731 = vcombine.high %v1726, %v1726
        %v1732 = vcombine.high %v1727, %v1727
        %v1735 = vpack.c.bf16 %v1726, %v1726
        %v1736 = vpack.c.bf16 %v1731, %v1731
        %v1737 = vpack.c.bf16 %v1727, %v1727
        %v1738 = vpack.c.bf16 %v1732, %v1732
        %v1739 = vpack.c.bf16 %v1728, %v1728
        %1745 = vrot.lane.b32.xlu0 %v1735, 110
        %v1746 = vpop.permute.xlu0 %1745
        %1747 = vrot.lane.b32.xlu0 %v1736, 110
        %v1748 = vpop.permute.xlu0 %1747
        %1749 = vrot.lane.b32.xlu0 %v1737, 110
        %v1750 = vpop.permute.xlu0 %1749
        %1751 = vrot.lane.b32.xlu0 %v1738, 110
        %v1752 = vpop.permute.xlu0 %1751
        %1753 = vrot.lane.b32.xlu0 %v1739, 110
        %v1754 = vpop.permute.xlu0 %1753
        %vm1755 = vcmask 900096
        %v1756 = vsel %vm1755, %v1746, %v1748
        %v1757 = vsel %vm1755, %v1748, %v1750
        %v1758 = vsel %vm1755, %v1750, %v1752
        %v1759 = vsel %vm1755, %v1752, %v1754
        %v1761 = vsel %vm475, %v350, 0
        %v1764 = vsel %vm479, %v1756, 0
        %v1767 = vsel %vm479, %v1757, 0
        %v1770 = vsel %vm479, %v1758, 0
        %v1773 = vsel %vm479, %v1759, 0
        %1775 = vmatprep.subr.bf16.mxu0 %v1767
        %1776 = vmatpush1.bf16.msra.mxu0 %v1764
        %1777 = vmatprep.subr.bf16.mxu0 0
        %1778 = vmatpush1.bf16.msra.mxu0 0
        %1779 = vmatprep.subr.bf16.mxu0 0
        %1780 = vmatpush1.bf16.msra.mxu0 0
        %1781 = vmatprep.subr.bf16.mxu0 0
        %1782 = vmatpush1.bf16.msra.mxu0 0
        %1783 = vmatprep.subr.bf16.mxu0 0
        %1784 = vmatpush1.bf16.msra.mxu0 0
        %1785 = vmatprep.subr.bf16.mxu0 0
        %1786 = vmatpush1.bf16.msra.mxu0 0
        %1787 = vmatprep.subr.bf16.mxu0 0
        %1788 = vmatpush1.bf16.msra.mxu0 0
        %1789 = vmatprep.subr.bf16.mxu0 0
        %1790 = vmatpush1.bf16.msra.mxu0 0
        %1791 = vmatprep.subr.bf16.mxu0 0
        %1792 = vmatpush1.bf16.msra.mxu0 0
        %1793 = vmatprep.subr.bf16.mxu0 0
        %1794 = vmatpush1.bf16.msra.mxu0 0
        %1795 = vmatprep.subr.bf16.mxu0 0
        %1796 = vmatpush1.bf16.msra.mxu0 0
        %1797 = vmatprep.subr.bf16.mxu0 0
        %1798 = vmatpush1.bf16.msra.mxu0 0
        %1799 = vmatprep.subr.bf16.mxu0 0
        %1800 = vmatpush1.bf16.msra.mxu0 0
        %1801 = vmatprep.subr.bf16.mxu0 0
        %1802 = vmatpush1.bf16.msra.mxu0 0
        %1803 = vmatprep.subr.bf16.mxu0 0
        %1804 = vmatpush1.bf16.msra.mxu0 0
        %1805 = vmatprep.subr.bf16.mxu0 0
        %1806 = vmatpush1.bf16.msra.mxu0 0
        %1807 = vmatprep.mubr.bf16.mxu0 0
        %1808 = vmatmul.mubr.bf16.gmra.mrb[0].mxu0 %v1761
        %v1809 = vpop.f32.mrb[0].mxu0
        %v1810 = vadd.f32 0.0, %v1809
        %v1811 = vpop.f32.mrb[0].mxu0
        %v1812 = vadd.f32 0.0, %v1811
        %v1813 = vpop.f32.mrb[0].mxu0
        %v1814 = vpop.f32.mrb[0].mxu0
        %1815 = vdwg.mxu0
        %1816 = vmatprep.subr.bf16.mxu0 %v1773
        %1817 = vmatpush1.bf16.msra.mxu0 %v1770
        %1818 = vmatprep.subr.bf16.mxu0 0
        %1819 = vmatpush1.bf16.msra.mxu0 0
        %1820 = vmatprep.subr.bf16.mxu0 0
        %1821 = vmatpush1.bf16.msra.mxu0 0
        %1822 = vmatprep.subr.bf16.mxu0 0
        %1823 = vmatpush1.bf16.msra.mxu0 0
        %1824 = vmatprep.subr.bf16.mxu0 0
        %1825 = vmatpush1.bf16.msra.mxu0 0
        %1826 = vmatprep.subr.bf16.mxu0 0
        %1827 = vmatpush1.bf16.msra.mxu0 0
        %1828 = vmatprep.subr.bf16.mxu0 0
        %1829 = vmatpush1.bf16.msra.mxu0 0
        %1830 = vmatprep.subr.bf16.mxu0 0
        %1831 = vmatpush1.bf16.msra.mxu0 0
        %1832 = vmatprep.subr.bf16.mxu0 0
        %1833 = vmatpush1.bf16.msra.mxu0 0
        %1834 = vmatprep.subr.bf16.mxu0 0
        %1835 = vmatpush1.bf16.msra.mxu0 0
        %1836 = vmatprep.subr.bf16.mxu0 0
        %1837 = vmatpush1.bf16.msra.mxu0 0
        %1838 = vmatprep.subr.bf16.mxu0 0
        %1839 = vmatpush1.bf16.msra.mxu0 0
        %1840 = vmatprep.subr.bf16.mxu0 0
        %1841 = vmatpush1.bf16.msra.mxu0 0
        %1842 = vmatprep.subr.bf16.mxu0 0
        %1843 = vmatpush1.bf16.msra.mxu0 0
        %1844 = vmatprep.subr.bf16.mxu0 0
        %1845 = vmatpush1.bf16.msra.mxu0 0
        %1846 = vmatprep.subr.bf16.mxu0 0
        %1847 = vmatpush1.bf16.msra.mxu0 0
        %1848 = vmatprep.mubr.bf16.mxu0 0
        %1849 = vmatmul.mubr.bf16.gmra.mrb[0].mxu0 %v1761
        %v1850 = vpop.f32.mrb[0].mxu0
        %v1851 = vadd.f32 0.0, %v1850
        %v1852 = vpop.f32.mrb[0].mxu0
        %v1853 = vadd.f32 0.0, %v1852
        %v1854 = vpop.f32.mrb[0].mxu0
        %v1855 = vpop.f32.mrb[0].mxu0
        %1856 = vdwg.mxu0
        %v1857 = vadd.f32 %v1687, %v1810
        %v1858 = vadd.f32 %v1688, %v1812
        %v1859 = vadd.f32 %v1689, %v1851
        %v1860 = vadd.f32 %v1690, %v1853
        %v1861 = vlaneseq
        %v1862 = vshrl.u32 %v1861, 7
        %v1863 = vsub.s32 1, %v1862
        %v1864 = vrot.slane %v330, %v1863
        %v1865 = vlaneseq
        %v1866 = vshrl.u32 %v1865, 7
        %v1867 = vsub.s32 1, %v1866
        %v1868 = vrot.slane %v331, %v1867
        %v1869 = vlaneseq
        %v1870 = vshrl.u32 %v1869, 7
        %v1871 = vsub.s32 1, %v1870
        %v1872 = vrot.slane %v332, %v1871
        %v1873 = vlaneseq
        %v1874 = vshrl.u32 %v1873, 7
        %v1875 = vsub.s32 1, %v1874
        %v1876 = vrot.slane %v333, %v1875
        %v1881 = vcombine.low %v1864, %v1868
        %v1882 = vcombine.low %v1872, %v1876
        %1883 = vrot.lane.b32.xlu0 %v1881, 64
        %v1884 = vpop.permute.xlu0 %1883
        %1885 = vrot.lane.b32.xlu0 %v1882, 64
        %v1886 = vpop.permute.xlu0 %1885
        %v1887 = vrot.slane %v1884, 4
        %v1888 = vrot.slane %v1886, 4
        %vm1889 = vcmask 523264
        %v1890 = vsel %vm1889, %v1887, %v1884
        %v1891 = vsel %vm435, %v1887, %v1888
        %v1892 = vsel %vm1889, %v1891, %v1886
        %v1896 = vmul.f32 %v323, %v1890
        %v1897 = vmul.f32 %v324, %v1892
        %v1898 = vmul.f32 %v325, %v1888
        %v1901 = vcombine.high %v1896, %v1896
        %v1902 = vcombine.high %v1897, %v1897
        %v1905 = vpack.c.bf16 %v1896, %v1896
        %v1906 = vpack.c.bf16 %v1901, %v1901
        %v1907 = vpack.c.bf16 %v1897, %v1897
        %v1908 = vpack.c.bf16 %v1902, %v1902
        %v1909 = vpack.c.bf16 %v1898, %v1898
        %1915 = vrot.lane.b32.xlu0 %v1905, 64
        %v1916 = vpop.permute.xlu0 %1915
        %1917 = vrot.lane.b32.xlu0 %v1906, 64
        %v1918 = vpop.permute.xlu0 %1917
        %1919 = vrot.lane.b32.xlu0 %v1907, 64
        %v1920 = vpop.permute.xlu0 %1919
        %1921 = vrot.lane.b32.xlu0 %v1908, 64
        %v1922 = vpop.permute.xlu0 %1921
        %1923 = vrot.lane.b32.xlu0 %v1909, 64
        %v1924 = vpop.permute.xlu0 %1923
        %vm1925 = vcmask 523264
        %v1926 = vsel %vm1925, %v1916, %v1918
        %v1927 = vsel %vm1925, %v1918, %v1920
        %v1928 = vsel %vm1925, %v1920, %v1922
        %v1929 = vsel %vm1925, %v1922, %v1924
        %v1931 = vsel %vm475, %v351, 0
        %v1934 = vsel %vm479, %v1926, 0
        %v1937 = vsel %vm479, %v1927, 0
        %v1940 = vsel %vm479, %v1928, 0
        %v1943 = vsel %vm479, %v1929, 0
        %1945 = vmatprep.subr.bf16.mxu0 %v1937
        %1946 = vmatpush1.bf16.msra.mxu0 %v1934
        %1947 = vmatprep.subr.bf16.mxu0 0
        %1948 = vmatpush1.bf16.msra.mxu0 0
        %1949 = vmatprep.subr.bf16.mxu0 0
        %1950 = vmatpush1.bf16.msra.mxu0 0
        %1951 = vmatprep.subr.bf16.mxu0 0
        %1952 = vmatpush1.bf16.msra.mxu0 0
        %1953 = vmatprep.subr.bf16.mxu0 0
        %1954 = vmatpush1.bf16.msra.mxu0 0
        %1955 = vmatprep.subr.bf16.mxu0 0
        %1956 = vmatpush1.bf16.msra.mxu0 0
        %1957 = vmatprep.subr.bf16.mxu0 0
        %1958 = vmatpush1.bf16.msra.mxu0 0
        %1959 = vmatprep.subr.bf16.mxu0 0
        %1960 = vmatpush1.bf16.msra.mxu0 0
        %1961 = vmatprep.subr.bf16.mxu0 0
        %1962 = vmatpush1.bf16.msra.mxu0 0
        %1963 = vmatprep.subr.bf16.mxu0 0
        %1964 = vmatpush1.bf16.msra.mxu0 0
        %1965 = vmatprep.subr.bf16.mxu0 0
        %1966 = vmatpush1.bf16.msra.mxu0 0
        %1967 = vmatprep.subr.bf16.mxu0 0
        %1968 = vmatpush1.bf16.msra.mxu0 0
        %1969 = vmatprep.subr.bf16.mxu0 0
        %1970 = vmatpush1.bf16.msra.mxu0 0
        %1971 = vmatprep.subr.bf16.mxu0 0
        %1972 = vmatpush1.bf16.msra.mxu0 0
        %1973 = vmatprep.subr.bf16.mxu0 0
        %1974 = vmatpush1.bf16.msra.mxu0 0
        %1975 = vmatprep.subr.bf16.mxu0 0
        %1976 = vmatpush1.bf16.msra.mxu0 0
        %1977 = vmatprep.mubr.bf16.mxu0 0
        %1978 = vmatmul.mubr.bf16.gmra.mrb[0].mxu0 %v1931
        %v1979 = vpop.f32.mrb[0].mxu0
        %v1980 = vadd.f32 0.0, %v1979
        %v1981 = vpop.f32.mrb[0].mxu0
        %v1982 = vadd.f32 0.0, %v1981
        %v1983 = vpop.f32.mrb[0].mxu0
        %v1984 = vpop.f32.mrb[0].mxu0
        %1985 = vdwg.mxu0
        %1986 = vmatprep.subr.bf16.mxu0 %v1943
        %1987 = vmatpush1.bf16.msra.mxu0 %v1940
        %1988 = vmatprep.subr.bf16.mxu0 0
        %1989 = vmatpush1.bf16.msra.mxu0 0
        %1990 = vmatprep.subr.bf16.mxu0 0
        %1991 = vmatpush1.bf16.msra.mxu0 0
        %1992 = vmatprep.subr.bf16.mxu0 0
        %1993 = vmatpush1.bf16.msra.mxu0 0
        %1994 = vmatprep.subr.bf16.mxu0 0
        %1995 = vmatpush1.bf16.msra.mxu0 0
        %1996 = vmatprep.subr.bf16.mxu0 0
        %1997 = vmatpush1.bf16.msra.mxu0 0
        %1998 = vmatprep.subr.bf16.mxu0 0
        %1999 = vmatpush1.bf16.msra.mxu0 0
        %2000 = vmatprep.subr.bf16.mxu0 0
        %2001 = vmatpush1.bf16.msra.mxu0 0
        %2002 = vmatprep.subr.bf16.mxu0 0
        %2003 = vmatpush1.bf16.msra.mxu0 0
        %2004 = vmatprep.subr.bf16.mxu0 0
        %2005 = vmatpush1.bf16.msra.mxu0 0
        %2006 = vmatprep.subr.bf16.mxu0 0
        %2007 = vmatpush1.bf16.msra.mxu0 0
        %2008 = vmatprep.subr.bf16.mxu0 0
        %2009 = vmatpush1.bf16.msra.mxu0 0
        %2010 = vmatprep.subr.bf16.mxu0 0
        %2011 = vmatpush1.bf16.msra.mxu0 0
        %2012 = vmatprep.subr.bf16.mxu0 0
        %2013 = vmatpush1.bf16.msra.mxu0 0
        %2014 = vmatprep.subr.bf16.mxu0 0
        %2015 = vmatpush1.bf16.msra.mxu0 0
        %2016 = vmatprep.subr.bf16.mxu0 0
        %2017 = vmatpush1.bf16.msra.mxu0 0
        %2018 = vmatprep.mubr.bf16.mxu0 0
        %2019 = vmatmul.mubr.bf16.gmra.mrb[0].mxu0 %v1931
        %v2020 = vpop.f32.mrb[0].mxu0
        %v2021 = vadd.f32 0.0, %v2020
        %v2022 = vpop.f32.mrb[0].mxu0
        %v2023 = vadd.f32 0.0, %v2022
        %v2024 = vpop.f32.mrb[0].mxu0
        %v2025 = vpop.f32.mrb[0].mxu0
        %2026 = vdwg.mxu0
        %v2027 = vadd.f32 %v1857, %v1980
        %v2028 = vadd.f32 %v1858, %v1982
        %v2029 = vadd.f32 %v1859, %v2021
        %v2030 = vadd.f32 %v1860, %v2023
        %v2031 = vlaneseq
        %v2032 = vshrl.u32 %v2031, 7
        %v2033 = vsub.s32 2, %v2032
        %v2034 = vrot.slane %v330, %v2033
        %v2035 = vlaneseq
        %v2036 = vshrl.u32 %v2035, 7
        %v2037 = vsub.s32 2, %v2036
        %v2038 = vrot.slane %v331, %v2037
        %v2039 = vlaneseq
        %v2040 = vshrl.u32 %v2039, 7
        %v2041 = vsub.s32 2, %v2040
        %v2042 = vrot.slane %v332, %v2041
        %v2043 = vlaneseq
        %v2044 = vshrl.u32 %v2043, 7
        %v2045 = vsub.s32 2, %v2044
        %v2046 = vrot.slane %v333, %v2045
        %v2051 = vcombine.low %v2034, %v2038
        %v2052 = vcombine.low %v2042, %v2046
        %2053 = vrot.lane.b32.xlu0 %v2051, 65
        %v2054 = vpop.permute.xlu0 %2053
        %2055 = vrot.lane.b32.xlu0 %v2052, 65
        %v2056 = vpop.permute.xlu0 %2055
        %v2057 = vrot.slane %v2054, 4
        %v2058 = vrot.slane %v2056, 4
        %vm2059 = vcmask 531456
        %v2060 = vsel %vm2059, %v2057, %v2054
        %v2061 = vsel %vm435, %v2057, %v2058
        %v2062 = vsel %vm2059, %v2061, %v2056
        %v2066 = vmul.f32 %v323, %v2060
        %v2067 = vmul.f32 %v324, %v2062
        %v2068 = vmul.f32 %v325, %v2058
        %v2071 = vcombine.high %v2066, %v2066
        %v2072 = vcombine.high %v2067, %v2067
        %v2075 = vpack.c.bf16 %v2066, %v2066
        %v2076 = vpack.c.bf16 %v2071, %v2071
        %v2077 = vpack.c.bf16 %v2067, %v2067
        %v2078 = vpack.c.bf16 %v2072, %v2072
        %v2079 = vpack.c.bf16 %v2068, %v2068
        %2085 = vrot.lane.b32.xlu0 %v2075, 63
        %v2086 = vpop.permute.xlu0 %2085
        %2087 = vrot.lane.b32.xlu0 %v2076, 63
        %v2088 = vpop.permute.xlu0 %2087
        %2089 = vrot.lane.b32.xlu0 %v2077, 63
        %v2090 = vpop.permute.xlu0 %2089
        %2091 = vrot.lane.b32.xlu0 %v2078, 63
        %v2092 = vpop.permute.xlu0 %2091
        %2093 = vrot.lane.b32.xlu0 %v2079, 63
        %v2094 = vpop.permute.xlu0 %2093
        %vm2095 = vcmask 515072
        %v2096 = vsel %vm2095, %v2086, %v2088
        %v2097 = vsel %vm2095, %v2088, %v2090
        %v2098 = vsel %vm2095, %v2090, %v2092
        %v2099 = vsel %vm2095, %v2092, %v2094
        %v2101 = vsel %vm475, %v352, 0
        %v2104 = vsel %vm479, %v2096, 0
        %v2107 = vsel %vm479, %v2097, 0
        %v2110 = vsel %vm479, %v2098, 0
        %v2113 = vsel %vm479, %v2099, 0
        %2115 = vmatprep.subr.bf16.mxu0 %v2107
        %2116 = vmatpush1.bf16.msra.mxu0 %v2104
        %2117 = vmatprep.subr.bf16.mxu0 0
        %2118 = vmatpush1.bf16.msra.mxu0 0
        %2119 = vmatprep.subr.bf16.mxu0 0
        %2120 = vmatpush1.bf16.msra.mxu0 0
        %2121 = vmatprep.subr.bf16.mxu0 0
        %2122 = vmatpush1.bf16.msra.mxu0 0
        %2123 = vmatprep.subr.bf16.mxu0 0
        %2124 = vmatpush1.bf16.msra.mxu0 0
        %2125 = vmatprep.subr.bf16.mxu0 0
        %2126 = vmatpush1.bf16.msra.mxu0 0
        %2127 = vmatprep.subr.bf16.mxu0 0
        %2128 = vmatpush1.bf16.msra.mxu0 0
        %2129 = vmatprep.subr.bf16.mxu0 0
        %2130 = vmatpush1.bf16.msra.mxu0 0
        %2131 = vmatprep.subr.bf16.mxu0 0
        %2132 = vmatpush1.bf16.msra.mxu0 0
        %2133 = vmatprep.subr.bf16.mxu0 0
        %2134 = vmatpush1.bf16.msra.mxu0 0
        %2135 = vmatprep.subr.bf16.mxu0 0
        %2136 = vmatpush1.bf16.msra.mxu0 0
        %2137 = vmatprep.subr.bf16.mxu0 0
        %2138 = vmatpush1.bf16.msra.mxu0 0
        %2139 = vmatprep.subr.bf16.mxu0 0
        %2140 = vmatpush1.bf16.msra.mxu0 0
        %2141 = vmatprep.subr.bf16.mxu0 0
        %2142 = vmatpush1.bf16.msra.mxu0 0
        %2143 = vmatprep.subr.bf16.mxu0 0
        %2144 = vmatpush1.bf16.msra.mxu0 0
        %2145 = vmatprep.subr.bf16.mxu0 0
        %2146 = vmatpush1.bf16.msra.mxu0 0
        %2147 = vmatprep.mubr.bf16.mxu0 0
        %2148 = vmatmul.mubr.bf16.gmra.mrb[0].mxu0 %v2101
        %v2149 = vpop.f32.mrb[0].mxu0
        %v2150 = vadd.f32 0.0, %v2149
        %v2151 = vpop.f32.mrb[0].mxu0
        %v2152 = vadd.f32 0.0, %v2151
        %v2153 = vpop.f32.mrb[0].mxu0
        %v2154 = vpop.f32.mrb[0].mxu0
        %2155 = vdwg.mxu0
        %2156 = vmatprep.subr.bf16.mxu0 %v2113
        %2157 = vmatpush1.bf16.msra.mxu0 %v2110
        %2158 = vmatprep.subr.bf16.mxu0 0
        %2159 = vmatpush1.bf16.msra.mxu0 0
        %2160 = vmatprep.subr.bf16.mxu0 0
        %2161 = vmatpush1.bf16.msra.mxu0 0
        %2162 = vmatprep.subr.bf16.mxu0 0
        %2163 = vmatpush1.bf16.msra.mxu0 0
        %2164 = vmatprep.subr.bf16.mxu0 0
        %2165 = vmatpush1.bf16.msra.mxu0 0
        %2166 = vmatprep.subr.bf16.mxu0 0
        %2167 = vmatpush1.bf16.msra.mxu0 0
        %2168 = vmatprep.subr.bf16.mxu0 0
        %2169 = vmatpush1.bf16.msra.mxu0 0
        %2170 = vmatprep.subr.bf16.mxu0 0
        %2171 = vmatpush1.bf16.msra.mxu0 0
        %2172 = vmatprep.subr.bf16.mxu0 0
        %2173 = vmatpush1.bf16.msra.mxu0 0
        %2174 = vmatprep.subr.bf16.mxu0 0
        %2175 = vmatpush1.bf16.msra.mxu0 0
        %2176 = vmatprep.subr.bf16.mxu0 0
        %2177 = vmatpush1.bf16.msra.mxu0 0
        %2178 = vmatprep.subr.bf16.mxu0 0
        %2179 = vmatpush1.bf16.msra.mxu0 0
        %2180 = vmatprep.subr.bf16.mxu0 0
        %2181 = vmatpush1.bf16.msra.mxu0 0
        %2182 = vmatprep.subr.bf16.mxu0 0
        %2183 = vmatpush1.bf16.msra.mxu0 0
        %2184 = vmatprep.subr.bf16.mxu0 0
        %2185 = vmatpush1.bf16.msra.mxu0 0
        %2186 = vmatprep.subr.bf16.mxu0 0
        %2187 = vmatpush1.bf16.msra.mxu0 0
        %2188 = vmatprep.mubr.bf16.mxu0 0
        %2189 = vmatmul.mubr.bf16.gmra.mrb[0].mxu0 %v2101
        %v2190 = vpop.f32.mrb[0].mxu0
        %v2191 = vadd.f32 0.0, %v2190
        %v2192 = vpop.f32.mrb[0].mxu0
        %v2193 = vadd.f32 0.0, %v2192
        %v2194 = vpop.f32.mrb[0].mxu0
        %v2195 = vpop.f32.mrb[0].mxu0
        %2196 = vdwg.mxu0
        %v2197 = vadd.f32 %v2027, %v2150
        %v2198 = vadd.f32 %v2028, %v2152
        %v2199 = vadd.f32 %v2029, %v2191
        %v2200 = vadd.f32 %v2030, %v2193
        %v2201 = vlaneseq
        %v2202 = vshrl.u32 %v2201, 7
        %v2203 = vsub.s32 3, %v2202
        %v2204 = vrot.slane %v330, %v2203
        %v2205 = vlaneseq
        %v2206 = vshrl.u32 %v2205, 7
        %v2207 = vsub.s32 3, %v2206
        %v2208 = vrot.slane %v331, %v2207
        %v2209 = vlaneseq
        %v2210 = vshrl.u32 %v2209, 7
        %v2211 = vsub.s32 3, %v2210
        %v2212 = vrot.slane %v332, %v2211
        %v2213 = vlaneseq
        %v2214 = vshrl.u32 %v2213, 7
        %v2215 = vsub.s32 3, %v2214
        %v2216 = vrot.slane %v333, %v2215
        %v2221 = vcombine.low %v2204, %v2208
        %v2222 = vcombine.low %v2212, %v2216
        %2223 = vrot.lane.b32.xlu0 %v2221, 66
        %v2224 = vpop.permute.xlu0 %2223
        %2225 = vrot.lane.b32.xlu0 %v2222, 66
        %v2226 = vpop.permute.xlu0 %2225
        %v2227 = vrot.slane %v2224, 4
        %v2228 = vrot.slane %v2226, 4
        %vm2229 = vcmask 539648
        %v2230 = vsel %vm2229, %v2227, %v2224
        %v2231 = vsel %vm435, %v2227, %v2228
        %v2232 = vsel %vm2229, %v2231, %v2226
        %v2236 = vmul.f32 %v323, %v2230
        %v2237 = vmul.f32 %v324, %v2232
        %v2238 = vmul.f32 %v325, %v2228
        %v2241 = vcombine.high %v2236, %v2236
        %v2242 = vcombine.high %v2237, %v2237
        %v2245 = vpack.c.bf16 %v2236, %v2236
        %v2246 = vpack.c.bf16 %v2241, %v2241
        %v2247 = vpack.c.bf16 %v2237, %v2237
        %v2248 = vpack.c.bf16 %v2242, %v2242
        %v2249 = vpack.c.bf16 %v2238, %v2238
        %2255 = vrot.lane.b32.xlu0 %v2245, 62
        %v2256 = vpop.permute.xlu0 %2255
        %2257 = vrot.lane.b32.xlu0 %v2246, 62
        %v2258 = vpop.permute.xlu0 %2257
        %2259 = vrot.lane.b32.xlu0 %v2247, 62
        %v2260 = vpop.permute.xlu0 %2259
        %2261 = vrot.lane.b32.xlu0 %v2248, 62
        %v2262 = vpop.permute.xlu0 %2261
        %2263 = vrot.lane.b32.xlu0 %v2249, 62
        %v2264 = vpop.permute.xlu0 %2263
        %vm2265 = vcmask 506880
        %v2266 = vsel %vm2265, %v2256, %v2258
        %v2267 = vsel %vm2265, %v2258, %v2260
        %v2268 = vsel %vm2265, %v2260, %v2262
        %v2269 = vsel %vm2265, %v2262, %v2264
        %v2271 = vsel %vm475, %v353, 0
        %v2274 = vsel %vm479, %v2266, 0
        %v2277 = vsel %vm479, %v2267, 0
        %v2280 = vsel %vm479, %v2268, 0
        %v2283 = vsel %vm479, %v2269, 0
        %2285 = vmatprep.subr.bf16.mxu0 %v2277
        %2286 = vmatpush1.bf16.msra.mxu0 %v2274
        %2287 = vmatprep.subr.bf16.mxu0 0
        %2288 = vmatpush1.bf16.msra.mxu0 0
        %2289 = vmatprep.subr.bf16.mxu0 0
        %2290 = vmatpush1.bf16.msra.mxu0 0
        %2291 = vmatprep.subr.bf16.mxu0 0
        %2292 = vmatpush1.bf16.msra.mxu0 0
        %2293 = vmatprep.subr.bf16.mxu0 0
        %2294 = vmatpush1.bf16.msra.mxu0 0
        %2295 = vmatprep.subr.bf16.mxu0 0
        %2296 = vmatpush1.bf16.msra.mxu0 0
        %2297 = vmatprep.subr.bf16.mxu0 0
        %2298 = vmatpush1.bf16.msra.mxu0 0
        %2299 = vmatprep.subr.bf16.mxu0 0
        %2300 = vmatpush1.bf16.msra.mxu0 0
        %2301 = vmatprep.subr.bf16.mxu0 0
        %2302 = vmatpush1.bf16.msra.mxu0 0
        %2303 = vmatprep.subr.bf16.mxu0 0
        %2304 = vmatpush1.bf16.msra.mxu0 0
        %2305 = vmatprep.subr.bf16.mxu0 0
        %2306 = vmatpush1.bf16.msra.mxu0 0
        %2307 = vmatprep.subr.bf16.mxu0 0
        %2308 = vmatpush1.bf16.msra.mxu0 0
        %2309 = vmatprep.subr.bf16.mxu0 0
        %2310 = vmatpush1.bf16.msra.mxu0 0
        %2311 = vmatprep.subr.bf16.mxu0 0
        %2312 = vmatpush1.bf16.msra.mxu0 0
        %2313 = vmatprep.subr.bf16.mxu0 0
        %2314 = vmatpush1.bf16.msra.mxu0 0
        %2315 = vmatprep.subr.bf16.mxu0 0
        %2316 = vmatpush1.bf16.msra.mxu0 0
        %2317 = vmatprep.mubr.bf16.mxu0 0
        %2318 = vmatmul.mubr.bf16.gmra.mrb[0].mxu0 %v2271
        %v2319 = vpop.f32.mrb[0].mxu0
        %v2320 = vadd.f32 0.0, %v2319
        %v2321 = vpop.f32.mrb[0].mxu0
        %v2322 = vadd.f32 0.0, %v2321
        %v2323 = vpop.f32.mrb[0].mxu0
        %v2324 = vpop.f32.mrb[0].mxu0
        %2325 = vdwg.mxu0
        %2326 = vmatprep.subr.bf16.mxu0 %v2283
        %2327 = vmatpush1.bf16.msra.mxu0 %v2280
        %2328 = vmatprep.subr.bf16.mxu0 0
        %2329 = vmatpush1.bf16.msra.mxu0 0
        %2330 = vmatprep.subr.bf16.mxu0 0
        %2331 = vmatpush1.bf16.msra.mxu0 0
        %2332 = vmatprep.subr.bf16.mxu0 0
        %2333 = vmatpush1.bf16.msra.mxu0 0
        %2334 = vmatprep.subr.bf16.mxu0 0
        %2335 = vmatpush1.bf16.msra.mxu0 0
        %2336 = vmatprep.subr.bf16.mxu0 0
        %2337 = vmatpush1.bf16.msra.mxu0 0
        %2338 = vmatprep.subr.bf16.mxu0 0
        %2339 = vmatpush1.bf16.msra.mxu0 0
        %2340 = vmatprep.subr.bf16.mxu0 0
        %2341 = vmatpush1.bf16.msra.mxu0 0
        %2342 = vmatprep.subr.bf16.mxu0 0
        %2343 = vmatpush1.bf16.msra.mxu0 0
        %2344 = vmatprep.subr.bf16.mxu0 0
        %2345 = vmatpush1.bf16.msra.mxu0 0
        %2346 = vmatprep.subr.bf16.mxu0 0
        %2347 = vmatpush1.bf16.msra.mxu0 0
        %2348 = vmatprep.subr.bf16.mxu0 0
        %2349 = vmatpush1.bf16.msra.mxu0 0
        %2350 = vmatprep.subr.bf16.mxu0 0
        %2351 = vmatpush1.bf16.msra.mxu0 0
        %2352 = vmatprep.subr.bf16.mxu0 0
        %2353 = vmatpush1.bf16.msra.mxu0 0
        %2354 = vmatprep.subr.bf16.mxu0 0
        %2355 = vmatpush1.bf16.msra.mxu0 0
        %2356 = vmatprep.subr.bf16.mxu0 0
        %2357 = vmatpush1.bf16.msra.mxu0 0
        %2358 = vmatprep.mubr.bf16.mxu0 0
        %2359 = vmatmul.mubr.bf16.gmra.mrb[0].mxu0 %v2271
        %v2360 = vpop.f32.mrb[0].mxu0
        %v2361 = vadd.f32 0.0, %v2360
        %v2362 = vpop.f32.mrb[0].mxu0
        %v2363 = vadd.f32 0.0, %v2362
        %v2364 = vpop.f32.mrb[0].mxu0
        %v2365 = vpop.f32.mrb[0].mxu0
        %2366 = vdwg.mxu0
        %v2367 = vadd.f32 %v2197, %v2320
        %v2368 = vadd.f32 %v2198, %v2322
        %v2369 = vadd.f32 %v2199, %v2361
        %v2370 = vadd.f32 %v2200, %v2363
        %v2371 = vlaneseq
        %v2372 = vshrl.u32 %v2371, 7
        %v2373 = vsub.s32 4, %v2372
        %v2374 = vrot.slane %v330, %v2373
        %v2375 = vlaneseq
        %v2376 = vshrl.u32 %v2375, 7
        %v2377 = vsub.s32 4, %v2376
        %v2378 = vrot.slane %v331, %v2377
        %v2379 = vlaneseq
        %v2380 = vshrl.u32 %v2379, 7
        %v2381 = vsub.s32 4, %v2380
        %v2382 = vrot.slane %v332, %v2381
        %v2383 = vlaneseq
        %v2384 = vshrl.u32 %v2383, 7
        %v2385 = vsub.s32 4, %v2384
        %v2386 = vrot.slane %v333, %v2385
        %v2391 = vcombine.low %v2374, %v2378
        %v2392 = vcombine.low %v2382, %v2386
        %2393 = vrot.lane.b32.xlu0 %v2391, 72
        %v2394 = vpop.permute.xlu0 %2393
        %2395 = vrot.lane.b32.xlu0 %v2392, 72
        %v2396 = vpop.permute.xlu0 %2395
        %v2397 = vrot.slane %v2394, 4
        %v2398 = vrot.slane %v2396, 4
        %vm2399 = vcmask 588800
        %v2400 = vsel %vm2399, %v2397, %v2394
        %v2401 = vsel %vm435, %v2397, %v2398
        %v2402 = vsel %vm2399, %v2401, %v2396
        %v2406 = vmul.f32 %v323, %v2400
        %v2407 = vmul.f32 %v324, %v2402
        %v2408 = vmul.f32 %v325, %v2398
        %v2411 = vcombine.high %v2406, %v2406
        %v2412 = vcombine.high %v2407, %v2407
        %v2415 = vpack.c.bf16 %v2406, %v2406
        %v2416 = vpack.c.bf16 %v2411, %v2411
        %v2417 = vpack.c.bf16 %v2407, %v2407
        %v2418 = vpack.c.bf16 %v2412, %v2412
        %v2419 = vpack.c.bf16 %v2408, %v2408
        %2425 = vrot.lane.b32.xlu0 %v2415, 56
        %v2426 = vpop.permute.xlu0 %2425
        %2427 = vrot.lane.b32.xlu0 %v2416, 56
        %v2428 = vpop.permute.xlu0 %2427
        %2429 = vrot.lane.b32.xlu0 %v2417, 56
        %v2430 = vpop.permute.xlu0 %2429
        %2431 = vrot.lane.b32.xlu0 %v2418, 56
        %v2432 = vpop.permute.xlu0 %2431
        %2433 = vrot.lane.b32.xlu0 %v2419, 56
        %v2434 = vpop.permute.xlu0 %2433
        %vm2435 = vcmask 457728
        %v2436 = vsel %vm2435, %v2426, %v2428
        %v2437 = vsel %vm2435, %v2428, %v2430
        %v2438 = vsel %vm2435, %v2430, %v2432
        %v2439 = vsel %vm2435, %v2432, %v2434
        %v2441 = vsel %vm475, %v354, 0
        %v2444 = vsel %vm479, %v2436, 0
        %v2447 = vsel %vm479, %v2437, 0
        %v2450 = vsel %vm479, %v2438, 0
        %v2453 = vsel %vm479, %v2439, 0
        %2455 = vmatprep.subr.bf16.mxu0 %v2447
        %2456 = vmatpush1.bf16.msra.mxu0 %v2444
        %2457 = vmatprep.subr.bf16.mxu0 0
        %2458 = vmatpush1.bf16.msra.mxu0 0
        %2459 = vmatprep.subr.bf16.mxu0 0
        %2460 = vmatpush1.bf16.msra.mxu0 0
        %2461 = vmatprep.subr.bf16.mxu0 0
        %2462 = vmatpush1.bf16.msra.mxu0 0
        %2463 = vmatprep.subr.bf16.mxu0 0
        %2464 = vmatpush1.bf16.msra.mxu0 0
        %2465 = vmatprep.subr.bf16.mxu0 0
        %2466 = vmatpush1.bf16.msra.mxu0 0
        %2467 = vmatprep.subr.bf16.mxu0 0
        %2468 = vmatpush1.bf16.msra.mxu0 0
        %2469 = vmatprep.subr.bf16.mxu0 0
        %2470 = vmatpush1.bf16.msra.mxu0 0
        %2471 = vmatprep.subr.bf16.mxu0 0
        %2472 = vmatpush1.bf16.msra.mxu0 0
        %2473 = vmatprep.subr.bf16.mxu0 0
        %2474 = vmatpush1.bf16.msra.mxu0 0
        %2475 = vmatprep.subr.bf16.mxu0 0
        %2476 = vmatpush1.bf16.msra.mxu0 0
        %2477 = vmatprep.subr.bf16.mxu0 0
        %2478 = vmatpush1.bf16.msra.mxu0 0
        %2479 = vmatprep.subr.bf16.mxu0 0
        %2480 = vmatpush1.bf16.msra.mxu0 0
        %2481 = vmatprep.subr.bf16.mxu0 0
        %2482 = vmatpush1.bf16.msra.mxu0 0
        %2483 = vmatprep.subr.bf16.mxu0 0
        %2484 = vmatpush1.bf16.msra.mxu0 0
        %2485 = vmatprep.subr.bf16.mxu0 0
        %2486 = vmatpush1.bf16.msra.mxu0 0
        %2487 = vmatprep.mubr.bf16.mxu0 0
        %2488 = vmatmul.mubr.bf16.gmra.mrb[0].mxu0 %v2441
        %v2489 = vpop.f32.mrb[0].mxu0
        %v2490 = vadd.f32 0.0, %v2489
        %v2491 = vpop.f32.mrb[0].mxu0
        %v2492 = vadd.f32 0.0, %v2491
        %v2493 = vpop.f32.mrb[0].mxu0
        %v2494 = vpop.f32.mrb[0].mxu0
        %2495 = vdwg.mxu0
        %2496 = vmatprep.subr.bf16.mxu0 %v2453
        %2497 = vmatpush1.bf16.msra.mxu0 %v2450
        %2498 = vmatprep.subr.bf16.mxu0 0
        %2499 = vmatpush1.bf16.msra.mxu0 0
        %2500 = vmatprep.subr.bf16.mxu0 0
        %2501 = vmatpush1.bf16.msra.mxu0 0
        %2502 = vmatprep.subr.bf16.mxu0 0
        %2503 = vmatpush1.bf16.msra.mxu0 0
        %2504 = vmatprep.subr.bf16.mxu0 0
        %2505 = vmatpush1.bf16.msra.mxu0 0
        %2506 = vmatprep.subr.bf16.mxu0 0
        %2507 = vmatpush1.bf16.msra.mxu0 0
        %2508 = vmatprep.subr.bf16.mxu0 0
        %2509 = vmatpush1.bf16.msra.mxu0 0
        %2510 = vmatprep.subr.bf16.mxu0 0
        %2511 = vmatpush1.bf16.msra.mxu0 0
        %2512 = vmatprep.subr.bf16.mxu0 0
        %2513 = vmatpush1.bf16.msra.mxu0 0
        %2514 = vmatprep.subr.bf16.mxu0 0
        %2515 = vmatpush1.bf16.msra.mxu0 0
        %2516 = vmatprep.subr.bf16.mxu0 0
        %2517 = vmatpush1.bf16.msra.mxu0 0
        %2518 = vmatprep.subr.bf16.mxu0 0
        %2519 = vmatpush1.bf16.msra.mxu0 0
        %2520 = vmatprep.subr.bf16.mxu0 0
        %2521 = vmatpush1.bf16.msra.mxu0 0
        %2522 = vmatprep.subr.bf16.mxu0 0
        %2523 = vmatpush1.bf16.msra.mxu0 0
        %2524 = vmatprep.subr.bf16.mxu0 0
        %2525 = vmatpush1.bf16.msra.mxu0 0
        %2526 = vmatprep.subr.bf16.mxu0 0
        %2527 = vmatpush1.bf16.msra.mxu0 0
        %2528 = vmatprep.mubr.bf16.mxu0 0
        %2529 = vmatmul.mubr.bf16.gmra.mrb[0].mxu0 %v2441
        %v2530 = vpop.f32.mrb[0].mxu0
        %v2531 = vadd.f32 0.0, %v2530
        %v2532 = vpop.f32.mrb[0].mxu0
        %v2533 = vadd.f32 0.0, %v2532
        %v2534 = vpop.f32.mrb[0].mxu0
        %v2535 = vpop.f32.mrb[0].mxu0
        %2536 = vdwg.mxu0
        %v2537 = vadd.f32 %v2367, %v2490
        %v2538 = vadd.f32 %v2368, %v2492
        %v2539 = vadd.f32 %v2369, %v2531
        %v2540 = vadd.f32 %v2370, %v2533
        %v2541 = vlaneseq
        %v2542 = vshrl.u32 %v2541, 7
        %v2543 = vsub.s32 5, %v2542
        %v2544 = vrot.slane %v330, %v2543
        %v2545 = vlaneseq
        %v2546 = vshrl.u32 %v2545, 7
        %v2547 = vsub.s32 5, %v2546
        %v2548 = vrot.slane %v331, %v2547
        %v2549 = vlaneseq
        %v2550 = vshrl.u32 %v2549, 7
        %v2551 = vsub.s32 5, %v2550
        %v2552 = vrot.slane %v332, %v2551
        %v2553 = vlaneseq
        %v2554 = vshrl.u32 %v2553, 7
        %v2555 = vsub.s32 5, %v2554
        %v2556 = vrot.slane %v333, %v2555
        %v2561 = vcombine.low %v2544, %v2548
        %v2562 = vcombine.low %v2552, %v2556
        %2563 = vrot.lane.b32.xlu0 %v2561, 73
        %v2564 = vpop.permute.xlu0 %2563
        %2565 = vrot.lane.b32.xlu0 %v2562, 73
        %v2566 = vpop.permute.xlu0 %2565
        %v2567 = vrot.slane %v2564, 4
        %v2568 = vrot.slane %v2566, 4
        %vm2569 = vcmask 596992
        %v2570 = vsel %vm2569, %v2567, %v2564
        %v2571 = vsel %vm435, %v2567, %v2568
        %v2572 = vsel %vm2569, %v2571, %v2566
        %v2576 = vmul.f32 %v323, %v2570
        %v2577 = vmul.f32 %v324, %v2572
        %v2578 = vmul.f32 %v325, %v2568
        %v2581 = vcombine.high %v2576, %v2576
        %v2582 = vcombine.high %v2577, %v2577
        %v2585 = vpack.c.bf16 %v2576, %v2576
        %v2586 = vpack.c.bf16 %v2581, %v2581
        %v2587 = vpack.c.bf16 %v2577, %v2577
        %v2588 = vpack.c.bf16 %v2582, %v2582
        %v2589 = vpack.c.bf16 %v2578, %v2578
        %2595 = vrot.lane.b32.xlu0 %v2585, 55
        %v2596 = vpop.permute.xlu0 %2595
        %2597 = vrot.lane.b32.xlu0 %v2586, 55
        %v2598 = vpop.permute.xlu0 %2597
        %2599 = vrot.lane.b32.xlu0 %v2587, 55
        %v2600 = vpop.permute.xlu0 %2599
        %2601 = vrot.lane.b32.xlu0 %v2588, 55
        %v2602 = vpop.permute.xlu0 %2601
        %2603 = vrot.lane.b32.xlu0 %v2589, 55
        %v2604 = vpop.permute.xlu0 %2603
        %vm2605 = vcmask 449536
        %v2606 = vsel %vm2605, %v2596, %v2598
        %v2607 = vsel %vm2605, %v2598, %v2600
        %v2608 = vsel %vm2605, %v2600, %v2602
        %v2609 = vsel %vm2605, %v2602, %v2604
        %v2611 = vsel %vm475, %v355, 0
        %v2614 = vsel %vm479, %v2606, 0
        %v2617 = vsel %vm479, %v2607, 0
        %v2620 = vsel %vm479, %v2608, 0
        %v2623 = vsel %vm479, %v2609, 0
        %2625 = vmatprep.subr.bf16.mxu0 %v2617
        %2626 = vmatpush1.bf16.msra.mxu0 %v2614
        %2627 = vmatprep.subr.bf16.mxu0 0
        %2628 = vmatpush1.bf16.msra.mxu0 0
        %2629 = vmatprep.subr.bf16.mxu0 0
        %2630 = vmatpush1.bf16.msra.mxu0 0
        %2631 = vmatprep.subr.bf16.mxu0 0
        %2632 = vmatpush1.bf16.msra.mxu0 0
        %2633 = vmatprep.subr.bf16.mxu0 0
        %2634 = vmatpush1.bf16.msra.mxu0 0
        %2635 = vmatprep.subr.bf16.mxu0 0
        %2636 = vmatpush1.bf16.msra.mxu0 0
        %2637 = vmatprep.subr.bf16.mxu0 0
        %2638 = vmatpush1.bf16.msra.mxu0 0
        %2639 = vmatprep.subr.bf16.mxu0 0
        %2640 = vmatpush1.bf16.msra.mxu0 0
        %2641 = vmatprep.subr.bf16.mxu0 0
        %2642 = vmatpush1.bf16.msra.mxu0 0
        %2643 = vmatprep.subr.bf16.mxu0 0
        %2644 = vmatpush1.bf16.msra.mxu0 0
        %2645 = vmatprep.subr.bf16.mxu0 0
        %2646 = vmatpush1.bf16.msra.mxu0 0
        %2647 = vmatprep.subr.bf16.mxu0 0
        %2648 = vmatpush1.bf16.msra.mxu0 0
        %2649 = vmatprep.subr.bf16.mxu0 0
        %2650 = vmatpush1.bf16.msra.mxu0 0
        %2651 = vmatprep.subr.bf16.mxu0 0
        %2652 = vmatpush1.bf16.msra.mxu0 0
        %2653 = vmatprep.subr.bf16.mxu0 0
        %2654 = vmatpush1.bf16.msra.mxu0 0
        %2655 = vmatprep.subr.bf16.mxu0 0
        %2656 = vmatpush1.bf16.msra.mxu0 0
        %2657 = vmatprep.mubr.bf16.mxu0 0
        %2658 = vmatmul.mubr.bf16.gmra.mrb[0].mxu0 %v2611
        %v2659 = vpop.f32.mrb[0].mxu0
        %v2660 = vadd.f32 0.0, %v2659
        %v2661 = vpop.f32.mrb[0].mxu0
        %v2662 = vadd.f32 0.0, %v2661
        %v2663 = vpop.f32.mrb[0].mxu0
        %v2664 = vpop.f32.mrb[0].mxu0
        %2665 = vdwg.mxu0
        %2666 = vmatprep.subr.bf16.mxu0 %v2623
        %2667 = vmatpush1.bf16.msra.mxu0 %v2620
        %2668 = vmatprep.subr.bf16.mxu0 0
        %2669 = vmatpush1.bf16.msra.mxu0 0
        %2670 = vmatprep.subr.bf16.mxu0 0
        %2671 = vmatpush1.bf16.msra.mxu0 0
        %2672 = vmatprep.subr.bf16.mxu0 0
        %2673 = vmatpush1.bf16.msra.mxu0 0
        %2674 = vmatprep.subr.bf16.mxu0 0
        %2675 = vmatpush1.bf16.msra.mxu0 0
        %2676 = vmatprep.subr.bf16.mxu0 0
        %2677 = vmatpush1.bf16.msra.mxu0 0
        %2678 = vmatprep.subr.bf16.mxu0 0
        %2679 = vmatpush1.bf16.msra.mxu0 0
        %2680 = vmatprep.subr.bf16.mxu0 0
        %2681 = vmatpush1.bf16.msra.mxu0 0
        %2682 = vmatprep.subr.bf16.mxu0 0
        %2683 = vmatpush1.bf16.msra.mxu0 0
        %2684 = vmatprep.subr.bf16.mxu0 0
        %2685 = vmatpush1.bf16.msra.mxu0 0
        %2686 = vmatprep.subr.bf16.mxu0 0
        %2687 = vmatpush1.bf16.msra.mxu0 0
        %2688 = vmatprep.subr.bf16.mxu0 0
        %2689 = vmatpush1.bf16.msra.mxu0 0
        %2690 = vmatprep.subr.bf16.mxu0 0
        %2691 = vmatpush1.bf16.msra.mxu0 0
        %2692 = vmatprep.subr.bf16.mxu0 0
        %2693 = vmatpush1.bf16.msra.mxu0 0
        %2694 = vmatprep.subr.bf16.mxu0 0
        %2695 = vmatpush1.bf16.msra.mxu0 0
        %2696 = vmatprep.subr.bf16.mxu0 0
        %2697 = vmatpush1.bf16.msra.mxu0 0
        %2698 = vmatprep.mubr.bf16.mxu0 0
        %2699 = vmatmul.mubr.bf16.gmra.mrb[0].mxu0 %v2611
        %v2700 = vpop.f32.mrb[0].mxu0
        %v2701 = vadd.f32 0.0, %v2700
        %v2702 = vpop.f32.mrb[0].mxu0
        %v2703 = vadd.f32 0.0, %v2702
        %v2704 = vpop.f32.mrb[0].mxu0
        %v2705 = vpop.f32.mrb[0].mxu0
        %2706 = vdwg.mxu0
        %v2707 = vadd.f32 %v2537, %v2660
        %v2708 = vadd.f32 %v2538, %v2662
        %v2709 = vadd.f32 %v2539, %v2701
        %v2710 = vadd.f32 %v2540, %v2703
        %v2711 = vlaneseq
        %v2712 = vshrl.u32 %v2711, 7
        %v2713 = vsub.s32 6, %v2712
        %v2714 = vrot.slane %v330, %v2713
        %v2715 = vlaneseq
        %v2716 = vshrl.u32 %v2715, 7
        %v2717 = vsub.s32 6, %v2716
        %v2718 = vrot.slane %v331, %v2717
        %v2719 = vlaneseq
        %v2720 = vshrl.u32 %v2719, 7
        %v2721 = vsub.s32 6, %v2720
        %v2722 = vrot.slane %v332, %v2721
        %v2723 = vlaneseq
        %v2724 = vshrl.u32 %v2723, 7
        %v2725 = vsub.s32 6, %v2724
        %v2726 = vrot.slane %v333, %v2725
        %v2731 = vcombine.low %v2714, %v2718
        %v2732 = vcombine.low %v2722, %v2726
        %2733 = vrot.lane.b32.xlu0 %v2731, 74
        %v2734 = vpop.permute.xlu0 %2733
        %2735 = vrot.lane.b32.xlu0 %v2732, 74
        %v2736 = vpop.permute.xlu0 %2735
        %v2737 = vrot.slane %v2734, 4
        %v2738 = vrot.slane %v2736, 4
        %vm2739 = vcmask 605184
        %v2740 = vsel %vm2739, %v2737, %v2734
        %v2741 = vsel %vm435, %v2737, %v2738
        %v2742 = vsel %vm2739, %v2741, %v2736
        %v2746 = vmul.f32 %v323, %v2740
        %v2747 = vmul.f32 %v324, %v2742
        %v2748 = vmul.f32 %v325, %v2738
        %v2751 = vcombine.high %v2746, %v2746
        %v2752 = vcombine.high %v2747, %v2747
        %v2755 = vpack.c.bf16 %v2746, %v2746
        %v2756 = vpack.c.bf16 %v2751, %v2751
        %v2757 = vpack.c.bf16 %v2747, %v2747
        %v2758 = vpack.c.bf16 %v2752, %v2752
        %v2759 = vpack.c.bf16 %v2748, %v2748
        %2765 = vrot.lane.b32.xlu0 %v2755, 54
        %v2766 = vpop.permute.xlu0 %2765
        %2767 = vrot.lane.b32.xlu0 %v2756, 54
        %v2768 = vpop.permute.xlu0 %2767
        %2769 = vrot.lane.b32.xlu0 %v2757, 54
        %v2770 = vpop.permute.xlu0 %2769
        %2771 = vrot.lane.b32.xlu0 %v2758, 54
        %v2772 = vpop.permute.xlu0 %2771
        %2773 = vrot.lane.b32.xlu0 %v2759, 54
        %v2774 = vpop.permute.xlu0 %2773
        %vm2775 = vcmask 441344
        %v2776 = vsel %vm2775, %v2766, %v2768
        %v2777 = vsel %vm2775, %v2768, %v2770
        %v2778 = vsel %vm2775, %v2770, %v2772
        %v2779 = vsel %vm2775, %v2772, %v2774
        %v2781 = vsel %vm475, %v356, 0
        %v2784 = vsel %vm479, %v2776, 0
        %v2787 = vsel %vm479, %v2777, 0
        %v2790 = vsel %vm479, %v2778, 0
        %v2793 = vsel %vm479, %v2779, 0
        %2795 = vmatprep.subr.bf16.mxu0 %v2787
        %2796 = vmatpush1.bf16.msra.mxu0 %v2784
        %2797 = vmatprep.subr.bf16.mxu0 0
        %2798 = vmatpush1.bf16.msra.mxu0 0
        %2799 = vmatprep.subr.bf16.mxu0 0
        %2800 = vmatpush1.bf16.msra.mxu0 0
        %2801 = vmatprep.subr.bf16.mxu0 0
        %2802 = vmatpush1.bf16.msra.mxu0 0
        %2803 = vmatprep.subr.bf16.mxu0 0
        %2804 = vmatpush1.bf16.msra.mxu0 0
        %2805 = vmatprep.subr.bf16.mxu0 0
        %2806 = vmatpush1.bf16.msra.mxu0 0
        %2807 = vmatprep.subr.bf16.mxu0 0
        %2808 = vmatpush1.bf16.msra.mxu0 0
        %2809 = vmatprep.subr.bf16.mxu0 0
        %2810 = vmatpush1.bf16.msra.mxu0 0
        %2811 = vmatprep.subr.bf16.mxu0 0
        %2812 = vmatpush1.bf16.msra.mxu0 0
        %2813 = vmatprep.subr.bf16.mxu0 0
        %2814 = vmatpush1.bf16.msra.mxu0 0
        %2815 = vmatprep.subr.bf16.mxu0 0
        %2816 = vmatpush1.bf16.msra.mxu0 0
        %2817 = vmatprep.subr.bf16.mxu0 0
        %2818 = vmatpush1.bf16.msra.mxu0 0
        %2819 = vmatprep.subr.bf16.mxu0 0
        %2820 = vmatpush1.bf16.msra.mxu0 0
        %2821 = vmatprep.subr.bf16.mxu0 0
        %2822 = vmatpush1.bf16.msra.mxu0 0
        %2823 = vmatprep.subr.bf16.mxu0 0
        %2824 = vmatpush1.bf16.msra.mxu0 0
        %2825 = vmatprep.subr.bf16.mxu0 0
        %2826 = vmatpush1.bf16.msra.mxu0 0
        %2827 = vmatprep.mubr.bf16.mxu0 0
        %2828 = vmatmul.mubr.bf16.gmra.mrb[0].mxu0 %v2781
        %v2829 = vpop.f32.mrb[0].mxu0
        %v2830 = vadd.f32 0.0, %v2829
        %v2831 = vpop.f32.mrb[0].mxu0
        %v2832 = vadd.f32 0.0, %v2831
        %v2833 = vpop.f32.mrb[0].mxu0
        %v2834 = vpop.f32.mrb[0].mxu0
        %2835 = vdwg.mxu0
        %2836 = vmatprep.subr.bf16.mxu0 %v2793
        %2837 = vmatpush1.bf16.msra.mxu0 %v2790
        %2838 = vmatprep.subr.bf16.mxu0 0
        %2839 = vmatpush1.bf16.msra.mxu0 0
        %2840 = vmatprep.subr.bf16.mxu0 0
        %2841 = vmatpush1.bf16.msra.mxu0 0
        %2842 = vmatprep.subr.bf16.mxu0 0
        %2843 = vmatpush1.bf16.msra.mxu0 0
        %2844 = vmatprep.subr.bf16.mxu0 0
        %2845 = vmatpush1.bf16.msra.mxu0 0
        %2846 = vmatprep.subr.bf16.mxu0 0
        %2847 = vmatpush1.bf16.msra.mxu0 0
        %2848 = vmatprep.subr.bf16.mxu0 0
        %2849 = vmatpush1.bf16.msra.mxu0 0
        %2850 = vmatprep.subr.bf16.mxu0 0
        %2851 = vmatpush1.bf16.msra.mxu0 0
        %2852 = vmatprep.subr.bf16.mxu0 0
        %2853 = vmatpush1.bf16.msra.mxu0 0
        %2854 = vmatprep.subr.bf16.mxu0 0
        %2855 = vmatpush1.bf16.msra.mxu0 0
        %2856 = vmatprep.subr.bf16.mxu0 0
        %2857 = vmatpush1.bf16.msra.mxu0 0
        %2858 = vmatprep.subr.bf16.mxu0 0
        %2859 = vmatpush1.bf16.msra.mxu0 0
        %2860 = vmatprep.subr.bf16.mxu0 0
        %2861 = vmatpush1.bf16.msra.mxu0 0
        %2862 = vmatprep.subr.bf16.mxu0 0
        %2863 = vmatpush1.bf16.msra.mxu0 0
        %2864 = vmatprep.subr.bf16.mxu0 0
        %2865 = vmatpush1.bf16.msra.mxu0 0
        %2866 = vmatprep.subr.bf16.mxu0 0
        %2867 = vmatpush1.bf16.msra.mxu0 0
        %2868 = vmatprep.mubr.bf16.mxu0 0
        %2869 = vmatmul.mubr.bf16.gmra.mrb[0].mxu0 %v2781
        %v2870 = vpop.f32.mrb[0].mxu0
        %v2871 = vadd.f32 0.0, %v2870
        %v2872 = vpop.f32.mrb[0].mxu0
        %v2873 = vadd.f32 0.0, %v2872
        %v2874 = vpop.f32.mrb[0].mxu0
        %v2875 = vpop.f32.mrb[0].mxu0
        %2876 = vdwg.mxu0
        %v2877 = vadd.f32 %v2707, %v2830
        %v2878 = vadd.f32 %v2708, %v2832
        %v2879 = vadd.f32 %v2709, %v2871
        %v2880 = vadd.f32 %v2710, %v2873
        %v2881 = vlaneseq
        %v2882 = vshrl.u32 %v2881, 7
        %v2883 = vsub.s32 7, %v2882
        %v2884 = vrot.slane %v330, %v2883
        %v2885 = vlaneseq
        %v2886 = vshrl.u32 %v2885, 7
        %v2887 = vsub.s32 7, %v2886
        %v2888 = vrot.slane %v331, %v2887
        %v2889 = vlaneseq
        %v2890 = vshrl.u32 %v2889, 7
        %v2891 = vsub.s32 7, %v2890
        %v2892 = vrot.slane %v332, %v2891
        %v2893 = vlaneseq
        %v2894 = vshrl.u32 %v2893, 7
        %v2895 = vsub.s32 7, %v2894
        %v2896 = vrot.slane %v333, %v2895
        %v2901 = vcombine.low %v2884, %v2888
        %v2902 = vcombine.low %v2892, %v2896
        %2903 = vrot.lane.b32.xlu0 %v2901, 80
        %v2904 = vpop.permute.xlu0 %2903
        %2905 = vrot.lane.b32.xlu0 %v2902, 80
        %v2906 = vpop.permute.xlu0 %2905
        %v2907 = vrot.slane %v2904, 4
        %v2908 = vrot.slane %v2906, 4
        %vm2909 = vcmask 654336
        %v2910 = vsel %vm2909, %v2907, %v2904
        %v2911 = vsel %vm435, %v2907, %v2908
        %v2912 = vsel %vm2909, %v2911, %v2906
        %v2916 = vmul.f32 %v323, %v2910
        %v2917 = vmul.f32 %v324, %v2912
        %v2918 = vmul.f32 %v325, %v2908
        %v2921 = vcombine.high %v2916, %v2916
        %v2922 = vcombine.high %v2917, %v2917
        %v2925 = vpack.c.bf16 %v2916, %v2916
        %v2926 = vpack.c.bf16 %v2921, %v2921
        %v2927 = vpack.c.bf16 %v2917, %v2917
        %v2928 = vpack.c.bf16 %v2922, %v2922
        %v2929 = vpack.c.bf16 %v2918, %v2918
        %2935 = vrot.lane.b32.xlu0 %v2925, 48
        %v2936 = vpop.permute.xlu0 %2935
        %2937 = vrot.lane.b32.xlu0 %v2926, 48
        %v2938 = vpop.permute.xlu0 %2937
        %2939 = vrot.lane.b32.xlu0 %v2927, 48
        %v2940 = vpop.permute.xlu0 %2939
        %2941 = vrot.lane.b32.xlu0 %v2928, 48
        %v2942 = vpop.permute.xlu0 %2941
        %2943 = vrot.lane.b32.xlu0 %v2929, 48
        %v2944 = vpop.permute.xlu0 %2943
        %vm2945 = vcmask 392192
        %v2946 = vsel %vm2945, %v2936, %v2938
        %v2947 = vsel %vm2945, %v2938, %v2940
        %v2948 = vsel %vm2945, %v2940, %v2942
        %v2949 = vsel %vm2945, %v2942, %v2944
        %v2951 = vsel %vm475, %v357, 0
        %v2954 = vsel %vm479, %v2946, 0
        %v2957 = vsel %vm479, %v2947, 0
        %v2960 = vsel %vm479, %v2948, 0
        %v2963 = vsel %vm479, %v2949, 0
        %2965 = vmatprep.subr.bf16.mxu0 %v2957
        %2966 = vmatpush1.bf16.msra.mxu0 %v2954
        %2967 = vmatprep.subr.bf16.mxu0 0
        %2968 = vmatpush1.bf16.msra.mxu0 0
        %2969 = vmatprep.subr.bf16.mxu0 0
        %2970 = vmatpush1.bf16.msra.mxu0 0
        %2971 = vmatprep.subr.bf16.mxu0 0
        %2972 = vmatpush1.bf16.msra.mxu0 0
        %2973 = vmatprep.subr.bf16.mxu0 0
        %2974 = vmatpush1.bf16.msra.mxu0 0
        %2975 = vmatprep.subr.bf16.mxu0 0
        %2976 = vmatpush1.bf16.msra.mxu0 0
        %2977 = vmatprep.subr.bf16.mxu0 0
        %2978 = vmatpush1.bf16.msra.mxu0 0
        %2979 = vmatprep.subr.bf16.mxu0 0
        %2980 = vmatpush1.bf16.msra.mxu0 0
        %2981 = vmatprep.subr.bf16.mxu0 0
        %2982 = vmatpush1.bf16.msra.mxu0 0
        %2983 = vmatprep.subr.bf16.mxu0 0
        %2984 = vmatpush1.bf16.msra.mxu0 0
        %2985 = vmatprep.subr.bf16.mxu0 0
        %2986 = vmatpush1.bf16.msra.mxu0 0
        %2987 = vmatprep.subr.bf16.mxu0 0
        %2988 = vmatpush1.bf16.msra.mxu0 0
        %2989 = vmatprep.subr.bf16.mxu0 0
        %2990 = vmatpush1.bf16.msra.mxu0 0
        %2991 = vmatprep.subr.bf16.mxu0 0
        %2992 = vmatpush1.bf16.msra.mxu0 0
        %2993 = vmatprep.subr.bf16.mxu0 0
        %2994 = vmatpush1.bf16.msra.mxu0 0
        %2995 = vmatprep.subr.bf16.mxu0 0
        %2996 = vmatpush1.bf16.msra.mxu0 0
        %2997 = vmatprep.mubr.bf16.mxu0 0
        %2998 = vmatmul.mubr.bf16.gmra.mrb[0].mxu0 %v2951
        %v2999 = vpop.f32.mrb[0].mxu0
        %v3000 = vadd.f32 0.0, %v2999
        %v3001 = vpop.f32.mrb[0].mxu0
        %v3002 = vadd.f32 0.0, %v3001
        %v3003 = vpop.f32.mrb[0].mxu0
        %v3004 = vpop.f32.mrb[0].mxu0
        %3005 = vdwg.mxu0
        %3006 = vmatprep.subr.bf16.mxu0 %v2963
        %3007 = vmatpush1.bf16.msra.mxu0 %v2960
        %3008 = vmatprep.subr.bf16.mxu0 0
        %3009 = vmatpush1.bf16.msra.mxu0 0
        %3010 = vmatprep.subr.bf16.mxu0 0
        %3011 = vmatpush1.bf16.msra.mxu0 0
        %3012 = vmatprep.subr.bf16.mxu0 0
        %3013 = vmatpush1.bf16.msra.mxu0 0
        %3014 = vmatprep.subr.bf16.mxu0 0
        %3015 = vmatpush1.bf16.msra.mxu0 0
        %3016 = vmatprep.subr.bf16.mxu0 0
        %3017 = vmatpush1.bf16.msra.mxu0 0
        %3018 = vmatprep.subr.bf16.mxu0 0
        %3019 = vmatpush1.bf16.msra.mxu0 0
        %3020 = vmatprep.subr.bf16.mxu0 0
        %3021 = vmatpush1.bf16.msra.mxu0 0
        %3022 = vmatprep.subr.bf16.mxu0 0
        %3023 = vmatpush1.bf16.msra.mxu0 0
        %3024 = vmatprep.subr.bf16.mxu0 0
        %3025 = vmatpush1.bf16.msra.mxu0 0
        %3026 = vmatprep.subr.bf16.mxu0 0
        %3027 = vmatpush1.bf16.msra.mxu0 0
        %3028 = vmatprep.subr.bf16.mxu0 0
        %3029 = vmatpush1.bf16.msra.mxu0 0
        %3030 = vmatprep.subr.bf16.mxu0 0
        %3031 = vmatpush1.bf16.msra.mxu0 0
        %3032 = vmatprep.subr.bf16.mxu0 0
        %3033 = vmatpush1.bf16.msra.mxu0 0
        %3034 = vmatprep.subr.bf16.mxu0 0
        %3035 = vmatpush1.bf16.msra.mxu0 0
        %3036 = vmatprep.subr.bf16.mxu0 0
        %3037 = vmatpush1.bf16.msra.mxu0 0
        %3038 = vmatprep.mubr.bf16.mxu0 0
        %3039 = vmatmul.mubr.bf16.gmra.mrb[0].mxu0 %v2951
        %v3040 = vpop.f32.mrb[0].mxu0
        %v3041 = vadd.f32 0.0, %v3040
        %v3042 = vpop.f32.mrb[0].mxu0
        %v3043 = vadd.f32 0.0, %v3042
        %v3044 = vpop.f32.mrb[0].mxu0
        %v3045 = vpop.f32.mrb[0].mxu0
        %3046 = vdwg.mxu0
        %v3047 = vadd.f32 %v2877, %v3000
        %v3048 = vadd.f32 %v2878, %v3002
        %v3049 = vadd.f32 %v2879, %v3041
        %v3050 = vadd.f32 %v2880, %v3043
        %v3051 = vlaneseq
        %v3052 = vshrl.u32 %v3051, 7
        %v3053 = vsub.s32 0, %v3052
        %v3054 = vrot.slane %v334, %v3053
        %v3055 = vlaneseq
        %v3056 = vshrl.u32 %v3055, 7
        %v3057 = vsub.s32 0, %v3056
        %v3058 = vrot.slane %v335, %v3057
        %v3059 = vlaneseq
        %v3060 = vshrl.u32 %v3059, 7
        %v3061 = vsub.s32 0, %v3060
        %v3062 = vrot.slane %v336, %v3061
        %v3063 = vlaneseq
        %v3064 = vshrl.u32 %v3063, 7
        %v3065 = vsub.s32 0, %v3064
        %v3066 = vrot.slane %v337, %v3065
        %v3071 = vcombine.low %v3054, %v3058
        %v3072 = vcombine.low %v3062, %v3066
        %3073 = vrot.lane.b32.xlu0 %v3071, 81
        %v3074 = vpop.permute.xlu0 %3073
        %3075 = vrot.lane.b32.xlu0 %v3072, 81
        %v3076 = vpop.permute.xlu0 %3075
        %v3077 = vrot.slane %v3074, 4
        %v3078 = vrot.slane %v3076, 4
        %vm3079 = vcmask 662528
        %v3080 = vsel %vm3079, %v3077, %v3074
        %v3081 = vsel %vm435, %v3077, %v3078
        %v3082 = vsel %vm3079, %v3081, %v3076
        %v3086 = vmul.f32 %v323, %v3080
        %v3087 = vmul.f32 %v324, %v3082
        %v3088 = vmul.f32 %v325, %v3078
        %v3091 = vcombine.high %v3086, %v3086
        %v3092 = vcombine.high %v3087, %v3087
        %v3095 = vpack.c.bf16 %v3086, %v3086
        %v3096 = vpack.c.bf16 %v3091, %v3091
        %v3097 = vpack.c.bf16 %v3087, %v3087
        %v3098 = vpack.c.bf16 %v3092, %v3092
        %v3099 = vpack.c.bf16 %v3088, %v3088
        %3105 = vrot.lane.b32.xlu0 %v3095, 47
        %v3106 = vpop.permute.xlu0 %3105
        %3107 = vrot.lane.b32.xlu0 %v3096, 47
        %v3108 = vpop.permute.xlu0 %3107
        %3109 = vrot.lane.b32.xlu0 %v3097, 47
        %v3110 = vpop.permute.xlu0 %3109
        %3111 = vrot.lane.b32.xlu0 %v3098, 47
        %v3112 = vpop.permute.xlu0 %3111
        %3113 = vrot.lane.b32.xlu0 %v3099, 47
        %v3114 = vpop.permute.xlu0 %3113
        %vm3115 = vcmask 384000
        %v3116 = vsel %vm3115, %v3106, %v3108
        %v3117 = vsel %vm3115, %v3108, %v3110
        %v3118 = vsel %vm3115, %v3110, %v3112
        %v3119 = vsel %vm3115, %v3112, %v3114
        %v3121 = vsel %vm475, %v358, 0
        %v3124 = vsel %vm479, %v3116, 0
        %v3127 = vsel %vm479, %v3117, 0
        %v3130 = vsel %vm479, %v3118, 0
        %v3133 = vsel %vm479, %v3119, 0
        %3135 = vmatprep.subr.bf16.mxu0 %v3127
        %3136 = vmatpush1.bf16.msra.mxu0 %v3124
        %3137 = vmatprep.subr.bf16.mxu0 0
        %3138 = vmatpush1.bf16.msra.mxu0 0
        %3139 = vmatprep.subr.bf16.mxu0 0
        %3140 = vmatpush1.bf16.msra.mxu0 0
        %3141 = vmatprep.subr.bf16.mxu0 0
        %3142 = vmatpush1.bf16.msra.mxu0 0
        %3143 = vmatprep.subr.bf16.mxu0 0
        %3144 = vmatpush1.bf16.msra.mxu0 0
        %3145 = vmatprep.subr.bf16.mxu0 0
        %3146 = vmatpush1.bf16.msra.mxu0 0
        %3147 = vmatprep.subr.bf16.mxu0 0
        %3148 = vmatpush1.bf16.msra.mxu0 0
        %3149 = vmatprep.subr.bf16.mxu0 0
        %3150 = vmatpush1.bf16.msra.mxu0 0
        %3151 = vmatprep.subr.bf16.mxu0 0
        %3152 = vmatpush1.bf16.msra.mxu0 0
        %3153 = vmatprep.subr.bf16.mxu0 0
        %3154 = vmatpush1.bf16.msra.mxu0 0
        %3155 = vmatprep.subr.bf16.mxu0 0
        %3156 = vmatpush1.bf16.msra.mxu0 0
        %3157 = vmatprep.subr.bf16.mxu0 0
        %3158 = vmatpush1.bf16.msra.mxu0 0
        %3159 = vmatprep.subr.bf16.mxu0 0
        %3160 = vmatpush1.bf16.msra.mxu0 0
        %3161 = vmatprep.subr.bf16.mxu0 0
        %3162 = vmatpush1.bf16.msra.mxu0 0
        %3163 = vmatprep.subr.bf16.mxu0 0
        %3164 = vmatpush1.bf16.msra.mxu0 0
        %3165 = vmatprep.subr.bf16.mxu0 0
        %3166 = vmatpush1.bf16.msra.mxu0 0
        %3167 = vmatprep.mubr.bf16.mxu0 0
        %3168 = vmatmul.mubr.bf16.gmra.mrb[0].mxu0 %v3121
        %v3169 = vpop.f32.mrb[0].mxu0
        %v3170 = vadd.f32 0.0, %v3169
        %v3171 = vpop.f32.mrb[0].mxu0
        %v3172 = vadd.f32 0.0, %v3171
        %v3173 = vpop.f32.mrb[0].mxu0
        %v3174 = vpop.f32.mrb[0].mxu0
        %3175 = vdwg.mxu0
        %3176 = vmatprep.subr.bf16.mxu0 %v3133
        %3177 = vmatpush1.bf16.msra.mxu0 %v3130
        %3178 = vmatprep.subr.bf16.mxu0 0
        %3179 = vmatpush1.bf16.msra.mxu0 0
        %3180 = vmatprep.subr.bf16.mxu0 0
        %3181 = vmatpush1.bf16.msra.mxu0 0
        %3182 = vmatprep.subr.bf16.mxu0 0
        %3183 = vmatpush1.bf16.msra.mxu0 0
        %3184 = vmatprep.subr.bf16.mxu0 0
        %3185 = vmatpush1.bf16.msra.mxu0 0
        %3186 = vmatprep.subr.bf16.mxu0 0
        %3187 = vmatpush1.bf16.msra.mxu0 0
        %3188 = vmatprep.subr.bf16.mxu0 0
        %3189 = vmatpush1.bf16.msra.mxu0 0
        %3190 = vmatprep.subr.bf16.mxu0 0
        %3191 = vmatpush1.bf16.msra.mxu0 0
        %3192 = vmatprep.subr.bf16.mxu0 0
        %3193 = vmatpush1.bf16.msra.mxu0 0
        %3194 = vmatprep.subr.bf16.mxu0 0
        %3195 = vmatpush1.bf16.msra.mxu0 0
        %3196 = vmatprep.subr.bf16.mxu0 0
        %3197 = vmatpush1.bf16.msra.mxu0 0
        %3198 = vmatprep.subr.bf16.mxu0 0
        %3199 = vmatpush1.bf16.msra.mxu0 0
        %3200 = vmatprep.subr.bf16.mxu0 0
        %3201 = vmatpush1.bf16.msra.mxu0 0
        %3202 = vmatprep.subr.bf16.mxu0 0
        %3203 = vmatpush1.bf16.msra.mxu0 0
        %3204 = vmatprep.subr.bf16.mxu0 0
        %3205 = vmatpush1.bf16.msra.mxu0 0
        %3206 = vmatprep.subr.bf16.mxu0 0
        %3207 = vmatpush1.bf16.msra.mxu0 0
        %3208 = vmatprep.mubr.bf16.mxu0 0
        %3209 = vmatmul.mubr.bf16.gmra.mrb[0].mxu0 %v3121
        %v3210 = vpop.f32.mrb[0].mxu0
        %v3211 = vadd.f32 0.0, %v3210
        %v3212 = vpop.f32.mrb[0].mxu0
        %v3213 = vadd.f32 0.0, %v3212
        %v3214 = vpop.f32.mrb[0].mxu0
        %v3215 = vpop.f32.mrb[0].mxu0
        %3216 = vdwg.mxu0
        %v3217 = vadd.f32 %v3047, %v3170
        %v3218 = vadd.f32 %v3048, %v3172
        %v3219 = vadd.f32 %v3049, %v3211
        %v3220 = vadd.f32 %v3050, %v3213
        %v3221 = vlaneseq
        %v3222 = vshrl.u32 %v3221, 7
        %v3223 = vsub.s32 1, %v3222
        %v3224 = vrot.slane %v334, %v3223
        %v3225 = vlaneseq
        %v3226 = vshrl.u32 %v3225, 7
        %v3227 = vsub.s32 1, %v3226
        %v3228 = vrot.slane %v335, %v3227
        %v3229 = vlaneseq
        %v3230 = vshrl.u32 %v3229, 7
        %v3231 = vsub.s32 1, %v3230
        %v3232 = vrot.slane %v336, %v3231
        %v3233 = vlaneseq
        %v3234 = vshrl.u32 %v3233, 7
        %v3235 = vsub.s32 1, %v3234
        %v3236 = vrot.slane %v337, %v3235
        %v3241 = vcombine.low %v3224, %v3228
        %v3242 = vcombine.low %v3232, %v3236
        %3243 = vrot.lane.b32.xlu0 %v3241, 82
        %v3244 = vpop.permute.xlu0 %3243
        %3245 = vrot.lane.b32.xlu0 %v3242, 82
        %v3246 = vpop.permute.xlu0 %3245
        %v3247 = vrot.slane %v3244, 4
        %v3248 = vrot.slane %v3246, 4
        %vm3249 = vcmask 670720
        %v3250 = vsel %vm3249, %v3247, %v3244
        %v3251 = vsel %vm435, %v3247, %v3248
        %v3252 = vsel %vm3249, %v3251, %v3246
        %v3256 = vmul.f32 %v323, %v3250
        %v3257 = vmul.f32 %v324, %v3252
        %v3258 = vmul.f32 %v325, %v3248
        %v3261 = vcombine.high %v3256, %v3256
        %v3262 = vcombine.high %v3257, %v3257
        %v3265 = vpack.c.bf16 %v3256, %v3256
        %v3266 = vpack.c.bf16 %v3261, %v3261
        %v3267 = vpack.c.bf16 %v3257, %v3257
        %v3268 = vpack.c.bf16 %v3262, %v3262
        %v3269 = vpack.c.bf16 %v3258, %v3258
        %3275 = vrot.lane.b32.xlu0 %v3265, 46
        %v3276 = vpop.permute.xlu0 %3275
        %3277 = vrot.lane.b32.xlu0 %v3266, 46
        %v3278 = vpop.permute.xlu0 %3277
        %3279 = vrot.lane.b32.xlu0 %v3267, 46
        %v3280 = vpop.permute.xlu0 %3279
        %3281 = vrot.lane.b32.xlu0 %v3268, 46
        %v3282 = vpop.permute.xlu0 %3281
        %3283 = vrot.lane.b32.xlu0 %v3269, 46
        %v3284 = vpop.permute.xlu0 %3283
        %vm3285 = vcmask 375808
        %v3286 = vsel %vm3285, %v3276, %v3278
        %v3287 = vsel %vm3285, %v3278, %v3280
        %v3288 = vsel %vm3285, %v3280, %v3282
        %v3289 = vsel %vm3285, %v3282, %v3284
        %v3291 = vsel %vm475, %v359, 0
        %v3294 = vsel %vm479, %v3286, 0
        %v3297 = vsel %vm479, %v3287, 0
        %v3300 = vsel %vm479, %v3288, 0
        %v3303 = vsel %vm479, %v3289, 0
        %3305 = vmatprep.subr.bf16.mxu0 %v3297
        %3306 = vmatpush1.bf16.msra.mxu0 %v3294
        %3307 = vmatprep.subr.bf16.mxu0 0
        %3308 = vmatpush1.bf16.msra.mxu0 0
        %3309 = vmatprep.subr.bf16.mxu0 0
        %3310 = vmatpush1.bf16.msra.mxu0 0
        %3311 = vmatprep.subr.bf16.mxu0 0
        %3312 = vmatpush1.bf16.msra.mxu0 0
        %3313 = vmatprep.subr.bf16.mxu0 0
        %3314 = vmatpush1.bf16.msra.mxu0 0
        %3315 = vmatprep.subr.bf16.mxu0 0
        %3316 = vmatpush1.bf16.msra.mxu0 0
        %3317 = vmatprep.subr.bf16.mxu0 0
        %3318 = vmatpush1.bf16.msra.mxu0 0
        %3319 = vmatprep.subr.bf16.mxu0 0
        %3320 = vmatpush1.bf16.msra.mxu0 0
        %3321 = vmatprep.subr.bf16.mxu0 0
        %3322 = vmatpush1.bf16.msra.mxu0 0
        %3323 = vmatprep.subr.bf16.mxu0 0
        %3324 = vmatpush1.bf16.msra.mxu0 0
        %3325 = vmatprep.subr.bf16.mxu0 0
        %3326 = vmatpush1.bf16.msra.mxu0 0
        %3327 = vmatprep.subr.bf16.mxu0 0
        %3328 = vmatpush1.bf16.msra.mxu0 0
        %3329 = vmatprep.subr.bf16.mxu0 0
        %3330 = vmatpush1.bf16.msra.mxu0 0
        %3331 = vmatprep.subr.bf16.mxu0 0
        %3332 = vmatpush1.bf16.msra.mxu0 0
        %3333 = vmatprep.subr.bf16.mxu0 0
        %3334 = vmatpush1.bf16.msra.mxu0 0
        %3335 = vmatprep.subr.bf16.mxu0 0
        %3336 = vmatpush1.bf16.msra.mxu0 0
        %3337 = vmatprep.mubr.bf16.mxu0 0
        %3338 = vmatmul.mubr.bf16.gmra.mrb[0].mxu0 %v3291
        %v3339 = vpop.f32.mrb[0].mxu0
        %v3340 = vadd.f32 0.0, %v3339
        %v3341 = vpop.f32.mrb[0].mxu0
        %v3342 = vadd.f32 0.0, %v3341
        %v3343 = vpop.f32.mrb[0].mxu0
        %v3344 = vpop.f32.mrb[0].mxu0
        %3345 = vdwg.mxu0
        %3346 = vmatprep.subr.bf16.mxu0 %v3303
        %3347 = vmatpush1.bf16.msra.mxu0 %v3300
        %3348 = vmatprep.subr.bf16.mxu0 0
        %3349 = vmatpush1.bf16.msra.mxu0 0
        %3350 = vmatprep.subr.bf16.mxu0 0
        %3351 = vmatpush1.bf16.msra.mxu0 0
        %3352 = vmatprep.subr.bf16.mxu0 0
        %3353 = vmatpush1.bf16.msra.mxu0 0
        %3354 = vmatprep.subr.bf16.mxu0 0
        %3355 = vmatpush1.bf16.msra.mxu0 0
        %3356 = vmatprep.subr.bf16.mxu0 0
        %3357 = vmatpush1.bf16.msra.mxu0 0
        %3358 = vmatprep.subr.bf16.mxu0 0
        %3359 = vmatpush1.bf16.msra.mxu0 0
        %3360 = vmatprep.subr.bf16.mxu0 0
        %3361 = vmatpush1.bf16.msra.mxu0 0
        %3362 = vmatprep.subr.bf16.mxu0 0
        %3363 = vmatpush1.bf16.msra.mxu0 0
        %3364 = vmatprep.subr.bf16.mxu0 0
        %3365 = vmatpush1.bf16.msra.mxu0 0
        %3366 = vmatprep.subr.bf16.mxu0 0
        %3367 = vmatpush1.bf16.msra.mxu0 0
        %3368 = vmatprep.subr.bf16.mxu0 0
        %3369 = vmatpush1.bf16.msra.mxu0 0
        %3370 = vmatprep.subr.bf16.mxu0 0
        %3371 = vmatpush1.bf16.msra.mxu0 0
        %3372 = vmatprep.subr.bf16.mxu0 0
        %3373 = vmatpush1.bf16.msra.mxu0 0
        %3374 = vmatprep.subr.bf16.mxu0 0
        %3375 = vmatpush1.bf16.msra.mxu0 0
        %3376 = vmatprep.subr.bf16.mxu0 0
        %3377 = vmatpush1.bf16.msra.mxu0 0
        %3378 = vmatprep.mubr.bf16.mxu0 0
        %3379 = vmatmul.mubr.bf16.gmra.mrb[0].mxu0 %v3291
        %v3380 = vpop.f32.mrb[0].mxu0
        %v3381 = vadd.f32 0.0, %v3380
        %v3382 = vpop.f32.mrb[0].mxu0
        %v3383 = vadd.f32 0.0, %v3382
        %v3384 = vpop.f32.mrb[0].mxu0
        %v3385 = vpop.f32.mrb[0].mxu0
        %3386 = vdwg.mxu0
        %v3387 = vadd.f32 %v3217, %v3340
        %v3388 = vadd.f32 %v3218, %v3342
        %v3389 = vadd.f32 %v3219, %v3381
        %v3390 = vadd.f32 %v3220, %v3383
        %v3391 = vlaneseq
        %v3392 = vshrl.u32 %v3391, 7
        %v3393 = vsub.s32 2, %v3392
        %v3394 = vrot.slane %v334, %v3393
        %v3395 = vlaneseq
        %v3396 = vshrl.u32 %v3395, 7
        %v3397 = vsub.s32 2, %v3396
        %v3398 = vrot.slane %v335, %v3397
        %v3399 = vlaneseq
        %v3400 = vshrl.u32 %v3399, 7
        %v3401 = vsub.s32 2, %v3400
        %v3402 = vrot.slane %v336, %v3401
        %v3403 = vlaneseq
        %v3404 = vshrl.u32 %v3403, 7
        %v3405 = vsub.s32 2, %v3404
        %v3406 = vrot.slane %v337, %v3405
        %v3410 = vrot.slane %v323, 4
        %v3411 = vrot.slane %v324, 4
        %v3412 = vrot.slane %v325, 4
        %v3413 = vsel %vm435, %v3410, %v3411
        %v3414 = vsel %vm435, %v3411, %v3412
        %v3421 = vcombine.low %v3394, %v3398
        %v3422 = vcombine.low %v3402, %v3406
        %v3425 = vmul.f32 %v3413, %v3421
        %v3426 = vmul.f32 %v3414, %v3422
        %v3429 = vcombine.high %v3425, %v3425
        %v3430 = vcombine.high %v3426, %v3426
        %v3433 = vpack.c.bf16 %v3425, %v3425
        %v3434 = vpack.c.bf16 %v3429, %v3429
        %v3435 = vpack.c.bf16 %v3426, %v3426
        %v3436 = vpack.c.bf16 %v3430, %v3430
        %v3438 = vsel %vm475, %v360, 0
        %v3441 = vsel %vm479, %v3433, 0
        %v3444 = vsel %vm479, %v3434, 0
        %v3447 = vsel %vm479, %v3435, 0
        %v3450 = vsel %vm479, %v3436, 0
        %3452 = vmatprep.subr.bf16.mxu0 %v3444
        %3453 = vmatpush1.bf16.msra.mxu0 %v3441
        %3454 = vmatprep.subr.bf16.mxu0 0
        %3455 = vmatpush1.bf16.msra.mxu0 0
        %3456 = vmatprep.subr.bf16.mxu0 0
        %3457 = vmatpush1.bf16.msra.mxu0 0
        %3458 = vmatprep.subr.bf16.mxu0 0
        %3459 = vmatpush1.bf16.msra.mxu0 0
        %3460 = vmatprep.subr.bf16.mxu0 0
        %3461 = vmatpush1.bf16.msra.mxu0 0
        %3462 = vmatprep.subr.bf16.mxu0 0
        %3463 = vmatpush1.bf16.msra.mxu0 0
        %3464 = vmatprep.subr.bf16.mxu0 0
        %3465 = vmatpush1.bf16.msra.mxu0 0
        %3466 = vmatprep.subr.bf16.mxu0 0
        %3467 = vmatpush1.bf16.msra.mxu0 0
        %3468 = vmatprep.subr.bf16.mxu0 0
        %3469 = vmatpush1.bf16.msra.mxu0 0
        %3470 = vmatprep.subr.bf16.mxu0 0
        %3471 = vmatpush1.bf16.msra.mxu0 0
        %3472 = vmatprep.subr.bf16.mxu0 0
        %3473 = vmatpush1.bf16.msra.mxu0 0
        %3474 = vmatprep.subr.bf16.mxu0 0
        %3475 = vmatpush1.bf16.msra.mxu0 0
        %3476 = vmatprep.subr.bf16.mxu0 0
        %3477 = vmatpush1.bf16.msra.mxu0 0
        %3478 = vmatprep.subr.bf16.mxu0 0
        %3479 = vmatpush1.bf16.msra.mxu0 0
        %3480 = vmatprep.subr.bf16.mxu0 0
        %3481 = vmatpush1.bf16.msra.mxu0 0
        %3482 = vmatprep.subr.bf16.mxu0 0
        %3483 = vmatpush1.bf16.msra.mxu0 0
        %3484 = vmatprep.mubr.bf16.mxu0 0
        %3485 = vmatmul.mubr.bf16.gmra.mrb[0].mxu0 %v3438
        %v3486 = vpop.f32.mrb[0].mxu0
        %v3487 = vadd.f32 0.0, %v3486
        %v3488 = vpop.f32.mrb[0].mxu0
        %v3489 = vadd.f32 0.0, %v3488
        %v3490 = vpop.f32.mrb[0].mxu0
        %v3491 = vpop.f32.mrb[0].mxu0
        %3492 = vdwg.mxu0
        %3493 = vmatprep.subr.bf16.mxu0 %v3450
        %3494 = vmatpush1.bf16.msra.mxu0 %v3447
        %3495 = vmatprep.subr.bf16.mxu0 0
        %3496 = vmatpush1.bf16.msra.mxu0 0
        %3497 = vmatprep.subr.bf16.mxu0 0
        %3498 = vmatpush1.bf16.msra.mxu0 0
        %3499 = vmatprep.subr.bf16.mxu0 0
        %3500 = vmatpush1.bf16.msra.mxu0 0
        %3501 = vmatprep.subr.bf16.mxu0 0
        %3502 = vmatpush1.bf16.msra.mxu0 0
        %3503 = vmatprep.subr.bf16.mxu0 0
        %3504 = vmatpush1.bf16.msra.mxu0 0
        %3505 = vmatprep.subr.bf16.mxu0 0
        %3506 = vmatpush1.bf16.msra.mxu0 0
        %3507 = vmatprep.subr.bf16.mxu0 0
        %3508 = vmatpush1.bf16.msra.mxu0 0
        %3509 = vmatprep.subr.bf16.mxu0 0
        %3510 = vmatpush1.bf16.msra.mxu0 0
        %3511 = vmatprep.subr.bf16.mxu0 0
        %3512 = vmatpush1.bf16.msra.mxu0 0
        %3513 = vmatprep.subr.bf16.mxu0 0
        %3514 = vmatpush1.bf16.msra.mxu0 0
        %3515 = vmatprep.subr.bf16.mxu0 0
        %3516 = vmatpush1.bf16.msra.mxu0 0
        %3517 = vmatprep.subr.bf16.mxu0 0
        %3518 = vmatpush1.bf16.msra.mxu0 0
        %3519 = vmatprep.subr.bf16.mxu0 0
        %3520 = vmatpush1.bf16.msra.mxu0 0
        %3521 = vmatprep.subr.bf16.mxu0 0
        %3522 = vmatpush1.bf16.msra.mxu0 0
        %3523 = vmatprep.subr.bf16.mxu0 0
        %3524 = vmatpush1.bf16.msra.mxu0 0
        %3525 = vmatprep.mubr.bf16.mxu0 0
        %3526 = vmatmul.mubr.bf16.gmra.mrb[0].mxu0 %v3438
        %v3527 = vpop.f32.mrb[0].mxu0
        %v3528 = vadd.f32 0.0, %v3527
        %v3529 = vpop.f32.mrb[0].mxu0
        %v3530 = vadd.f32 0.0, %v3529
        %v3531 = vpop.f32.mrb[0].mxu0
        %v3532 = vpop.f32.mrb[0].mxu0
        %3533 = vdwg.mxu0
        %v3534 = vadd.f32 %v3387, %v3487
        %v3535 = vadd.f32 %v3388, %v3489
        %v3536 = vadd.f32 %v3389, %v3528
        %v3537 = vadd.f32 %v3390, %v3530
        %v3538 = vlaneseq
        %v3539 = vshrl.u32 %v3538, 7
        %v3540 = vsub.s32 3, %v3539
        %v3541 = vrot.slane %v334, %v3540
        %v3542 = vlaneseq
        %v3543 = vshrl.u32 %v3542, 7
        %v3544 = vsub.s32 3, %v3543
        %v3545 = vrot.slane %v335, %v3544
        %v3546 = vlaneseq
        %v3547 = vshrl.u32 %v3546, 7
        %v3548 = vsub.s32 3, %v3547
        %v3549 = vrot.slane %v336, %v3548
        %v3550 = vlaneseq
        %v3551 = vshrl.u32 %v3550, 7
        %v3552 = vsub.s32 3, %v3551
        %v3553 = vrot.slane %v337, %v3552
        %3554 = vrot.lane.b32.xlu0 %v323, 127
        %v3555 = vpop.permute.xlu0 %3554
        %3556 = vrot.lane.b32.xlu0 %v324, 127
        %v3557 = vpop.permute.xlu0 %3556
        %3558 = vrot.lane.b32.xlu0 %v325, 127
        %v3559 = vpop.permute.xlu0 %3558
        %v3560 = vrot.slane %v3555, 4
        %v3561 = vrot.slane %v3557, 4
        %v3562 = vrot.slane %v3559, 4
        %v3563 = vsel %vm435, %v3560, %v3561
        %vm3564 = vcmask 1039360
        %v3565 = vsel %vm3564, %v3563, %v3557
        %v3566 = vsel %vm435, %v3561, %v3562
        %v3567 = vsel %vm3564, %v3566, %v3559
        %v3574 = vcombine.low %v3541, %v3545
        %v3575 = vcombine.low %v3549, %v3553
        %v3578 = vmul.f32 %v3565, %v3574
        %v3579 = vmul.f32 %v3567, %v3575
        %v3582 = vcombine.high %v3578, %v3578
        %v3583 = vcombine.high %v3579, %v3579
        %v3586 = vpack.c.bf16 %v3578, %v3578
        %v3587 = vpack.c.bf16 %v3582, %v3582
        %v3588 = vpack.c.bf16 %v3579, %v3579
        %v3589 = vpack.c.bf16 %v3583, %v3583
        %v3591 = vsel %vm475, %v361, 0
        %v3594 = vsel %vm479, %v3586, 0
        %v3597 = vsel %vm479, %v3587, 0
        %v3600 = vsel %vm479, %v3588, 0
        %v3603 = vsel %vm479, %v3589, 0
        %3605 = vmatprep.subr.bf16.mxu0 %v3597
        %3606 = vmatpush1.bf16.msra.mxu0 %v3594
        %3607 = vmatprep.subr.bf16.mxu0 0
        %3608 = vmatpush1.bf16.msra.mxu0 0
        %3609 = vmatprep.subr.bf16.mxu0 0
        %3610 = vmatpush1.bf16.msra.mxu0 0
        %3611 = vmatprep.subr.bf16.mxu0 0
        %3612 = vmatpush1.bf16.msra.mxu0 0
        %3613 = vmatprep.subr.bf16.mxu0 0
        %3614 = vmatpush1.bf16.msra.mxu0 0
        %3615 = vmatprep.subr.bf16.mxu0 0
        %3616 = vmatpush1.bf16.msra.mxu0 0
        %3617 = vmatprep.subr.bf16.mxu0 0
        %3618 = vmatpush1.bf16.msra.mxu0 0
        %3619 = vmatprep.subr.bf16.mxu0 0
        %3620 = vmatpush1.bf16.msra.mxu0 0
        %3621 = vmatprep.subr.bf16.mxu0 0
        %3622 = vmatpush1.bf16.msra.mxu0 0
        %3623 = vmatprep.subr.bf16.mxu0 0
        %3624 = vmatpush1.bf16.msra.mxu0 0
        %3625 = vmatprep.subr.bf16.mxu0 0
        %3626 = vmatpush1.bf16.msra.mxu0 0
        %3627 = vmatprep.subr.bf16.mxu0 0
        %3628 = vmatpush1.bf16.msra.mxu0 0
        %3629 = vmatprep.subr.bf16.mxu0 0
        %3630 = vmatpush1.bf16.msra.mxu0 0
        %3631 = vmatprep.subr.bf16.mxu0 0
        %3632 = vmatpush1.bf16.msra.mxu0 0
        %3633 = vmatprep.subr.bf16.mxu0 0
        %3634 = vmatpush1.bf16.msra.mxu0 0
        %3635 = vmatprep.subr.bf16.mxu0 0
        %3636 = vmatpush1.bf16.msra.mxu0 0
        %3637 = vmatprep.mubr.bf16.mxu0 0
        %3638 = vmatmul.mubr.bf16.gmra.mrb[0].mxu0 %v3591
        %v3639 = vpop.f32.mrb[0].mxu0
        %v3640 = vadd.f32 0.0, %v3639
        %v3641 = vpop.f32.mrb[0].mxu0
        %v3642 = vadd.f32 0.0, %v3641
        %v3643 = vpop.f32.mrb[0].mxu0
        %v3644 = vpop.f32.mrb[0].mxu0
        %3645 = vdwg.mxu0
        %3646 = vmatprep.subr.bf16.mxu0 %v3603
        %3647 = vmatpush1.bf16.msra.mxu0 %v3600
        %3648 = vmatprep.subr.bf16.mxu0 0
        %3649 = vmatpush1.bf16.msra.mxu0 0
        %3650 = vmatprep.subr.bf16.mxu0 0
        %3651 = vmatpush1.bf16.msra.mxu0 0
        %3652 = vmatprep.subr.bf16.mxu0 0
        %3653 = vmatpush1.bf16.msra.mxu0 0
        %3654 = vmatprep.subr.bf16.mxu0 0
        %3655 = vmatpush1.bf16.msra.mxu0 0
        %3656 = vmatprep.subr.bf16.mxu0 0
        %3657 = vmatpush1.bf16.msra.mxu0 0
        %3658 = vmatprep.subr.bf16.mxu0 0
        %3659 = vmatpush1.bf16.msra.mxu0 0
        %3660 = vmatprep.subr.bf16.mxu0 0
        %3661 = vmatpush1.bf16.msra.mxu0 0
        %3662 = vmatprep.subr.bf16.mxu0 0
        %3663 = vmatpush1.bf16.msra.mxu0 0
        %3664 = vmatprep.subr.bf16.mxu0 0
        %3665 = vmatpush1.bf16.msra.mxu0 0
        %3666 = vmatprep.subr.bf16.mxu0 0
        %3667 = vmatpush1.bf16.msra.mxu0 0
        %3668 = vmatprep.subr.bf16.mxu0 0
        %3669 = vmatpush1.bf16.msra.mxu0 0
        %3670 = vmatprep.subr.bf16.mxu0 0
        %3671 = vmatpush1.bf16.msra.mxu0 0
        %3672 = vmatprep.subr.bf16.mxu0 0
        %3673 = vmatpush1.bf16.msra.mxu0 0
        %3674 = vmatprep.subr.bf16.mxu0 0
        %3675 = vmatpush1.bf16.msra.mxu0 0
        %3676 = vmatprep.subr.bf16.mxu0 0
        %3677 = vmatpush1.bf16.msra.mxu0 0
        %3678 = vmatprep.mubr.bf16.mxu0 0
        %3679 = vmatmul.mubr.bf16.gmra.mrb[0].mxu0 %v3591
        %v3680 = vpop.f32.mrb[0].mxu0
        %v3681 = vadd.f32 0.0, %v3680
        %v3682 = vpop.f32.mrb[0].mxu0
        %v3683 = vadd.f32 0.0, %v3682
        %v3684 = vpop.f32.mrb[0].mxu0
        %v3685 = vpop.f32.mrb[0].mxu0
        %3686 = vdwg.mxu0
        %v3687 = vadd.f32 %v3534, %v3640
        %v3688 = vadd.f32 %v3535, %v3642
        %v3689 = vadd.f32 %v3536, %v3681
        %v3690 = vadd.f32 %v3537, %v3683
        %v3691 = vlaneseq
        %v3692 = vshrl.u32 %v3691, 7
        %v3693 = vsub.s32 4, %v3692
        %v3694 = vrot.slane %v334, %v3693
        %v3695 = vlaneseq
        %v3696 = vshrl.u32 %v3695, 7
        %v3697 = vsub.s32 4, %v3696
        %v3698 = vrot.slane %v335, %v3697
        %v3699 = vlaneseq
        %v3700 = vshrl.u32 %v3699, 7
        %v3701 = vsub.s32 4, %v3700
        %v3702 = vrot.slane %v336, %v3701
        %v3703 = vlaneseq
        %v3704 = vshrl.u32 %v3703, 7
        %v3705 = vsub.s32 4, %v3704
        %v3706 = vrot.slane %v337, %v3705
        %3707 = vrot.lane.b32.xlu0 %v323, 126
        %v3708 = vpop.permute.xlu0 %3707
        %3709 = vrot.lane.b32.xlu0 %v324, 126
        %v3710 = vpop.permute.xlu0 %3709
        %3711 = vrot.lane.b32.xlu0 %v325, 126
        %v3712 = vpop.permute.xlu0 %3711
        %v3713 = vrot.slane %v3708, 4
        %v3714 = vrot.slane %v3710, 4
        %v3715 = vrot.slane %v3712, 4
        %v3716 = vsel %vm435, %v3713, %v3714
        %vm3717 = vcmask 1031168
        %v3718 = vsel %vm3717, %v3716, %v3710
        %v3719 = vsel %vm435, %v3714, %v3715
        %v3720 = vsel %vm3717, %v3719, %v3712
        %v3727 = vcombine.low %v3694, %v3698
        %v3728 = vcombine.low %v3702, %v3706
        %v3731 = vmul.f32 %v3718, %v3727
        %v3732 = vmul.f32 %v3720, %v3728
        %v3735 = vcombine.high %v3731, %v3731
        %v3736 = vcombine.high %v3732, %v3732
        %v3739 = vpack.c.bf16 %v3731, %v3731
        %v3740 = vpack.c.bf16 %v3735, %v3735
        %v3741 = vpack.c.bf16 %v3732, %v3732
        %v3742 = vpack.c.bf16 %v3736, %v3736
        %v3744 = vsel %vm475, %v362, 0
        %v3747 = vsel %vm479, %v3739, 0
        %v3750 = vsel %vm479, %v3740, 0
        %v3753 = vsel %vm479, %v3741, 0
        %v3756 = vsel %vm479, %v3742, 0
        %3758 = vmatprep.subr.bf16.mxu0 %v3750
        %3759 = vmatpush1.bf16.msra.mxu0 %v3747
        %3760 = vmatprep.subr.bf16.mxu0 0
        %3761 = vmatpush1.bf16.msra.mxu0 0
        %3762 = vmatprep.subr.bf16.mxu0 0
        %3763 = vmatpush1.bf16.msra.mxu0 0
        %3764 = vmatprep.subr.bf16.mxu0 0
        %3765 = vmatpush1.bf16.msra.mxu0 0
        %3766 = vmatprep.subr.bf16.mxu0 0
        %3767 = vmatpush1.bf16.msra.mxu0 0
        %3768 = vmatprep.subr.bf16.mxu0 0
        %3769 = vmatpush1.bf16.msra.mxu0 0
        %3770 = vmatprep.subr.bf16.mxu0 0
        %3771 = vmatpush1.bf16.msra.mxu0 0
        %3772 = vmatprep.subr.bf16.mxu0 0
        %3773 = vmatpush1.bf16.msra.mxu0 0
        %3774 = vmatprep.subr.bf16.mxu0 0
        %3775 = vmatpush1.bf16.msra.mxu0 0
        %3776 = vmatprep.subr.bf16.mxu0 0
        %3777 = vmatpush1.bf16.msra.mxu0 0
        %3778 = vmatprep.subr.bf16.mxu0 0
        %3779 = vmatpush1.bf16.msra.mxu0 0
        %3780 = vmatprep.subr.bf16.mxu0 0
        %3781 = vmatpush1.bf16.msra.mxu0 0
        %3782 = vmatprep.subr.bf16.mxu0 0
        %3783 = vmatpush1.bf16.msra.mxu0 0
        %3784 = vmatprep.subr.bf16.mxu0 0
        %3785 = vmatpush1.bf16.msra.mxu0 0
        %3786 = vmatprep.subr.bf16.mxu0 0
        %3787 = vmatpush1.bf16.msra.mxu0 0
        %3788 = vmatprep.subr.bf16.mxu0 0
        %3789 = vmatpush1.bf16.msra.mxu0 0
        %3790 = vmatprep.mubr.bf16.mxu0 0
        %3791 = vmatmul.mubr.bf16.gmra.mrb[0].mxu0 %v3744
        %v3792 = vpop.f32.mrb[0].mxu0
        %v3793 = vadd.f32 0.0, %v3792
        %v3794 = vpop.f32.mrb[0].mxu0
        %v3795 = vadd.f32 0.0, %v3794
        %v3796 = vpop.f32.mrb[0].mxu0
        %v3797 = vpop.f32.mrb[0].mxu0
        %3798 = vdwg.mxu0
        %3799 = vmatprep.subr.bf16.mxu0 %v3756
        %3800 = vmatpush1.bf16.msra.mxu0 %v3753
        %3801 = vmatprep.subr.bf16.mxu0 0
        %3802 = vmatpush1.bf16.msra.mxu0 0
        %3803 = vmatprep.subr.bf16.mxu0 0
        %3804 = vmatpush1.bf16.msra.mxu0 0
        %3805 = vmatprep.subr.bf16.mxu0 0
        %3806 = vmatpush1.bf16.msra.mxu0 0
        %3807 = vmatprep.subr.bf16.mxu0 0
        %3808 = vmatpush1.bf16.msra.mxu0 0
        %3809 = vmatprep.subr.bf16.mxu0 0
        %3810 = vmatpush1.bf16.msra.mxu0 0
        %3811 = vmatprep.subr.bf16.mxu0 0
        %3812 = vmatpush1.bf16.msra.mxu0 0
        %3813 = vmatprep.subr.bf16.mxu0 0
        %3814 = vmatpush1.bf16.msra.mxu0 0
        %3815 = vmatprep.subr.bf16.mxu0 0
        %3816 = vmatpush1.bf16.msra.mxu0 0
        %3817 = vmatprep.subr.bf16.mxu0 0
        %3818 = vmatpush1.bf16.msra.mxu0 0
        %3819 = vmatprep.subr.bf16.mxu0 0
        %3820 = vmatpush1.bf16.msra.mxu0 0
        %3821 = vmatprep.subr.bf16.mxu0 0
        %3822 = vmatpush1.bf16.msra.mxu0 0
        %3823 = vmatprep.subr.bf16.mxu0 0
        %3824 = vmatpush1.bf16.msra.mxu0 0
        %3825 = vmatprep.subr.bf16.mxu0 0
        %3826 = vmatpush1.bf16.msra.mxu0 0
        %3827 = vmatprep.subr.bf16.mxu0 0
        %3828 = vmatpush1.bf16.msra.mxu0 0
        %3829 = vmatprep.subr.bf16.mxu0 0
        %3830 = vmatpush1.bf16.msra.mxu0 0
        %3831 = vmatprep.mubr.bf16.mxu0 0
        %3832 = vmatmul.mubr.bf16.gmra.mrb[0].mxu0 %v3744
        %v3833 = vpop.f32.mrb[0].mxu0
        %v3834 = vadd.f32 0.0, %v3833
        %v3835 = vpop.f32.mrb[0].mxu0
        %v3836 = vadd.f32 0.0, %v3835
        %v3837 = vpop.f32.mrb[0].mxu0
        %v3838 = vpop.f32.mrb[0].mxu0
        %3839 = vdwg.mxu0
        %v3840 = vadd.f32 %v3687, %v3793
        %v3841 = vadd.f32 %v3688, %v3795
        %v3842 = vadd.f32 %v3689, %v3834
        %v3843 = vadd.f32 %v3690, %v3836
        %v3844 = vlaneseq
        %v3845 = vshrl.u32 %v3844, 7
        %v3846 = vsub.s32 5, %v3845
        %v3847 = vrot.slane %v334, %v3846
        %v3848 = vlaneseq
        %v3849 = vshrl.u32 %v3848, 7
        %v3850 = vsub.s32 5, %v3849
        %v3851 = vrot.slane %v335, %v3850
        %v3852 = vlaneseq
        %v3853 = vshrl.u32 %v3852, 7
        %v3854 = vsub.s32 5, %v3853
        %v3855 = vrot.slane %v336, %v3854
        %v3856 = vlaneseq
        %v3857 = vshrl.u32 %v3856, 7
        %v3858 = vsub.s32 5, %v3857
        %v3859 = vrot.slane %v337, %v3858
        %3860 = vrot.lane.b32.xlu0 %v323, 120
        %v3861 = vpop.permute.xlu0 %3860
        %3862 = vrot.lane.b32.xlu0 %v324, 120
        %v3863 = vpop.permute.xlu0 %3862
        %3864 = vrot.lane.b32.xlu0 %v325, 120
        %v3865 = vpop.permute.xlu0 %3864
        %v3866 = vrot.slane %v3861, 4
        %v3867 = vrot.slane %v3863, 4
        %v3868 = vrot.slane %v3865, 4
        %v3869 = vsel %vm435, %v3866, %v3867
        %vm3870 = vcmask 982016
        %v3871 = vsel %vm3870, %v3869, %v3863
        %v3872 = vsel %vm435, %v3867, %v3868
        %v3873 = vsel %vm3870, %v3872, %v3865
        %v3880 = vcombine.low %v3847, %v3851
        %v3881 = vcombine.low %v3855, %v3859
        %v3884 = vmul.f32 %v3871, %v3880
        %v3885 = vmul.f32 %v3873, %v3881
        %v3888 = vcombine.high %v3884, %v3884
        %v3889 = vcombine.high %v3885, %v3885
        %v3892 = vpack.c.bf16 %v3884, %v3884
        %v3893 = vpack.c.bf16 %v3888, %v3888
        %v3894 = vpack.c.bf16 %v3885, %v3885
        %v3895 = vpack.c.bf16 %v3889, %v3889
        %v3897 = vsel %vm475, %v363, 0
        %v3900 = vsel %vm479, %v3892, 0
        %v3903 = vsel %vm479, %v3893, 0
        %v3906 = vsel %vm479, %v3894, 0
        %v3909 = vsel %vm479, %v3895, 0
        %3911 = vmatprep.subr.bf16.mxu0 %v3903
        %3912 = vmatpush1.bf16.msra.mxu0 %v3900
        %3913 = vmatprep.subr.bf16.mxu0 0
        %3914 = vmatpush1.bf16.msra.mxu0 0
        %3915 = vmatprep.subr.bf16.mxu0 0
        %3916 = vmatpush1.bf16.msra.mxu0 0
        %3917 = vmatprep.subr.bf16.mxu0 0
        %3918 = vmatpush1.bf16.msra.mxu0 0
        %3919 = vmatprep.subr.bf16.mxu0 0
        %3920 = vmatpush1.bf16.msra.mxu0 0
        %3921 = vmatprep.subr.bf16.mxu0 0
        %3922 = vmatpush1.bf16.msra.mxu0 0
        %3923 = vmatprep.subr.bf16.mxu0 0
        %3924 = vmatpush1.bf16.msra.mxu0 0
        %3925 = vmatprep.subr.bf16.mxu0 0
        %3926 = vmatpush1.bf16.msra.mxu0 0
        %3927 = vmatprep.subr.bf16.mxu0 0
        %3928 = vmatpush1.bf16.msra.mxu0 0
        %3929 = vmatprep.subr.bf16.mxu0 0
        %3930 = vmatpush1.bf16.msra.mxu0 0
        %3931 = vmatprep.subr.bf16.mxu0 0
        %3932 = vmatpush1.bf16.msra.mxu0 0
        %3933 = vmatprep.subr.bf16.mxu0 0
        %3934 = vmatpush1.bf16.msra.mxu0 0
        %3935 = vmatprep.subr.bf16.mxu0 0
        %3936 = vmatpush1.bf16.msra.mxu0 0
        %3937 = vmatprep.subr.bf16.mxu0 0
        %3938 = vmatpush1.bf16.msra.mxu0 0
        %3939 = vmatprep.subr.bf16.mxu0 0
        %3940 = vmatpush1.bf16.msra.mxu0 0
        %3941 = vmatprep.subr.bf16.mxu0 0
        %3942 = vmatpush1.bf16.msra.mxu0 0
        %3943 = vmatprep.mubr.bf16.mxu0 0
        %3944 = vmatmul.mubr.bf16.gmra.mrb[0].mxu0 %v3897
        %v3945 = vpop.f32.mrb[0].mxu0
        %v3946 = vadd.f32 0.0, %v3945
        %v3947 = vpop.f32.mrb[0].mxu0
        %v3948 = vadd.f32 0.0, %v3947
        %v3949 = vpop.f32.mrb[0].mxu0
        %v3950 = vpop.f32.mrb[0].mxu0
        %3951 = vdwg.mxu0
        %3952 = vmatprep.subr.bf16.mxu0 %v3909
        %3953 = vmatpush1.bf16.msra.mxu0 %v3906
        %3954 = vmatprep.subr.bf16.mxu0 0
        %3955 = vmatpush1.bf16.msra.mxu0 0
        %3956 = vmatprep.subr.bf16.mxu0 0
        %3957 = vmatpush1.bf16.msra.mxu0 0
        %3958 = vmatprep.subr.bf16.mxu0 0
        %3959 = vmatpush1.bf16.msra.mxu0 0
        %3960 = vmatprep.subr.bf16.mxu0 0
        %3961 = vmatpush1.bf16.msra.mxu0 0
        %3962 = vmatprep.subr.bf16.mxu0 0
        %3963 = vmatpush1.bf16.msra.mxu0 0
        %3964 = vmatprep.subr.bf16.mxu0 0
        %3965 = vmatpush1.bf16.msra.mxu0 0
        %3966 = vmatprep.subr.bf16.mxu0 0
        %3967 = vmatpush1.bf16.msra.mxu0 0
        %3968 = vmatprep.subr.bf16.mxu0 0
        %3969 = vmatpush1.bf16.msra.mxu0 0
        %3970 = vmatprep.subr.bf16.mxu0 0
        %3971 = vmatpush1.bf16.msra.mxu0 0
        %3972 = vmatprep.subr.bf16.mxu0 0
        %3973 = vmatpush1.bf16.msra.mxu0 0
        %3974 = vmatprep.subr.bf16.mxu0 0
        %3975 = vmatpush1.bf16.msra.mxu0 0
        %3976 = vmatprep.subr.bf16.mxu0 0
        %3977 = vmatpush1.bf16.msra.mxu0 0
        %3978 = vmatprep.subr.bf16.mxu0 0
        %3979 = vmatpush1.bf16.msra.mxu0 0
        %3980 = vmatprep.subr.bf16.mxu0 0
        %3981 = vmatpush1.bf16.msra.mxu0 0
        %3982 = vmatprep.subr.bf16.mxu0 0
        %3983 = vmatpush1.bf16.msra.mxu0 0
        %3984 = vmatprep.mubr.bf16.mxu0 0
        %3985 = vmatmul.mubr.bf16.gmra.mrb[0].mxu0 %v3897
        %v3986 = vpop.f32.mrb[0].mxu0
        %v3987 = vadd.f32 0.0, %v3986
        %v3988 = vpop.f32.mrb[0].mxu0
        %v3989 = vadd.f32 0.0, %v3988
        %v3990 = vpop.f32.mrb[0].mxu0
        %v3991 = vpop.f32.mrb[0].mxu0
        %3992 = vdwg.mxu0
        %v3993 = vadd.f32 %v3840, %v3946
        %v3994 = vadd.f32 %v3841, %v3948
        %v3995 = vadd.f32 %v3842, %v3987
        %v3996 = vadd.f32 %v3843, %v3989
        %v3997 = vlaneseq
        %v3998 = vshrl.u32 %v3997, 7
        %v3999 = vsub.s32 6, %v3998
        %v4000 = vrot.slane %v334, %v3999
        %v4001 = vlaneseq
        %v4002 = vshrl.u32 %v4001, 7
        %v4003 = vsub.s32 6, %v4002
        %v4004 = vrot.slane %v335, %v4003
        %v4005 = vlaneseq
        %v4006 = vshrl.u32 %v4005, 7
        %v4007 = vsub.s32 6, %v4006
        %v4008 = vrot.slane %v336, %v4007
        %v4009 = vlaneseq
        %v4010 = vshrl.u32 %v4009, 7
        %v4011 = vsub.s32 6, %v4010
        %v4012 = vrot.slane %v337, %v4011
        %4013 = vrot.lane.b32.xlu0 %v323, 119
        %v4014 = vpop.permute.xlu0 %4013
        %4015 = vrot.lane.b32.xlu0 %v324, 119
        %v4016 = vpop.permute.xlu0 %4015
        %4017 = vrot.lane.b32.xlu0 %v325, 119
        %v4018 = vpop.permute.xlu0 %4017
        %v4019 = vrot.slane %v4014, 4
        %v4020 = vrot.slane %v4016, 4
        %v4021 = vrot.slane %v4018, 4
        %v4022 = vsel %vm435, %v4019, %v4020
        %vm4023 = vcmask 973824
        %v4024 = vsel %vm4023, %v4022, %v4016
        %v4025 = vsel %vm435, %v4020, %v4021
        %v4026 = vsel %vm4023, %v4025, %v4018
        %v4033 = vcombine.low %v4000, %v4004
        %v4034 = vcombine.low %v4008, %v4012
        %v4037 = vmul.f32 %v4024, %v4033
        %v4038 = vmul.f32 %v4026, %v4034
        %v4041 = vcombine.high %v4037, %v4037
        %v4042 = vcombine.high %v4038, %v4038
        %v4045 = vpack.c.bf16 %v4037, %v4037
        %v4046 = vpack.c.bf16 %v4041, %v4041
        %v4047 = vpack.c.bf16 %v4038, %v4038
        %v4048 = vpack.c.bf16 %v4042, %v4042
        %v4050 = vsel %vm475, %v364, 0
        %v4053 = vsel %vm479, %v4045, 0
        %v4056 = vsel %vm479, %v4046, 0
        %v4059 = vsel %vm479, %v4047, 0
        %v4062 = vsel %vm479, %v4048, 0
        %4064 = vmatprep.subr.bf16.mxu0 %v4056
        %4065 = vmatpush1.bf16.msra.mxu0 %v4053
        %4066 = vmatprep.subr.bf16.mxu0 0
        %4067 = vmatpush1.bf16.msra.mxu0 0
        %4068 = vmatprep.subr.bf16.mxu0 0
        %4069 = vmatpush1.bf16.msra.mxu0 0
        %4070 = vmatprep.subr.bf16.mxu0 0
        %4071 = vmatpush1.bf16.msra.mxu0 0
        %4072 = vmatprep.subr.bf16.mxu0 0
        %4073 = vmatpush1.bf16.msra.mxu0 0
        %4074 = vmatprep.subr.bf16.mxu0 0
        %4075 = vmatpush1.bf16.msra.mxu0 0
        %4076 = vmatprep.subr.bf16.mxu0 0
        %4077 = vmatpush1.bf16.msra.mxu0 0
        %4078 = vmatprep.subr.bf16.mxu0 0
        %4079 = vmatpush1.bf16.msra.mxu0 0
        %4080 = vmatprep.subr.bf16.mxu0 0
        %4081 = vmatpush1.bf16.msra.mxu0 0
        %4082 = vmatprep.subr.bf16.mxu0 0
        %4083 = vmatpush1.bf16.msra.mxu0 0
        %4084 = vmatprep.subr.bf16.mxu0 0
        %4085 = vmatpush1.bf16.msra.mxu0 0
        %4086 = vmatprep.subr.bf16.mxu0 0
        %4087 = vmatpush1.bf16.msra.mxu0 0
        %4088 = vmatprep.subr.bf16.mxu0 0
        %4089 = vmatpush1.bf16.msra.mxu0 0
        %4090 = vmatprep.subr.bf16.mxu0 0
        %4091 = vmatpush1.bf16.msra.mxu0 0
        %4092 = vmatprep.subr.bf16.mxu0 0
        %4093 = vmatpush1.bf16.msra.mxu0 0
        %4094 = vmatprep.subr.bf16.mxu0 0
        %4095 = vmatpush1.bf16.msra.mxu0 0
        %4096 = vmatprep.mubr.bf16.mxu0 0
        %4097 = vmatmul.mubr.bf16.gmra.mrb[0].mxu0 %v4050
        %v4098 = vpop.f32.mrb[0].mxu0
        %v4099 = vadd.f32 0.0, %v4098
        %v4100 = vpop.f32.mrb[0].mxu0
        %v4101 = vadd.f32 0.0, %v4100
        %v4102 = vpop.f32.mrb[0].mxu0
        %v4103 = vpop.f32.mrb[0].mxu0
        %4104 = vdwg.mxu0
        %4105 = vmatprep.subr.bf16.mxu0 %v4062
        %4106 = vmatpush1.bf16.msra.mxu0 %v4059
        %4107 = vmatprep.subr.bf16.mxu0 0
        %4108 = vmatpush1.bf16.msra.mxu0 0
        %4109 = vmatprep.subr.bf16.mxu0 0
        %4110 = vmatpush1.bf16.msra.mxu0 0
        %4111 = vmatprep.subr.bf16.mxu0 0
        %4112 = vmatpush1.bf16.msra.mxu0 0
        %4113 = vmatprep.subr.bf16.mxu0 0
        %4114 = vmatpush1.bf16.msra.mxu0 0
        %4115 = vmatprep.subr.bf16.mxu0 0
        %4116 = vmatpush1.bf16.msra.mxu0 0
        %4117 = vmatprep.subr.bf16.mxu0 0
        %4118 = vmatpush1.bf16.msra.mxu0 0
        %4119 = vmatprep.subr.bf16.mxu0 0
        %4120 = vmatpush1.bf16.msra.mxu0 0
        %4121 = vmatprep.subr.bf16.mxu0 0
        %4122 = vmatpush1.bf16.msra.mxu0 0
        %4123 = vmatprep.subr.bf16.mxu0 0
        %4124 = vmatpush1.bf16.msra.mxu0 0
        %4125 = vmatprep.subr.bf16.mxu0 0
        %4126 = vmatpush1.bf16.msra.mxu0 0
        %4127 = vmatprep.subr.bf16.mxu0 0
        %4128 = vmatpush1.bf16.msra.mxu0 0
        %4129 = vmatprep.subr.bf16.mxu0 0
        %4130 = vmatpush1.bf16.msra.mxu0 0
        %4131 = vmatprep.subr.bf16.mxu0 0
        %4132 = vmatpush1.bf16.msra.mxu0 0
        %4133 = vmatprep.subr.bf16.mxu0 0
        %4134 = vmatpush1.bf16.msra.mxu0 0
        %4135 = vmatprep.subr.bf16.mxu0 0
        %4136 = vmatpush1.bf16.msra.mxu0 0
        %4137 = vmatprep.mubr.bf16.mxu0 0
        %4138 = vmatmul.mubr.bf16.gmra.mrb[0].mxu0 %v4050
        %v4139 = vpop.f32.mrb[0].mxu0
        %v4140 = vadd.f32 0.0, %v4139
        %v4141 = vpop.f32.mrb[0].mxu0
        %v4142 = vadd.f32 0.0, %v4141
        %v4143 = vpop.f32.mrb[0].mxu0
        %v4144 = vpop.f32.mrb[0].mxu0
        %4145 = vdwg.mxu0
        %v4146 = vadd.f32 %v3993, %v4099
        %v4147 = vadd.f32 %v3994, %v4101
        %v4148 = vadd.f32 %v3995, %v4140
        %v4149 = vadd.f32 %v3996, %v4142
        %v4150 = vlaneseq
        %v4151 = vshrl.u32 %v4150, 7
        %v4152 = vsub.s32 7, %v4151
        %v4153 = vrot.slane %v334, %v4152
        %v4154 = vlaneseq
        %v4155 = vshrl.u32 %v4154, 7
        %v4156 = vsub.s32 7, %v4155
        %v4157 = vrot.slane %v335, %v4156
        %v4158 = vlaneseq
        %v4159 = vshrl.u32 %v4158, 7
        %v4160 = vsub.s32 7, %v4159
        %v4161 = vrot.slane %v336, %v4160
        %v4162 = vlaneseq
        %v4163 = vshrl.u32 %v4162, 7
        %v4164 = vsub.s32 7, %v4163
        %v4165 = vrot.slane %v337, %v4164
        %4166 = vrot.lane.b32.xlu0 %v323, 118
        %v4167 = vpop.permute.xlu0 %4166
        %4168 = vrot.lane.b32.xlu0 %v324, 118
        %v4169 = vpop.permute.xlu0 %4168
        %4170 = vrot.lane.b32.xlu0 %v325, 118
        %v4171 = vpop.permute.xlu0 %4170
        %v4172 = vrot.slane %v4167, 4
        %v4173 = vrot.slane %v4169, 4
        %v4174 = vrot.slane %v4171, 4
        %v4175 = vsel %vm435, %v4172, %v4173
        %vm4176 = vcmask 965632
        %v4177 = vsel %vm4176, %v4175, %v4169
        %v4178 = vsel %vm435, %v4173, %v4174
        %v4179 = vsel %vm4176, %v4178, %v4171
        %v4186 = vcombine.low %v4153, %v4157
        %v4187 = vcombine.low %v4161, %v4165
        %v4190 = vmul.f32 %v4177, %v4186
        %v4191 = vmul.f32 %v4179, %v4187
        %v4194 = vcombine.high %v4190, %v4190
        %v4195 = vcombine.high %v4191, %v4191
        %v4198 = vpack.c.bf16 %v4190, %v4190
        %v4199 = vpack.c.bf16 %v4194, %v4194
        %v4200 = vpack.c.bf16 %v4191, %v4191
        %v4201 = vpack.c.bf16 %v4195, %v4195
        %v4203 = vsel %vm475, %v365, 0
        %v4206 = vsel %vm479, %v4198, 0
        %v4209 = vsel %vm479, %v4199, 0
        %v4212 = vsel %vm479, %v4200, 0
        %v4215 = vsel %vm479, %v4201, 0
        %4217 = vmatprep.subr.bf16.mxu0 %v4209
        %4218 = vmatpush1.bf16.msra.mxu0 %v4206
        %4219 = vmatprep.subr.bf16.mxu0 0
        %4220 = vmatpush1.bf16.msra.mxu0 0
        %4221 = vmatprep.subr.bf16.mxu0 0
        %4222 = vmatpush1.bf16.msra.mxu0 0
        %4223 = vmatprep.subr.bf16.mxu0 0
        %4224 = vmatpush1.bf16.msra.mxu0 0
        %4225 = vmatprep.subr.bf16.mxu0 0
        %4226 = vmatpush1.bf16.msra.mxu0 0
        %4227 = vmatprep.subr.bf16.mxu0 0
        %4228 = vmatpush1.bf16.msra.mxu0 0
        %4229 = vmatprep.subr.bf16.mxu0 0
        %4230 = vmatpush1.bf16.msra.mxu0 0
        %4231 = vmatprep.subr.bf16.mxu0 0
        %4232 = vmatpush1.bf16.msra.mxu0 0
        %4233 = vmatprep.subr.bf16.mxu0 0
        %4234 = vmatpush1.bf16.msra.mxu0 0
        %4235 = vmatprep.subr.bf16.mxu0 0
        %4236 = vmatpush1.bf16.msra.mxu0 0
        %4237 = vmatprep.subr.bf16.mxu0 0
        %4238 = vmatpush1.bf16.msra.mxu0 0
        %4239 = vmatprep.subr.bf16.mxu0 0
        %4240 = vmatpush1.bf16.msra.mxu0 0
        %4241 = vmatprep.subr.bf16.mxu0 0
        %4242 = vmatpush1.bf16.msra.mxu0 0
        %4243 = vmatprep.subr.bf16.mxu0 0
        %4244 = vmatpush1.bf16.msra.mxu0 0
        %4245 = vmatprep.subr.bf16.mxu0 0
        %4246 = vmatpush1.bf16.msra.mxu0 0
        %4247 = vmatprep.subr.bf16.mxu0 0
        %4248 = vmatpush1.bf16.msra.mxu0 0
        %4249 = vmatprep.mubr.bf16.mxu0 0
        %4250 = vmatmul.mubr.bf16.gmra.mrb[0].mxu0 %v4203
        %v4251 = vpop.f32.mrb[0].mxu0
        %v4252 = vadd.f32 0.0, %v4251
        %v4253 = vpop.f32.mrb[0].mxu0
        %v4254 = vadd.f32 0.0, %v4253
        %v4255 = vpop.f32.mrb[0].mxu0
        %v4256 = vpop.f32.mrb[0].mxu0
        %4257 = vdwg.mxu0
        %4258 = vmatprep.subr.bf16.mxu0 %v4215
        %4259 = vmatpush1.bf16.msra.mxu0 %v4212
        %4260 = vmatprep.subr.bf16.mxu0 0
        %4261 = vmatpush1.bf16.msra.mxu0 0
        %4262 = vmatprep.subr.bf16.mxu0 0
        %4263 = vmatpush1.bf16.msra.mxu0 0
        %4264 = vmatprep.subr.bf16.mxu0 0
        %4265 = vmatpush1.bf16.msra.mxu0 0
        %4266 = vmatprep.subr.bf16.mxu0 0
        %4267 = vmatpush1.bf16.msra.mxu0 0
        %4268 = vmatprep.subr.bf16.mxu0 0
        %4269 = vmatpush1.bf16.msra.mxu0 0
        %4270 = vmatprep.subr.bf16.mxu0 0
        %4271 = vmatpush1.bf16.msra.mxu0 0
        %4272 = vmatprep.subr.bf16.mxu0 0
        %4273 = vmatpush1.bf16.msra.mxu0 0
        %4274 = vmatprep.subr.bf16.mxu0 0
        %4275 = vmatpush1.bf16.msra.mxu0 0
        %4276 = vmatprep.subr.bf16.mxu0 0
        %4277 = vmatpush1.bf16.msra.mxu0 0
        %4278 = vmatprep.subr.bf16.mxu0 0
        %4279 = vmatpush1.bf16.msra.mxu0 0
        %4280 = vmatprep.subr.bf16.mxu0 0
        %4281 = vmatpush1.bf16.msra.mxu0 0
        %4282 = vmatprep.subr.bf16.mxu0 0
        %4283 = vmatpush1.bf16.msra.mxu0 0
        %4284 = vmatprep.subr.bf16.mxu0 0
        %4285 = vmatpush1.bf16.msra.mxu0 0
        %4286 = vmatprep.subr.bf16.mxu0 0
        %4287 = vmatpush1.bf16.msra.mxu0 0
        %4288 = vmatprep.subr.bf16.mxu0 0
        %4289 = vmatpush1.bf16.msra.mxu0 0
        %4290 = vmatprep.mubr.bf16.mxu0 0
        %4291 = vmatmul.mubr.bf16.gmra.mrb[0].mxu0 %v4203
        %v4292 = vpop.f32.mrb[0].mxu0
        %v4293 = vadd.f32 0.0, %v4292
        %v4294 = vpop.f32.mrb[0].mxu0
        %v4295 = vadd.f32 0.0, %v4294
        %v4296 = vpop.f32.mrb[0].mxu0
        %v4297 = vpop.f32.mrb[0].mxu0
        %4298 = vdwg.mxu0
        %v4299 = vadd.f32 %v4146, %v4252
        %v4300 = vadd.f32 %v4147, %v4254
        %v4301 = vadd.f32 %v4148, %v4293
        %v4302 = vadd.f32 %v4149, %v4295
        %v4303 = vlaneseq
        %v4304 = vshrl.u32 %v4303, 7
        %v4305 = vsub.s32 0, %v4304
        %v4306 = vrot.slane %v338, %v4305
        %v4307 = vlaneseq
        %v4308 = vshrl.u32 %v4307, 7
        %v4309 = vsub.s32 0, %v4308
        %v4310 = vrot.slane %v339, %v4309
        %v4311 = vlaneseq
        %v4312 = vshrl.u32 %v4311, 7
        %v4313 = vsub.s32 0, %v4312
        %v4314 = vrot.slane %v340, %v4313
        %v4315 = vlaneseq
        %v4316 = vshrl.u32 %v4315, 7
        %v4317 = vsub.s32 0, %v4316
        %v4318 = vrot.slane %v341, %v4317
        %4319 = vrot.lane.b32.xlu0 %v323, 112
        %v4320 = vpop.permute.xlu0 %4319
        %4321 = vrot.lane.b32.xlu0 %v324, 112
        %v4322 = vpop.permute.xlu0 %4321
        %4323 = vrot.lane.b32.xlu0 %v325, 112
        %v4324 = vpop.permute.xlu0 %4323
        %v4325 = vrot.slane %v4320, 4
        %v4326 = vrot.slane %v4322, 4
        %v4327 = vrot.slane %v4324, 4
        %v4328 = vsel %vm435, %v4325, %v4326
        %vm4329 = vcmask 916480
        %v4330 = vsel %vm4329, %v4328, %v4322
        %v4331 = vsel %vm435, %v4326, %v4327
        %v4332 = vsel %vm4329, %v4331, %v4324
        %v4339 = vcombine.low %v4306, %v4310
        %v4340 = vcombine.low %v4314, %v4318
        %v4343 = vmul.f32 %v4330, %v4339
        %v4344 = vmul.f32 %v4332, %v4340
        %v4347 = vcombine.high %v4343, %v4343
        %v4348 = vcombine.high %v4344, %v4344
        %v4351 = vpack.c.bf16 %v4343, %v4343
        %v4352 = vpack.c.bf16 %v4347, %v4347
        %v4353 = vpack.c.bf16 %v4344, %v4344
        %v4354 = vpack.c.bf16 %v4348, %v4348
        %v4356 = vsel %vm475, %v366, 0
        %v4359 = vsel %vm479, %v4351, 0
        %v4362 = vsel %vm479, %v4352, 0
        %v4365 = vsel %vm479, %v4353, 0
        %v4368 = vsel %vm479, %v4354, 0
        %4370 = vmatprep.subr.bf16.mxu0 %v4362
        %4371 = vmatpush1.bf16.msra.mxu0 %v4359
        %4372 = vmatprep.subr.bf16.mxu0 0
        %4373 = vmatpush1.bf16.msra.mxu0 0
        %4374 = vmatprep.subr.bf16.mxu0 0
        %4375 = vmatpush1.bf16.msra.mxu0 0
        %4376 = vmatprep.subr.bf16.mxu0 0
        %4377 = vmatpush1.bf16.msra.mxu0 0
        %4378 = vmatprep.subr.bf16.mxu0 0
        %4379 = vmatpush1.bf16.msra.mxu0 0
        %4380 = vmatprep.subr.bf16.mxu0 0
        %4381 = vmatpush1.bf16.msra.mxu0 0
        %4382 = vmatprep.subr.bf16.mxu0 0
        %4383 = vmatpush1.bf16.msra.mxu0 0
        %4384 = vmatprep.subr.bf16.mxu0 0
        %4385 = vmatpush1.bf16.msra.mxu0 0
        %4386 = vmatprep.subr.bf16.mxu0 0
        %4387 = vmatpush1.bf16.msra.mxu0 0
        %4388 = vmatprep.subr.bf16.mxu0 0
        %4389 = vmatpush1.bf16.msra.mxu0 0
        %4390 = vmatprep.subr.bf16.mxu0 0
        %4391 = vmatpush1.bf16.msra.mxu0 0
        %4392 = vmatprep.subr.bf16.mxu0 0
        %4393 = vmatpush1.bf16.msra.mxu0 0
        %4394 = vmatprep.subr.bf16.mxu0 0
        %4395 = vmatpush1.bf16.msra.mxu0 0
        %4396 = vmatprep.subr.bf16.mxu0 0
        %4397 = vmatpush1.bf16.msra.mxu0 0
        %4398 = vmatprep.subr.bf16.mxu0 0
        %4399 = vmatpush1.bf16.msra.mxu0 0
        %4400 = vmatprep.subr.bf16.mxu0 0
        %4401 = vmatpush1.bf16.msra.mxu0 0
        %4402 = vmatprep.mubr.bf16.mxu0 0
        %4403 = vmatmul.mubr.bf16.gmra.mrb[0].mxu0 %v4356
        %v4404 = vpop.f32.mrb[0].mxu0
        %v4405 = vadd.f32 0.0, %v4404
        %v4406 = vpop.f32.mrb[0].mxu0
        %v4407 = vadd.f32 0.0, %v4406
        %v4408 = vpop.f32.mrb[0].mxu0
        %v4409 = vpop.f32.mrb[0].mxu0
        %4410 = vdwg.mxu0
        %4411 = vmatprep.subr.bf16.mxu0 %v4368
        %4412 = vmatpush1.bf16.msra.mxu0 %v4365
        %4413 = vmatprep.subr.bf16.mxu0 0
        %4414 = vmatpush1.bf16.msra.mxu0 0
        %4415 = vmatprep.subr.bf16.mxu0 0
        %4416 = vmatpush1.bf16.msra.mxu0 0
        %4417 = vmatprep.subr.bf16.mxu0 0
        %4418 = vmatpush1.bf16.msra.mxu0 0
        %4419 = vmatprep.subr.bf16.mxu0 0
        %4420 = vmatpush1.bf16.msra.mxu0 0
        %4421 = vmatprep.subr.bf16.mxu0 0
        %4422 = vmatpush1.bf16.msra.mxu0 0
        %4423 = vmatprep.subr.bf16.mxu0 0
        %4424 = vmatpush1.bf16.msra.mxu0 0
        %4425 = vmatprep.subr.bf16.mxu0 0
        %4426 = vmatpush1.bf16.msra.mxu0 0
        %4427 = vmatprep.subr.bf16.mxu0 0
        %4428 = vmatpush1.bf16.msra.mxu0 0
        %4429 = vmatprep.subr.bf16.mxu0 0
        %4430 = vmatpush1.bf16.msra.mxu0 0
        %4431 = vmatprep.subr.bf16.mxu0 0
        %4432 = vmatpush1.bf16.msra.mxu0 0
        %4433 = vmatprep.subr.bf16.mxu0 0
        %4434 = vmatpush1.bf16.msra.mxu0 0
        %4435 = vmatprep.subr.bf16.mxu0 0
        %4436 = vmatpush1.bf16.msra.mxu0 0
        %4437 = vmatprep.subr.bf16.mxu0 0
        %4438 = vmatpush1.bf16.msra.mxu0 0
        %4439 = vmatprep.subr.bf16.mxu0 0
        %4440 = vmatpush1.bf16.msra.mxu0 0
        %4441 = vmatprep.subr.bf16.mxu0 0
        %4442 = vmatpush1.bf16.msra.mxu0 0
        %4443 = vmatprep.mubr.bf16.mxu0 0
        %4444 = vmatmul.mubr.bf16.gmra.mrb[0].mxu0 %v4356
        %v4445 = vpop.f32.mrb[0].mxu0
        %v4446 = vadd.f32 0.0, %v4445
        %v4447 = vpop.f32.mrb[0].mxu0
        %v4448 = vadd.f32 0.0, %v4447
        %v4449 = vpop.f32.mrb[0].mxu0
        %v4450 = vpop.f32.mrb[0].mxu0
        %4451 = vdwg.mxu0
        %v4452 = vadd.f32 %v4299, %v4405
        %v4453 = vadd.f32 %v4300, %v4407
        %v4454 = vadd.f32 %v4301, %v4446
        %v4455 = vadd.f32 %v4302, %v4448
        %v4456 = vlaneseq
        %v4457 = vshrl.u32 %v4456, 7
        %v4458 = vsub.s32 1, %v4457
        %v4459 = vrot.slane %v338, %v4458
        %v4460 = vlaneseq
        %v4461 = vshrl.u32 %v4460, 7
        %v4462 = vsub.s32 1, %v4461
        %v4463 = vrot.slane %v339, %v4462
        %v4464 = vlaneseq
        %v4465 = vshrl.u32 %v4464, 7
        %v4466 = vsub.s32 1, %v4465
        %v4467 = vrot.slane %v340, %v4466
        %v4468 = vlaneseq
        %v4469 = vshrl.u32 %v4468, 7
        %v4470 = vsub.s32 1, %v4469
        %v4471 = vrot.slane %v341, %v4470
        %4472 = vrot.lane.b32.xlu0 %v323, 111
        %v4473 = vpop.permute.xlu0 %4472
        %4474 = vrot.lane.b32.xlu0 %v324, 111
        %v4475 = vpop.permute.xlu0 %4474
        %4476 = vrot.lane.b32.xlu0 %v325, 111
        %v4477 = vpop.permute.xlu0 %4476
        %v4478 = vrot.slane %v4473, 4
        %v4479 = vrot.slane %v4475, 4
        %v4480 = vrot.slane %v4477, 4
        %v4481 = vsel %vm435, %v4478, %v4479
        %vm4482 = vcmask 908288
        %v4483 = vsel %vm4482, %v4481, %v4475
        %v4484 = vsel %vm435, %v4479, %v4480
        %v4485 = vsel %vm4482, %v4484, %v4477
        %v4492 = vcombine.low %v4459, %v4463
        %v4493 = vcombine.low %v4467, %v4471
        %v4496 = vmul.f32 %v4483, %v4492
        %v4497 = vmul.f32 %v4485, %v4493
        %v4500 = vcombine.high %v4496, %v4496
        %v4501 = vcombine.high %v4497, %v4497
        %v4504 = vpack.c.bf16 %v4496, %v4496
        %v4505 = vpack.c.bf16 %v4500, %v4500
        %v4506 = vpack.c.bf16 %v4497, %v4497
        %v4507 = vpack.c.bf16 %v4501, %v4501
        %v4509 = vsel %vm475, %v367, 0
        %v4512 = vsel %vm479, %v4504, 0
        %v4515 = vsel %vm479, %v4505, 0
        %v4518 = vsel %vm479, %v4506, 0
        %v4521 = vsel %vm479, %v4507, 0
        %4523 = vmatprep.subr.bf16.mxu0 %v4515
        %4524 = vmatpush1.bf16.msra.mxu0 %v4512
        %4525 = vmatprep.subr.bf16.mxu0 0
        %4526 = vmatpush1.bf16.msra.mxu0 0
        %4527 = vmatprep.subr.bf16.mxu0 0
        %4528 = vmatpush1.bf16.msra.mxu0 0
        %4529 = vmatprep.subr.bf16.mxu0 0
        %4530 = vmatpush1.bf16.msra.mxu0 0
        %4531 = vmatprep.subr.bf16.mxu0 0
        %4532 = vmatpush1.bf16.msra.mxu0 0
        %4533 = vmatprep.subr.bf16.mxu0 0
        %4534 = vmatpush1.bf16.msra.mxu0 0
        %4535 = vmatprep.subr.bf16.mxu0 0
        %4536 = vmatpush1.bf16.msra.mxu0 0
        %4537 = vmatprep.subr.bf16.mxu0 0
        %4538 = vmatpush1.bf16.msra.mxu0 0
        %4539 = vmatprep.subr.bf16.mxu0 0
        %4540 = vmatpush1.bf16.msra.mxu0 0
        %4541 = vmatprep.subr.bf16.mxu0 0
        %4542 = vmatpush1.bf16.msra.mxu0 0
        %4543 = vmatprep.subr.bf16.mxu0 0
        %4544 = vmatpush1.bf16.msra.mxu0 0
        %4545 = vmatprep.subr.bf16.mxu0 0
        %4546 = vmatpush1.bf16.msra.mxu0 0
        %4547 = vmatprep.subr.bf16.mxu0 0
        %4548 = vmatpush1.bf16.msra.mxu0 0
        %4549 = vmatprep.subr.bf16.mxu0 0
        %4550 = vmatpush1.bf16.msra.mxu0 0
        %4551 = vmatprep.subr.bf16.mxu0 0
        %4552 = vmatpush1.bf16.msra.mxu0 0
        %4553 = vmatprep.subr.bf16.mxu0 0
        %4554 = vmatpush1.bf16.msra.mxu0 0
        %4555 = vmatprep.mubr.bf16.mxu0 0
        %4556 = vmatmul.mubr.bf16.gmra.mrb[0].mxu0 %v4509
        %v4557 = vpop.f32.mrb[0].mxu0
        %v4558 = vadd.f32 0.0, %v4557
        %v4559 = vpop.f32.mrb[0].mxu0
        %v4560 = vadd.f32 0.0, %v4559
        %v4561 = vpop.f32.mrb[0].mxu0
        %v4562 = vpop.f32.mrb[0].mxu0
        %4563 = vdwg.mxu0
        %4564 = vmatprep.subr.bf16.mxu0 %v4521
        %4565 = vmatpush1.bf16.msra.mxu0 %v4518
        %4566 = vmatprep.subr.bf16.mxu0 0
        %4567 = vmatpush1.bf16.msra.mxu0 0
        %4568 = vmatprep.subr.bf16.mxu0 0
        %4569 = vmatpush1.bf16.msra.mxu0 0
        %4570 = vmatprep.subr.bf16.mxu0 0
        %4571 = vmatpush1.bf16.msra.mxu0 0
        %4572 = vmatprep.subr.bf16.mxu0 0
        %4573 = vmatpush1.bf16.msra.mxu0 0
        %4574 = vmatprep.subr.bf16.mxu0 0
        %4575 = vmatpush1.bf16.msra.mxu0 0
        %4576 = vmatprep.subr.bf16.mxu0 0
        %4577 = vmatpush1.bf16.msra.mxu0 0
        %4578 = vmatprep.subr.bf16.mxu0 0
        %4579 = vmatpush1.bf16.msra.mxu0 0
        %4580 = vmatprep.subr.bf16.mxu0 0
        %4581 = vmatpush1.bf16.msra.mxu0 0
        %4582 = vmatprep.subr.bf16.mxu0 0
        %4583 = vmatpush1.bf16.msra.mxu0 0
        %4584 = vmatprep.subr.bf16.mxu0 0
        %4585 = vmatpush1.bf16.msra.mxu0 0
        %4586 = vmatprep.subr.bf16.mxu0 0
        %4587 = vmatpush1.bf16.msra.mxu0 0
        %4588 = vmatprep.subr.bf16.mxu0 0
        %4589 = vmatpush1.bf16.msra.mxu0 0
        %4590 = vmatprep.subr.bf16.mxu0 0
        %4591 = vmatpush1.bf16.msra.mxu0 0
        %4592 = vmatprep.subr.bf16.mxu0 0
        %4593 = vmatpush1.bf16.msra.mxu0 0
        %4594 = vmatprep.subr.bf16.mxu0 0
        %4595 = vmatpush1.bf16.msra.mxu0 0
        %4596 = vmatprep.mubr.bf16.mxu0 0
        %4597 = vmatmul.mubr.bf16.gmra.mrb[0].mxu0 %v4509
        %v4598 = vpop.f32.mrb[0].mxu0
        %v4599 = vadd.f32 0.0, %v4598
        %v4600 = vpop.f32.mrb[0].mxu0
        %v4601 = vadd.f32 0.0, %v4600
        %v4602 = vpop.f32.mrb[0].mxu0
        %v4603 = vpop.f32.mrb[0].mxu0
        %4604 = vdwg.mxu0
        %v4605 = vadd.f32 %v4452, %v4558
        %v4606 = vadd.f32 %v4453, %v4560
        %v4607 = vadd.f32 %v4454, %v4599
        %v4608 = vadd.f32 %v4455, %v4601
        %v4609 = vlaneseq
        %v4610 = vshrl.u32 %v4609, 7
        %v4611 = vsub.s32 2, %v4610
        %v4612 = vrot.slane %v338, %v4611
        %v4613 = vlaneseq
        %v4614 = vshrl.u32 %v4613, 7
        %v4615 = vsub.s32 2, %v4614
        %v4616 = vrot.slane %v339, %v4615
        %v4617 = vlaneseq
        %v4618 = vshrl.u32 %v4617, 7
        %v4619 = vsub.s32 2, %v4618
        %v4620 = vrot.slane %v340, %v4619
        %v4621 = vlaneseq
        %v4622 = vshrl.u32 %v4621, 7
        %v4623 = vsub.s32 2, %v4622
        %v4624 = vrot.slane %v341, %v4623
        %4625 = vrot.lane.b32.xlu0 %v323, 110
        %v4626 = vpop.permute.xlu0 %4625
        %4627 = vrot.lane.b32.xlu0 %v324, 110
        %v4628 = vpop.permute.xlu0 %4627
        %4629 = vrot.lane.b32.xlu0 %v325, 110
        %v4630 = vpop.permute.xlu0 %4629
        %v4631 = vrot.slane %v4626, 4
        %v4632 = vrot.slane %v4628, 4
        %v4633 = vrot.slane %v4630, 4
        %v4634 = vsel %vm435, %v4631, %v4632
        %vm4635 = vcmask 900096
        %v4636 = vsel %vm4635, %v4634, %v4628
        %v4637 = vsel %vm435, %v4632, %v4633
        %v4638 = vsel %vm4635, %v4637, %v4630
        %v4645 = vcombine.low %v4612, %v4616
        %v4646 = vcombine.low %v4620, %v4624
        %v4649 = vmul.f32 %v4636, %v4645
        %v4650 = vmul.f32 %v4638, %v4646
        %v4653 = vcombine.high %v4649, %v4649
        %v4654 = vcombine.high %v4650, %v4650
        %v4657 = vpack.c.bf16 %v4649, %v4649
        %v4658 = vpack.c.bf16 %v4653, %v4653
        %v4659 = vpack.c.bf16 %v4650, %v4650
        %v4660 = vpack.c.bf16 %v4654, %v4654
        %v4662 = vsel %vm475, %v368, 0
        %v4665 = vsel %vm479, %v4657, 0
        %v4668 = vsel %vm479, %v4658, 0
        %v4671 = vsel %vm479, %v4659, 0
        %v4674 = vsel %vm479, %v4660, 0
        %4676 = vmatprep.subr.bf16.mxu0 %v4668
        %4677 = vmatpush1.bf16.msra.mxu0 %v4665
        %4678 = vmatprep.subr.bf16.mxu0 0
        %4679 = vmatpush1.bf16.msra.mxu0 0
        %4680 = vmatprep.subr.bf16.mxu0 0
        %4681 = vmatpush1.bf16.msra.mxu0 0
        %4682 = vmatprep.subr.bf16.mxu0 0
        %4683 = vmatpush1.bf16.msra.mxu0 0
        %4684 = vmatprep.subr.bf16.mxu0 0
        %4685 = vmatpush1.bf16.msra.mxu0 0
        %4686 = vmatprep.subr.bf16.mxu0 0
        %4687 = vmatpush1.bf16.msra.mxu0 0
        %4688 = vmatprep.subr.bf16.mxu0 0
        %4689 = vmatpush1.bf16.msra.mxu0 0
        %4690 = vmatprep.subr.bf16.mxu0 0
        %4691 = vmatpush1.bf16.msra.mxu0 0
        %4692 = vmatprep.subr.bf16.mxu0 0
        %4693 = vmatpush1.bf16.msra.mxu0 0
        %4694 = vmatprep.subr.bf16.mxu0 0
        %4695 = vmatpush1.bf16.msra.mxu0 0
        %4696 = vmatprep.subr.bf16.mxu0 0
        %4697 = vmatpush1.bf16.msra.mxu0 0
        %4698 = vmatprep.subr.bf16.mxu0 0
        %4699 = vmatpush1.bf16.msra.mxu0 0
        %4700 = vmatprep.subr.bf16.mxu0 0
        %4701 = vmatpush1.bf16.msra.mxu0 0
        %4702 = vmatprep.subr.bf16.mxu0 0
        %4703 = vmatpush1.bf16.msra.mxu0 0
        %4704 = vmatprep.subr.bf16.mxu0 0
        %4705 = vmatpush1.bf16.msra.mxu0 0
        %4706 = vmatprep.subr.bf16.mxu0 0
        %4707 = vmatpush1.bf16.msra.mxu0 0
        %4708 = vmatprep.mubr.bf16.mxu0 0
        %4709 = vmatmul.mubr.bf16.gmra.mrb[0].mxu0 %v4662
        %v4710 = vpop.f32.mrb[0].mxu0
        %v4711 = vadd.f32 0.0, %v4710
        %v4712 = vpop.f32.mrb[0].mxu0
        %v4713 = vadd.f32 0.0, %v4712
        %v4714 = vpop.f32.mrb[0].mxu0
        %v4715 = vpop.f32.mrb[0].mxu0
        %4716 = vdwg.mxu0
        %4717 = vmatprep.subr.bf16.mxu0 %v4674
        %4718 = vmatpush1.bf16.msra.mxu0 %v4671
        %4719 = vmatprep.subr.bf16.mxu0 0
        %4720 = vmatpush1.bf16.msra.mxu0 0
        %4721 = vmatprep.subr.bf16.mxu0 0
        %4722 = vmatpush1.bf16.msra.mxu0 0
        %4723 = vmatprep.subr.bf16.mxu0 0
        %4724 = vmatpush1.bf16.msra.mxu0 0
        %4725 = vmatprep.subr.bf16.mxu0 0
        %4726 = vmatpush1.bf16.msra.mxu0 0
        %4727 = vmatprep.subr.bf16.mxu0 0
        %4728 = vmatpush1.bf16.msra.mxu0 0
        %4729 = vmatprep.subr.bf16.mxu0 0
        %4730 = vmatpush1.bf16.msra.mxu0 0
        %4731 = vmatprep.subr.bf16.mxu0 0
        %4732 = vmatpush1.bf16.msra.mxu0 0
        %4733 = vmatprep.subr.bf16.mxu0 0
        %4734 = vmatpush1.bf16.msra.mxu0 0
        %4735 = vmatprep.subr.bf16.mxu0 0
        %4736 = vmatpush1.bf16.msra.mxu0 0
        %4737 = vmatprep.subr.bf16.mxu0 0
        %4738 = vmatpush1.bf16.msra.mxu0 0
        %4739 = vmatprep.subr.bf16.mxu0 0
        %4740 = vmatpush1.bf16.msra.mxu0 0
        %4741 = vmatprep.subr.bf16.mxu0 0
        %4742 = vmatpush1.bf16.msra.mxu0 0
        %4743 = vmatprep.subr.bf16.mxu0 0
        %4744 = vmatpush1.bf16.msra.mxu0 0
        %4745 = vmatprep.subr.bf16.mxu0 0
        %4746 = vmatpush1.bf16.msra.mxu0 0
        %4747 = vmatprep.subr.bf16.mxu0 0
        %4748 = vmatpush1.bf16.msra.mxu0 0
        %4749 = vmatprep.mubr.bf16.mxu0 0
        %4750 = vmatmul.mubr.bf16.gmra.mrb[0].mxu0 %v4662
        %v4751 = vpop.f32.mrb[0].mxu0
        %v4752 = vadd.f32 0.0, %v4751
        %v4753 = vpop.f32.mrb[0].mxu0
        %v4754 = vadd.f32 0.0, %v4753
        %v4755 = vpop.f32.mrb[0].mxu0
        %v4756 = vpop.f32.mrb[0].mxu0
        %4757 = vdwg.mxu0
        %v4758 = vadd.f32 %v4605, %v4711
        %v4759 = vadd.f32 %v4606, %v4713
        %v4760 = vadd.f32 %v4607, %v4752
        %v4761 = vadd.f32 %v4608, %v4754
        %v4762 = vld [vmem:[%s3] sm:$0xff]
        %v4763 = vld [vmem:[%s4] sm:$0xff]
        %v4764 = vadd.f32 %v4758, %v4759
        %v4765 = vadd.f32 %v4764, %v4760
        %v4766 = vadd.f32 %v4765, %v4761
        %4767 = vadd.xlane.f32.xlu0 %v4766
        %v4768 = vpop.xlane.xlu0 %4767
        %v4769 = vmul.f32 %v4768, 0.001953125
        %v4770 = vsub.f32 %v4758, %v4769
        %v4771 = vsub.f32 %v4759, %v4769
        %v4772 = vsub.f32 %v4760, %v4769
        %v4773 = vsub.f32 %v4761, %v4769
        %v4774 = vmul.f32 %v4770, %v4770
        %v4775 = vmul.f32 %v4771, %v4771
        %v4776 = vmul.f32 %v4772, %v4772
        %v4777 = vmul.f32 %v4773, %v4773
        %v4778 = vadd.f32 %v4774, %v4775
        %v4779 = vadd.f32 %v4778, %v4776
        %v4780 = vadd.f32 %v4779, %v4777
        %4781 = vadd.xlane.f32.xlu0 %v4780
        %v4782 = vpop.xlane.xlu0 %4781
        %v4783 = vmul.f32 %v4782, 0.001953125
        %v4784 = vadd.f32 %v4783, 1e-05
        %v4785 = vrsqrt.pop %v4784
        %v4786 = vmul.f32 %v4762, %v4785
        %4788 = vset.pattern.permute.xlu0 0
        %4789 = vperm.xlu0 %4788, %v4786
        %v4790 = vpop.permute.xlu0 %4789
        %v4792 = vmul.f32 %v4770, %v4790
        %v4793 = vmul.f32 %v4771, %v4790
        %v4794 = vmul.f32 %v4772, %v4790
        %v4795 = vmul.f32 %v4773, %v4790
        %4797 = vset.pattern.permute.xlu0 0
        %4798 = vperm.xlu0 %4797, %v4763
        %v4799 = vpop.permute.xlu0 %4798
        %v4801 = vadd.f32 %v4792, %v4799
        %v4802 = vadd.f32 %v4793, %v4799
        %v4803 = vadd.f32 %v4794, %v4799
        %v4804 = vadd.f32 %v4795, %v4799
        %v4805 = vmax.f32 %v4801, 0.0
        %v4806 = vmax.f32 %v4802, 0.0
        %v4807 = vmax.f32 %v4803, 0.0
        %v4808 = vmax.f32 %v4804, 0.0
        %v4809 = vld [vmem:[%s5] sm:$0xf]
        %v4810 = vcombine.high %v323, %v323
        %v4811 = vcombine.high %v324, %v324
        %v4814 = vpack.c.bf16 %v323, %v323
        %v4815 = vpack.c.bf16 %v4810, %v4810
        %v4816 = vpack.c.bf16 %v324, %v324
        %v4817 = vpack.c.bf16 %v4811, %v4811
        %v4818 = vpack.c.bf16 %v325, %v325
        %4824 = vrot.lane.b32.xlu0 %v4814, 55
        %v4825 = vpop.permute.xlu0 %4824
        %4826 = vrot.lane.b32.xlu0 %v4815, 55
        %v4827 = vpop.permute.xlu0 %4826
        %4828 = vrot.lane.b32.xlu0 %v4816, 55
        %v4829 = vpop.permute.xlu0 %4828
        %4830 = vrot.lane.b32.xlu0 %v4817, 55
        %v4831 = vpop.permute.xlu0 %4830
        %4832 = vrot.lane.b32.xlu0 %v4818, 55
        %v4833 = vpop.permute.xlu0 %4832
        %v4834 = vsel %vm2605, %v4825, %v4827
        %v4835 = vsel %vm2605, %v4827, %v4829
        %v4836 = vsel %vm2605, %v4829, %v4831
        %v4837 = vsel %vm2605, %v4831, %v4833
        %v4839 = vsel %vm475, %v4809, 0
        %v4842 = vsel %vm479, %v4834, 0
        %v4845 = vsel %vm479, %v4835, 0
        %v4848 = vsel %vm479, %v4836, 0
        %v4851 = vsel %vm479, %v4837, 0
        %4853 = vmatprep.subr.bf16.mxu0 %v4845
        %4854 = vmatpush1.bf16.msra.mxu0 %v4842
        %4855 = vmatprep.subr.bf16.mxu0 0
        %4856 = vmatpush1.bf16.msra.mxu0 0
        %4857 = vmatprep.subr.bf16.mxu0 0
        %4858 = vmatpush1.bf16.msra.mxu0 0
        %4859 = vmatprep.subr.bf16.mxu0 0
        %4860 = vmatpush1.bf16.msra.mxu0 0
        %4861 = vmatprep.subr.bf16.mxu0 0
        %4862 = vmatpush1.bf16.msra.mxu0 0
        %4863 = vmatprep.subr.bf16.mxu0 0
        %4864 = vmatpush1.bf16.msra.mxu0 0
        %4865 = vmatprep.subr.bf16.mxu0 0
        %4866 = vmatpush1.bf16.msra.mxu0 0
        %4867 = vmatprep.subr.bf16.mxu0 0
        %4868 = vmatpush1.bf16.msra.mxu0 0
        %4869 = vmatprep.subr.bf16.mxu0 0
        %4870 = vmatpush1.bf16.msra.mxu0 0
        %4871 = vmatprep.subr.bf16.mxu0 0
        %4872 = vmatpush1.bf16.msra.mxu0 0
        %4873 = vmatprep.subr.bf16.mxu0 0
        %4874 = vmatpush1.bf16.msra.mxu0 0
        %4875 = vmatprep.subr.bf16.mxu0 0
        %4876 = vmatpush1.bf16.msra.mxu0 0
        %4877 = vmatprep.subr.bf16.mxu0 0
        %4878 = vmatpush1.bf16.msra.mxu0 0
        %4879 = vmatprep.subr.bf16.mxu0 0
        %4880 = vmatpush1.bf16.msra.mxu0 0
        %4881 = vmatprep.subr.bf16.mxu0 0
        %4882 = vmatpush1.bf16.msra.mxu0 0
        %4883 = vmatprep.subr.bf16.mxu0 0
        %4884 = vmatpush1.bf16.msra.mxu0 0
        %4885 = vmatprep.mubr.bf16.mxu0 0
        %4886 = vmatmul.mubr.bf16.gmra.mrb[0].mxu0 %v4839
        %v4887 = vpop.f32.mrb[0].mxu0
        %v4888 = vadd.f32 0.0, %v4887
        %v4889 = vpop.f32.mrb[0].mxu0
        %v4890 = vadd.f32 0.0, %v4889
        %v4891 = vpop.f32.mrb[0].mxu0
        %v4892 = vpop.f32.mrb[0].mxu0
        %4893 = vdwg.mxu0
        %4894 = vmatprep.subr.bf16.mxu0 %v4851
        %4895 = vmatpush1.bf16.msra.mxu0 %v4848
        %4896 = vmatprep.subr.bf16.mxu0 0
        %4897 = vmatpush1.bf16.msra.mxu0 0
        %4898 = vmatprep.subr.bf16.mxu0 0
        %4899 = vmatpush1.bf16.msra.mxu0 0
        %4900 = vmatprep.subr.bf16.mxu0 0
        %4901 = vmatpush1.bf16.msra.mxu0 0
        %4902 = vmatprep.subr.bf16.mxu0 0
        %4903 = vmatpush1.bf16.msra.mxu0 0
        %4904 = vmatprep.subr.bf16.mxu0 0
        %4905 = vmatpush1.bf16.msra.mxu0 0
        %4906 = vmatprep.subr.bf16.mxu0 0
        %4907 = vmatpush1.bf16.msra.mxu0 0
        %4908 = vmatprep.subr.bf16.mxu0 0
        %4909 = vmatpush1.bf16.msra.mxu0 0
        %4910 = vmatprep.subr.bf16.mxu0 0
        %4911 = vmatpush1.bf16.msra.mxu0 0
        %4912 = vmatprep.subr.bf16.mxu0 0
        %4913 = vmatpush1.bf16.msra.mxu0 0
        %4914 = vmatprep.subr.bf16.mxu0 0
        %4915 = vmatpush1.bf16.msra.mxu0 0
        %4916 = vmatprep.subr.bf16.mxu0 0
        %4917 = vmatpush1.bf16.msra.mxu0 0
        %4918 = vmatprep.subr.bf16.mxu0 0
        %4919 = vmatpush1.bf16.msra.mxu0 0
        %4920 = vmatprep.subr.bf16.mxu0 0
        %4921 = vmatpush1.bf16.msra.mxu0 0
        %4922 = vmatprep.subr.bf16.mxu0 0
        %4923 = vmatpush1.bf16.msra.mxu0 0
        %4924 = vmatprep.subr.bf16.mxu0 0
        %4925 = vmatpush1.bf16.msra.mxu0 0
        %4926 = vmatprep.mubr.bf16.mxu0 0
        %4927 = vmatmul.mubr.bf16.gmra.mrb[0].mxu0 %v4839
        %v4928 = vpop.f32.mrb[0].mxu0
        %v4929 = vadd.f32 0.0, %v4928
        %v4930 = vpop.f32.mrb[0].mxu0
        %v4931 = vadd.f32 0.0, %v4930
        %v4932 = vpop.f32.mrb[0].mxu0
        %v4933 = vpop.f32.mrb[0].mxu0
        %4934 = vdwg.mxu0
        %v4935 = vld [vmem:[%s6] sm:$0xff]
        %v4936 = vld [vmem:[%s7] sm:$0xff]
        %v4937 = vadd.f32 %v4888, %v4890
        %v4938 = vadd.f32 %v4937, %v4929
        %v4939 = vadd.f32 %v4938, %v4931
        %4940 = vadd.xlane.f32.xlu0 %v4939
        %v4941 = vpop.xlane.xlu0 %4940
        %v4942 = vmul.f32 %v4941, 0.001953125
        %v4943 = vsub.f32 %v4888, %v4942
        %v4944 = vsub.f32 %v4890, %v4942
        %v4945 = vsub.f32 %v4929, %v4942
        %v4946 = vsub.f32 %v4931, %v4942
        %v4947 = vmul.f32 %v4943, %v4943
        %v4948 = vmul.f32 %v4944, %v4944
        %v4949 = vmul.f32 %v4945, %v4945
        %v4950 = vmul.f32 %v4946, %v4946
        %v4951 = vadd.f32 %v4947, %v4948
        %v4952 = vadd.f32 %v4951, %v4949
        %v4953 = vadd.f32 %v4952, %v4950
        %4954 = vadd.xlane.f32.xlu0 %v4953
        %v4955 = vpop.xlane.xlu0 %4954
        %v4956 = vmul.f32 %v4955, 0.001953125
        %v4957 = vadd.f32 %v4956, 1e-05
        %v4958 = vrsqrt.pop %v4957
        %v4959 = vmul.f32 %v4935, %v4958
        %4961 = vset.pattern.permute.xlu0 0
        %4962 = vperm.xlu0 %4961, %v4959
        %v4963 = vpop.permute.xlu0 %4962
        %v4965 = vmul.f32 %v4943, %v4963
        %v4966 = vmul.f32 %v4944, %v4963
        %v4967 = vmul.f32 %v4945, %v4963
        %v4968 = vmul.f32 %v4946, %v4963
        %4970 = vset.pattern.permute.xlu0 0
        %4971 = vperm.xlu0 %4970, %v4936
        %v4972 = vpop.permute.xlu0 %4971
        %v4974 = vadd.f32 %v4965, %v4972
        %v4975 = vadd.f32 %v4966, %v4972
        %v4976 = vadd.f32 %v4967, %v4972
        %v4977 = vadd.f32 %v4968, %v4972
        %v4978 = vmax.f32 %v4974, 0.0
        %v4979 = vmax.f32 %v4975, 0.0
        %v4980 = vmax.f32 %v4976, 0.0
        %v4981 = vmax.f32 %v4977, 0.0
        %v4982 = vadd.f32 %v4805, %v4978
        %v4983 = vadd.f32 %v4806, %v4979
        %v4984 = vadd.f32 %v4807, %v4980
        %v4985 = vadd.f32 %v4808, %v4981
        %4986 = vst [vmem:[%s321] sm:$0xff] %v4982
        %4987 = vst [vmem:[%s321 + $0x8] sm:$0xff] %v4983
        %4988 = vst [vmem:[%s321 + $0x10] sm:$0xff] %v4984
        %4989 = vst [vmem:[%s321 + $0x18] sm:$0xff] %v4985
        %s4990 = sand.u32 %s206, 1
        %s4991 = scalar_lea.sflag [#allocation4], %s4990
        %s4992 = sand.u32 %s206, 1
        %s4993 = smul.addr %s4992, 32
        %s4994 = scalar_lea.vmem [#allocation5], %s4993
        // Predicated region
        $region57: #{tpu_custom_call.1} parent=51 // pred_check
          %p4995 = pneg %p216
        $region58: #{tpu_custom_call.1} parent=51 // pred_check_branch
          %4997 = sbr.rel (%p4995) target = $region60
        $region59: #{tpu_custom_call.1} parent=51 // pred_region
          %s4999 = ssub.s32 512, 512
          %5000 = vsyncadd %s4991, %s4999
          %s5001 = smul.addr %s25, 4
          %s5002 = smul.addr %s5001, 128
          %s5003 = scalar_lea.hbm %s8, %s5002
          %s5005 = sshll.u32 %s4994, 4
          %s5006 = int_to_ptr.vmem [resolvable:$true] %s5005
          %5008 = dma.vmem_to_hbm [thread:$0]  %s5006, 512, %s5003, %s4991
        $region60: #{tpu_custom_call.1} parent=51 // pred_fallthru
          _
      $region52: #{tpu_custom_call.1} parent=5 // pred_fallthru
        _
      %p5009 = scmp.le.s32.totalorder 2, %s20
      // Predicated region
      $region61: #{tpu_custom_call.1} parent=5 // pred_check
        %p5010 = pneg %p5009
      $region62: #{tpu_custom_call.1} parent=5 // pred_check_branch
        %5012 = sbr.rel (%p5010) target = $region64
      $region63: #{tpu_custom_call.1} parent=5 // pred_region
        %s5013 = ssub.s32 %s20, 2
        // Predicated region
        $region65: #{tpu_custom_call.1} parent=63 // pred_check
          %p5014 = pneg %p222
        $region66: #{tpu_custom_call.1} parent=63 // pred_check_branch
          %5016 = sbr.rel (%p5014) target = $region68
        $region67: #{tpu_custom_call.1} parent=63 // pred_region
          %s5017 = sand.u32 %s207, 1
          %s5018 = scalar_lea.sflag [#allocation4], %s5017
          %s5019 = sand.u32 %s207, 1
          %s5020 = smul.addr %s5019, 32
          %s5021 = scalar_lea.vmem [#allocation5], %s5020
          %5022 = dma.done %s5018, 512
        $region68: #{tpu_custom_call.1} parent=63 // pred_fallthru
          _
      $region64: #{tpu_custom_call.1} parent=5 // pred_fallthru
        _
    $region6: #{tpu_custom_call.1} parent=1 // loop_footer
      %s24 = sadd.s32 1, %s20
    $region7: #{tpu_custom_call.1} parent=1 // loop_footer_branch
      %19 = sbr.rel target = $region3
    $region8: #{tpu_custom_call.1} parent=1 // loop_exit
      _
    %5023 = vsyncpa [#allocation3], 1
    %s5024 = scalar_lea.sflag [#allocation3], 1
    %5025 = vsyncpa %s5024, 1
    %5026 = vsyncpa [#allocation4], 1
    %s5027 = scalar_lea.sflag [#allocation4], 1
    %5028 = vsyncpa %s5027, 1

</llo_original>
